<compile_context>
chip_gen: v7x
topology: tpu7x:2x2x1
jax: 0.10.0
libtpu: 0.0.40
codegen_flags: <defaults>
</compile_context>

<pallas_src>
import jax
import jax.numpy as jnp
from jax.experimental import pallas as pl
from jax.experimental.pallas import tpu as pltpu


def _round_up(x, m):
    return ((x + m - 1) // m) * m


def ffn_kernel_resident(x_ref, w1_ref, b1_ref, w2_ref, b2_ref, o_ref):
    """Full-dff fused step: weights stay resident in VMEM across row tiles."""
    x = x_ref[...].astype(jnp.bfloat16)
    h = jnp.dot(x, w1_ref[...], preferred_element_type=jnp.float32)
    h = jnp.maximum(h + b1_ref[...], 0.0)
    # TODO(synk): nn.Dropout(0.2) is identity in eval mode; training-mode RNG mask
    # (torch semantics) is not reproduced here (would use pltpu.prng_* in-kernel).
    y = jnp.dot(h.astype(w2_ref.dtype), w2_ref[...], preferred_element_type=jnp.float32)
    o_ref[...] = (y + b2_ref[...]).astype(o_ref.dtype)


def ffn_kernel_chunked(x_ref, w1_ref, b1_ref, w2_ref, b2_ref, o_ref, acc_ref):
    """One (row tile i, dff chunk k) step; f32 VMEM accumulator over the dff reduction."""
    k = pl.program_id(1)

    @pl.when(k == 0)
    def _():
        acc_ref[...] = jnp.zeros_like(acc_ref)

    x = x_ref[...].astype(jnp.bfloat16)
    h = jnp.dot(x, w1_ref[...], preferred_element_type=jnp.float32)
    h = jnp.maximum(h + b1_ref[...], 0.0)  # bias slice for this dff chunk, ReLU in f32
    acc_ref[...] += jnp.dot(h.astype(w2_ref.dtype), w2_ref[...],
                            preferred_element_type=jnp.float32)

    @pl.when(k == pl.num_programs(1) - 1)
    def _():
        # b2 folded into the epilogue only (once per row tile), lane-dense f32 store.
        o_ref[...] = (acc_ref[...] + b2_ref[...]).astype(o_ref.dtype)


def _pick_tk(d_model, dff, tm, out_itemsize, budget_bytes=24 * 1024 * 1024):
    """Largest dff chunk whose (double-buffered) working set fits the VMEM budget."""
    def vmem_bytes(tk):
        w = 2 * d_model * tk * 2 * 2            # W1 + W2 chunk, bf16, double-buffered
        xb = tm * d_model * 4 * 2               # x row tile, f32, double-buffered
        ob = tm * d_model * out_itemsize * 2    # output tile, double-buffered
        acc = tm * d_model * 4                  # f32 accumulator scratch
        bias = (tk + d_model) * 4 * 2
        hid = tm * tk * 4                       # hidden activation (f32)
        return w + xb + ob + acc + bias + hid

    cands = [c for c in range(128, dff, 128) if dff % c == 0] + [dff]
    fitting = [c for c in cands if vmem_bytes(c) <= budget_bytes]
    if fitting:
        return max(fitting)
    return min(cands)


def feed_forward(x, w1, b1, w2, b2, *, tm=256):
    """Fused FeedForward forward pass. x: [B, S, d_model] -> [B, S, d_model]."""
    B, S, d_model = x.shape
    dff = w1.shape[1]
    M = B * S
    out_dtype = x.dtype
    out_itemsize = jnp.dtype(out_dtype).itemsize

    # Row tile: MXU-aligned, never larger than the (sublane-padded) row count.
    tm = min(tm, _round_up(M, 8))
    M_pad = _round_up(M, tm)

    tk = _pick_tk(d_model, dff, tm, out_itemsize)
    n_k = dff // tk

    # Activations stay f32 (cast to bf16 inside the kernel); weights pre-cast to bf16.
    x2d = x.reshape(M, d_model)
    if M_pad != M:
        x2d = jnp.pad(x2d, ((0, M_pad - M), (0, 0)))
    w1b = w1.astype(jnp.bfloat16)
    w2b = w2.astype(jnp.bfloat16)
    b1_2d = b1.reshape(1, dff).astype(jnp.float32)
    b2_2d = b2.reshape(1, d_model).astype(jnp.float32)

    n_row_tiles = M_pad // tm
    flops = 4 * M_pad * d_model * dff  # two matmuls, 2*M*K*N each
    weight_fetches = 1 if n_k == 1 else n_row_tiles
    bytes_accessed = int(
        M_pad * d_model * 4                                  # x (f32, read once)
        + 2 * d_model * dff * 2 * weight_fetches             # W1 + W2 (bf16)
        + (dff + d_model) * 4                                # biases (f32)
        + M_pad * d_model * out_itemsize)                    # output

    if n_k == 1:
        kernel = ffn_kernel_resident
        grid = (n_row_tiles,)
        in_specs = [
            pl.BlockSpec((tm, d_model), lambda i: (i, 0)),       # x row tile (streams)
            pl.BlockSpec((d_model, dff), lambda i: (0, 0)),      # W1 (resident)
            pl.BlockSpec((1, dff), lambda i: (0, 0)),            # b1 (resident)
            pl.BlockSpec((dff, d_model), lambda i: (0, 0)),      # W2 (resident)
            pl.BlockSpec((1, d_model), lambda i: (0, 0)),        # b2 (resident)
        ]
        out_specs = pl.BlockSpec((tm, d_model), lambda i: (i, 0))
        scratch = []
        dims = ("parallel",)
    else:
        kernel = ffn_kernel_chunked
        grid = (n_row_tiles, n_k)
        in_specs = [
            pl.BlockSpec((tm, d_model), lambda i, k: (i, 0)),    # x row tile
            pl.BlockSpec((d_model, tk), lambda i, k: (0, k)),    # W1 dff chunk
            pl.BlockSpec((1, tk), lambda i, k: (0, k)),          # b1 dff chunk
            pl.BlockSpec((tk, d_model), lambda i, k: (k, 0)),    # W2 dff chunk
            pl.BlockSpec((1, d_model), lambda i, k: (0, 0)),     # b2
        ]
        out_specs = pl.BlockSpec((tm, d_model), lambda i, k: (i, 0))
        scratch = [pltpu.VMEM((tm, d_model), jnp.float32)]
        dims = ("parallel", "arbitrary")

    out2d = pl.pallas_call(
        kernel,
        out_shape=jax.ShapeDtypeStruct((M_pad, d_model), out_dtype),
        grid_spec=pltpu.PrefetchScalarGridSpec(
            num_scalar_prefetch=0,
            grid=grid,
            in_specs=in_specs,
            out_specs=out_specs,
            scratch_shapes=scratch,
        ),
        compiler_params=pltpu.CompilerParams(dimension_semantics=dims),
        cost_estimate=pl.CostEstimate(
            flops=flops, transcendentals=0, bytes_accessed=bytes_accessed),
    )(x2d, w1b, b1_2d, w2b, b2_2d)

    return out2d[:M].reshape(B, S, d_model)


def init_params(key, d_model, dff, dtype=jnp.float32):
    """Deterministic init mirroring nn.Linear's default U(-1/sqrt(fan_in), +1/sqrt(fan_in))."""
    k1, k2, k3, k4 = jax.random.split(key, 4)
    lim1 = 1.0 / (d_model ** 0.5)
    lim2 = 1.0 / (dff ** 0.5)
    w1 = jax.random.uniform(k1, (d_model, dff), dtype, -lim1, lim1)
    b1 = jax.random.uniform(k2, (dff,), dtype, -lim1, lim1)
    w2 = jax.random.uniform(k3, (dff, d_model), dtype, -lim2, lim2)
    b2 = jax.random.uniform(k4, (d_model,), dtype, -lim2, lim2)
    return w1, b1, w2, b2


if __name__ == "__main__":
    # Module defaults for the feature dims, small batch/sequence.
    B, S = 2, 8
    d_model, dff = 512, 2048

    key = jax.random.PRNGKey(0)
    kx, kp = jax.random.split(key)
    x = jax.random.normal(kx, (B, S, d_model), jnp.float32)
    w1, b1, w2, b2 = init_params(kp, d_model, dff)

    out = jax.block_until_ready(feed_forward(x, w1, b1, w2, b2))

    # Reference in plain JAX f32 (eval-mode dropout = identity). Tolerance relaxed
    # because the kernel uses bf16 matmul operands with f32 accumulation.
    ref = (jnp.maximum(x.reshape(-1, d_model) @ w1 + b1, 0.0) @ w2 + b2)
    ref = ref.reshape(B, S, d_model)
    assert out.shape == (B, S, d_model)
    max_err = float(jnp.max(jnp.abs(out - ref)))
    assert jnp.allclose(out, ref, atol=5e-2, rtol=5e-2), f"max abs err {max_err}"

    print("KERNEL_OK")
</pallas_src>

<mosaic_0001>
module attributes {stable_mosaic.version = 11 : i64} {
  func.func @ffn_kernel_resident(%arg0: i32, %arg1: memref<16x512xf32, #tpu.memory_space<vmem>>, %arg2: memref<512x2048xbf16, #tpu.memory_space<vmem>>, %arg3: memref<1x2048xf32, #tpu.memory_space<vmem>>, %arg4: memref<2048x512xbf16, #tpu.memory_space<vmem>>, %arg5: memref<1x512xf32, #tpu.memory_space<vmem>>, %arg6: memref<16x512xf32, #tpu.memory_space<vmem>>) attributes {dimension_semantics = [#tpu.dimension_semantics<parallel>], iteration_bounds = array<i64: 1>, scalar_prefetch = 0 : i64, scratch_operands = 0 : i64, tpu.core_type = #tpu.core_type<tc>, window_params = [{transform_indices = @transform_0, window_bounds = array<i64: 16, 512>}, {pipeline_mode = #tpu.pipeline_mode<synchronous>, transform_indices = @transform_1, window_bounds = array<i64: 512, 2048>}, {pipeline_mode = #tpu.pipeline_mode<synchronous>, transform_indices = @transform_2, window_bounds = array<i64: 1, 2048>}, {pipeline_mode = #tpu.pipeline_mode<synchronous>, transform_indices = @transform_3, window_bounds = array<i64: 2048, 512>}, {pipeline_mode = #tpu.pipeline_mode<synchronous>, transform_indices = @transform_4, window_bounds = array<i64: 1, 512>}, {transform_indices = @transform_5, window_bounds = array<i64: 16, 512>}]} {
    %c0 = arith.constant 0 : index
    %c0_0 = arith.constant 0 : index
    %0 = vector.load %arg1[%c0, %c0_0] : memref<16x512xf32, #tpu.memory_space<vmem>>, vector<16x512xf32>
    %1 = arith.truncf %0 : vector<16x512xf32> to vector<16x512xbf16>
    %c0_1 = arith.constant 0 : index
    %c0_2 = arith.constant 0 : index
    %2 = vector.load %arg2[%c0_1, %c0_2] : memref<512x2048xbf16, #tpu.memory_space<vmem>>, vector<512x2048xbf16>
    %cst = arith.constant dense<0.000000e+00> : vector<16x2048xf32>
    %3 = tpu.matmul %1, %2, %cst {dimension_numbers = #tpu.dot_dimension_numbers<[1], [0], [0], [1], [0, 0, 1, 1], [], []>} : vector<16x512xbf16>, vector<512x2048xbf16>, vector<16x2048xf32> -> vector<16x2048xf32>
    %c0_3 = arith.constant 0 : index
    %c0_4 = arith.constant 0 : index
    %4 = vector.load %arg3[%c0_3, %c0_4] : memref<1x2048xf32, #tpu.memory_space<vmem>>, vector<1x2048xf32>
    %5 = vector.broadcast %4 : vector<1x2048xf32> to vector<16x2048xf32>
    %6 = arith.addf %3, %5 : vector<16x2048xf32>
    %cst_5 = arith.constant 0.000000e+00 : f32
    %7 = vector.broadcast %cst_5 : f32 to vector<16x2048xf32>
    %8 = arith.maximumf %6, %7 : vector<16x2048xf32>
    %9 = arith.truncf %8 : vector<16x2048xf32> to vector<16x2048xbf16>
    %c0_6 = arith.constant 0 : index
    %c0_7 = arith.constant 0 : index
    %10 = vector.load %arg4[%c0_6, %c0_7] : memref<2048x512xbf16, #tpu.memory_space<vmem>>, vector<2048x512xbf16>
    %cst_8 = arith.constant dense<0.000000e+00> : vector<16x512xf32>
    %11 = tpu.matmul %9, %10, %cst_8 {dimension_numbers = #tpu.dot_dimension_numbers<[1], [0], [0], [1], [0, 0, 1, 1], [], []>} : vector<16x2048xbf16>, vector<2048x512xbf16>, vector<16x512xf32> -> vector<16x512xf32>
    %c0_9 = arith.constant 0 : index
    %c0_10 = arith.constant 0 : index
    %12 = vector.load %arg5[%c0_9, %c0_10] : memref<1x512xf32, #tpu.memory_space<vmem>>, vector<1x512xf32>
    %13 = vector.broadcast %12 : vector<1x512xf32> to vector<16x512xf32>
    %14 = arith.addf %11, %13 : vector<16x512xf32>
    %c0_11 = arith.constant 0 : index
    %c0_12 = arith.constant 0 : index
    %15 = vector.load %arg6[%c0_11, %c0_12] : memref<16x512xf32, #tpu.memory_space<vmem>>, vector<16x512xf32>
    tpu.vector_store %arg6[%c0_11, %c0_12], %14 {strides = array<i32>} : memref<16x512xf32, #tpu.memory_space<vmem>>, vector<16x512xf32>,
    return
  }
  func.func @transform_0(%arg0: i32) -> (i32, i32) {
    %c0_i32 = arith.constant 0 : i32
    %c0_i32_0 = arith.constant 0 : i32
    return %arg0, %c0_i32 : i32, i32
  }
  func.func @transform_1(%arg0: i32) -> (i32, i32) {
    %c0_i32 = arith.constant 0 : i32
    %c0_i32_0 = arith.constant 0 : i32
    %c0_i32_1 = arith.constant 0 : i32
    return %c0_i32, %c0_i32_0 : i32, i32
  }
  func.func @transform_2(%arg0: i32) -> (i32, i32) {
    %c0_i32 = arith.constant 0 : i32
    %c0_i32_0 = arith.constant 0 : i32
    %c0_i32_1 = arith.constant 0 : i32
    return %c0_i32, %c0_i32_0 : i32, i32
  }
  func.func @transform_3(%arg0: i32) -> (i32, i32) {
    %c0_i32 = arith.constant 0 : i32
    %c0_i32_0 = arith.constant 0 : i32
    %c0_i32_1 = arith.constant 0 : i32
    return %c0_i32, %c0_i32_0 : i32, i32
  }
  func.func @transform_4(%arg0: i32) -> (i32, i32) {
    %c0_i32 = arith.constant 0 : i32
    %c0_i32_0 = arith.constant 0 : i32
    %c0_i32_1 = arith.constant 0 : i32
    return %c0_i32, %c0_i32_0 : i32, i32
  }
  func.func @transform_5(%arg0: i32) -> (i32, i32) {
    %c0_i32 = arith.constant 0 : i32
    %c0_i32_0 = arith.constant 0 : i32
    return %arg0, %c0_i32 : i32, i32
  }
}

</mosaic_0001>

<llo_original>
// kernel: tpu_custom_call.1
$region0: #{tpu_custom_call.1}
  #allocation0 [shape = 'u32[]', space=smem, size = 0x4, offset = 0x4, fixed_abs, tag = 'smem constant byte address 0x4 - core index']
  #allocation1 [shape = 'u32[144,128]{1,0:T(1,128)}', space=vmem, size = 0x12000, scoped, tag = 'internal scratch']
  %s0 = inlined_call_operand.hbm [shape: f32[16,512], index: 0, kind: input, shape index: {}]
  %s1 = inlined_call_operand.hbm [shape: bf16[512,2048], index: 1, kind: input, shape index: {}]
  %s2 = inlined_call_operand.hbm [shape: f32[1,2048], index: 2, kind: input, shape index: {}]
  %s3 = inlined_call_operand.hbm [shape: bf16[2048,512], index: 3, kind: input, shape index: {}]
  %s4 = inlined_call_operand.hbm [shape: f32[1,512], index: 4, kind: input, shape index: {}]
  %s5 = inlined_call_operand.hbm [shape: f32[16,512], index: 5, kind: output, shape index: {}]
  %s6 = sld [smem:[#allocation0]]
  $region50: #{tpu_custom_call.1} parent=0
    _
  %s8 = ssub.s32 1, %s6
  %s9 = scalar_select 0, %s8, %s6
  $region1: #{tpu_custom_call.1} parent=0
    #allocation2 [shape = 'u8[32768]{0}', space=vmem, size = 0x8000, scoped, tag = 'input window, operand 0, single buffered']
    #allocation3 [shape = 's32[1]{0}', space=sflag, size = 0x4, scoped, tag = 'scoped memory for tpu_custom_call.1']
    #allocation4 [shape = 's32[1]{0}', space=sflag, size = 0x4, scoped, tag = 'scoped memory for tpu_custom_call.1']
    #allocation5 [shape = 'u8[2097152]{0}', space=vmem, size = 0x200000, scoped, tag = 'input window, operand 1, single buffered']
    #allocation6 [shape = 's32[1]{0}', space=sflag, size = 0x4, scoped, tag = 'scoped memory for tpu_custom_call.1']
    #allocation7 [shape = 'u8[8192]{0}', space=vmem, size = 0x2000, scoped, tag = 'input window, operand 2, single buffered']
    #allocation8 [shape = 'u8[2097152]{0}', space=vmem, size = 0x200000, scoped, tag = 'input window, operand 3, single buffered']
    #allocation9 [shape = 's32[1]{0}', space=sflag, size = 0x4, scoped, tag = 'scoped memory for tpu_custom_call.1']
    #allocation10 [shape = 'u8[2048]{0}', space=vmem, size = 0x800, scoped, tag = 'input window, operand 4, single buffered']
    #allocation11 [shape = 'u8[32768]{0}', space=vmem, size = 0x8000, scoped, tag = 'output window, operand 0, single buffered']
    %10 = vsyncpa [#allocation3], 0
    %11 = vsyncpa [#allocation6], 0
    %12 = vsyncpa [#allocation9], 0
    %13 = vsyncpa [#allocation4], 0
    // Predicated region
    $region2: #{tpu_custom_call.1} parent=1 // pred_check
      _
    $region3: #{tpu_custom_call.1} parent=1 // pred_check_branch
      %15 = sbr.rel (0) target = $region5
    $region4: #{tpu_custom_call.1} parent=1 // pred_region
      %s17 = ssub.s32 1024, 1024
      %18 = vsyncadd [#allocation3], %s17
      %s19 = sshll.u32 [#allocation2], 4
      %s20 = int_to_ptr.vmem [resolvable:$true] %s19
      %25 = dma.hbm_to_vmem [thread:$0]  %s0, 1024, %s20, [#allocation3], 512, 512, 32
    $region5: #{tpu_custom_call.1} parent=1 // pred_fallthru
      _
    // Predicated region
    $region6: #{tpu_custom_call.1} parent=1 // pred_check
      _
    $region7: #{tpu_custom_call.1} parent=1 // pred_check_branch
      %27 = sbr.rel (0) target = $region9
    $region8: #{tpu_custom_call.1} parent=1 // pred_region
      %s29 = ssub.s32 65536, 65536
      %30 = vsyncadd [#allocation6], %s29
      %s31 = sshll.u32 [#allocation5], 4
      %s32 = int_to_ptr.vmem [resolvable:$true] %s31
      %37 = dma.hbm_to_vmem [thread:$0]  %s1, 65536, %s32, [#allocation6], 1024, 1024, 64
    $region9: #{tpu_custom_call.1} parent=1 // pred_fallthru
      _
    // Predicated region
    $region10: #{tpu_custom_call.1} parent=1 // pred_check
      _
    $region11: #{tpu_custom_call.1} parent=1 // pred_check_branch
      %39 = sbr.rel (0) target = $region13
    $region12: #{tpu_custom_call.1} parent=1 // pred_region
      %s41 = ssub.s32 256, 256
      %42 = vsyncadd [#allocation6], %s41
      %s44 = sshll.u32 [#allocation7], 4
      %s45 = int_to_ptr.vmem [resolvable:$true] %s44
      %47 = dma.hbm_to_vmem [thread:$0]  %s2, 256, %s45, [#allocation6]
    $region13: #{tpu_custom_call.1} parent=1 // pred_fallthru
      _
    // Predicated region
    $region14: #{tpu_custom_call.1} parent=1 // pred_check
      _
    $region15: #{tpu_custom_call.1} parent=1 // pred_check_branch
      %49 = sbr.rel (0) target = $region17
    $region16: #{tpu_custom_call.1} parent=1 // pred_region
      %s51 = ssub.s32 65536, 65536
      %52 = vsyncadd [#allocation9], %s51
      %s53 = sshll.u32 [#allocation8], 4
      %s54 = int_to_ptr.vmem [resolvable:$true] %s53
      %59 = dma.hbm_to_vmem [thread:$0]  %s3, 65536, %s54, [#allocation9], 256, 256, 16
    $region17: #{tpu_custom_call.1} parent=1 // pred_fallthru
      _
    // Predicated region
    $region18: #{tpu_custom_call.1} parent=1 // pred_check
      _
    $region19: #{tpu_custom_call.1} parent=1 // pred_check_branch
      %61 = sbr.rel (0) target = $region21
    $region20: #{tpu_custom_call.1} parent=1 // pred_region
      %s63 = ssub.s32 64, 64
      %64 = vsyncadd [#allocation9], %s63
      %s66 = sshll.u32 [#allocation10], 4
      %s67 = int_to_ptr.vmem [resolvable:$true] %s66
      %69 = dma.hbm_to_vmem [thread:$0]  %s4, 64, %s67, [#allocation9]
    $region21: #{tpu_custom_call.1} parent=1 // pred_fallthru
      _
    // Predicated region
    $region22: #{tpu_custom_call.1} parent=1 // pred_check
      _
    $region23: #{tpu_custom_call.1} parent=1 // pred_check_branch
      %71 = sbr.rel (0) target = $region25
    $region24: #{tpu_custom_call.1} parent=1 // pred_region
      %72 = dma.done [#allocation3], 1024
    $region25: #{tpu_custom_call.1} parent=1 // pred_fallthru
      _
    // Predicated region
    $region26: #{tpu_custom_call.1} parent=1 // pred_check
      _
    $region27: #{tpu_custom_call.1} parent=1 // pred_check_branch
      %74 = sbr.rel (0) target = $region29
    $region28: #{tpu_custom_call.1} parent=1 // pred_region
      %75 = dma.done [#allocation6], 65536
    $region29: #{tpu_custom_call.1} parent=1 // pred_fallthru
      _
    // Predicated region
    $region30: #{tpu_custom_call.1} parent=1 // pred_check
      _
    $region31: #{tpu_custom_call.1} parent=1 // pred_check_branch
      %77 = sbr.rel (0) target = $region33
    $region32: #{tpu_custom_call.1} parent=1 // pred_region
      %78 = dma.done [#allocation6], 256
    $region33: #{tpu_custom_call.1} parent=1 // pred_fallthru
      _
    // Predicated region
    $region34: #{tpu_custom_call.1} parent=1 // pred_check
      _
    $region35: #{tpu_custom_call.1} parent=1 // pred_check_branch
      %80 = sbr.rel (0) target = $region37
    $region36: #{tpu_custom_call.1} parent=1 // pred_region
      %81 = dma.done [#allocation9], 65536
    $region37: #{tpu_custom_call.1} parent=1 // pred_fallthru
      _
    // Predicated region
    $region38: #{tpu_custom_call.1} parent=1 // pred_check
      _
    $region39: #{tpu_custom_call.1} parent=1 // pred_check_branch
      %83 = sbr.rel (0) target = $region41
    $region40: #{tpu_custom_call.1} parent=1 // pred_region
      %84 = dma.done [#allocation9], 64
    $region41: #{tpu_custom_call.1} parent=1 // pred_fallthru
      _
    %v85 = vld [vmem:[#allocation2] sm:$0xff]
    %v86 = vld [vmem:[#allocation2 + $0x8] sm:$0xff]
    %v87 = vld [vmem:[#allocation2 + $0x10] sm:$0xff]
    %v88 = vld [vmem:[#allocation2 + $0x18] sm:$0xff]
    %v89 = vld [vmem:[#allocation2 + $0x20] sm:$0xff]
    %v90 = vld [vmem:[#allocation2 + $0x28] sm:$0xff]
    %v91 = vld [vmem:[#allocation2 + $0x30] sm:$0xff]
    %v92 = vld [vmem:[#allocation2 + $0x38] sm:$0xff]
    %v93 = vpack.c.bf16 %v89, %v85
    %v94 = vpack.c.bf16 %v90, %v86
    %v95 = vpack.c.bf16 %v91, %v87
    %v96 = vpack.c.bf16 %v92, %v88
    %v97 = vld [vmem:[#allocation5] sm:$0xff]
    %v98 = vld [vmem:[#allocation5 + $0x8] sm:$0xff]
    %v99 = vld [vmem:[#allocation5 + $0x10] sm:$0xff]
    %v100 = vld [vmem:[#allocation5 + $0x18] sm:$0xff]
    %v101 = vld [vmem:[#allocation5 + $0x20] sm:$0xff]
    %v102 = vld [vmem:[#allocation5 + $0x28] sm:$0xff]
    %v103 = vld [vmem:[#allocation5 + $0x30] sm:$0xff]
    %v104 = vld [vmem:[#allocation5 + $0x38] sm:$0xff]
    %v105 = vld [vmem:[#allocation5 + $0x40] sm:$0xff]
    %v106 = vld [vmem:[#allocation5 + $0x48] sm:$0xff]
    %v107 = vld [vmem:[#allocation5 + $0x50] sm:$0xff]
    %v108 = vld [vmem:[#allocation5 + $0x58] sm:$0xff]
    %v109 = vld [vmem:[#allocation5 + $0x60] sm:$0xff]
    %v110 = vld [vmem:[#allocation5 + $0x68] sm:$0xff]
    %v111 = vld [vmem:[#allocation5 + $0x70] sm:$0xff]
    %v112 = vld [vmem:[#allocation5 + $0x78] sm:$0xff]
    %v113 = vld [vmem:[#allocation5 + $0x80] sm:$0xff]
    %v114 = vld [vmem:[#allocation5 + $0x88] sm:$0xff]
    %v115 = vld [vmem:[#allocation5 + $0x90] sm:$0xff]
    %v116 = vld [vmem:[#allocation5 + $0x98] sm:$0xff]
    %v117 = vld [vmem:[#allocation5 + $0xa0] sm:$0xff]
    %v118 = vld [vmem:[#allocation5 + $0xa8] sm:$0xff]
    %v119 = vld [vmem:[#allocation5 + $0xb0] sm:$0xff]
    %v120 = vld [vmem:[#allocation5 + $0xb8] sm:$0xff]
    %v121 = vld [vmem:[#allocation5 + $0xc0] sm:$0xff]
    %v122 = vld [vmem:[#allocation5 + $0xc8] sm:$0xff]
    %v123 = vld [vmem:[#allocation5 + $0xd0] sm:$0xff]
    %v124 = vld [vmem:[#allocation5 + $0xd8] sm:$0xff]
    %v125 = vld [vmem:[#allocation5 + $0xe0] sm:$0xff]
    %v126 = vld [vmem:[#allocation5 + $0xe8] sm:$0xff]
    %v127 = vld [vmem:[#allocation5 + $0xf0] sm:$0xff]
    %v128 = vld [vmem:[#allocation5 + $0xf8] sm:$0xff]
    %v129 = vld [vmem:[#allocation5 + $0x100] sm:$0xff]
    %v130 = vld [vmem:[#allocation5 + $0x108] sm:$0xff]
    %v131 = vld [vmem:[#allocation5 + $0x110] sm:$0xff]
    %v132 = vld [vmem:[#allocation5 + $0x118] sm:$0xff]
    %v133 = vld [vmem:[#allocation5 + $0x120] sm:$0xff]
    %v134 = vld [vmem:[#allocation5 + $0x128] sm:$0xff]
    %v135 = vld [vmem:[#allocation5 + $0x130] sm:$0xff]
    %v136 = vld [vmem:[#allocation5 + $0x138] sm:$0xff]
    %v137 = vld [vmem:[#allocation5 + $0x140] sm:$0xff]
    %v138 = vld [vmem:[#allocation5 + $0x148] sm:$0xff]
    %v139 = vld [vmem:[#allocation5 + $0x150] sm:$0xff]
    %v140 = vld [vmem:[#allocation5 + $0x158] sm:$0xff]
    %v141 = vld [vmem:[#allocation5 + $0x160] sm:$0xff]
    %v142 = vld [vmem:[#allocation5 + $0x168] sm:$0xff]
    %v143 = vld [vmem:[#allocation5 + $0x170] sm:$0xff]
    %v144 = vld [vmem:[#allocation5 + $0x178] sm:$0xff]
    %v145 = vld [vmem:[#allocation5 + $0x180] sm:$0xff]
    %v146 = vld [vmem:[#allocation5 + $0x188] sm:$0xff]
    %v147 = vld [vmem:[#allocation5 + $0x190] sm:$0xff]
    %v148 = vld [vmem:[#allocation5 + $0x198] sm:$0xff]
    %v149 = vld [vmem:[#allocation5 + $0x1a0] sm:$0xff]
    %v150 = vld [vmem:[#allocation5 + $0x1a8] sm:$0xff]
    %v151 = vld [vmem:[#allocation5 + $0x1b0] sm:$0xff]
    %v152 = vld [vmem:[#allocation5 + $0x1b8] sm:$0xff]
    %v153 = vld [vmem:[#allocation5 + $0x1c0] sm:$0xff]
    %v154 = vld [vmem:[#allocation5 + $0x1c8] sm:$0xff]
    %v155 = vld [vmem:[#allocation5 + $0x1d0] sm:$0xff]
    %v156 = vld [vmem:[#allocation5 + $0x1d8] sm:$0xff]
    %v157 = vld [vmem:[#allocation5 + $0x1e0] sm:$0xff]
    %v158 = vld [vmem:[#allocation5 + $0x1e8] sm:$0xff]
    %v159 = vld [vmem:[#allocation5 + $0x1f0] sm:$0xff]
    %v160 = vld [vmem:[#allocation5 + $0x1f8] sm:$0xff]
    %v161 = vld [vmem:[#allocation5 + $0x200] sm:$0xff]
    %v162 = vld [vmem:[#allocation5 + $0x208] sm:$0xff]
    %v163 = vld [vmem:[#allocation5 + $0x210] sm:$0xff]
    %v164 = vld [vmem:[#allocation5 + $0x218] sm:$0xff]
    %v165 = vld [vmem:[#allocation5 + $0x220] sm:$0xff]
    %v166 = vld [vmem:[#allocation5 + $0x228] sm:$0xff]
    %v167 = vld [vmem:[#allocation5 + $0x230] sm:$0xff]
    %v168 = vld [vmem:[#allocation5 + $0x238] sm:$0xff]
    %v169 = vld [vmem:[#allocation5 + $0x240] sm:$0xff]
    %v170 = vld [vmem:[#allocation5 + $0x248] sm:$0xff]
    %v171 = vld [vmem:[#allocation5 + $0x250] sm:$0xff]
    %v172 = vld [vmem:[#allocation5 + $0x258] sm:$0xff]
    %v173 = vld [vmem:[#allocation5 + $0x260] sm:$0xff]
    %v174 = vld [vmem:[#allocation5 + $0x268] sm:$0xff]
    %v175 = vld [vmem:[#allocation5 + $0x270] sm:$0xff]
    %v176 = vld [vmem:[#allocation5 + $0x278] sm:$0xff]
    %v177 = vld [vmem:[#allocation5 + $0x280] sm:$0xff]
    %v178 = vld [vmem:[#allocation5 + $0x288] sm:$0xff]
    %v179 = vld [vmem:[#allocation5 + $0x290] sm:$0xff]
    %v180 = vld [vmem:[#allocation5 + $0x298] sm:$0xff]
    %v181 = vld [vmem:[#allocation5 + $0x2a0] sm:$0xff]
    %v182 = vld [vmem:[#allocation5 + $0x2a8] sm:$0xff]
    %v183 = vld [vmem:[#allocation5 + $0x2b0] sm:$0xff]
    %v184 = vld [vmem:[#allocation5 + $0x2b8] sm:$0xff]
    %v185 = vld [vmem:[#allocation5 + $0x2c0] sm:$0xff]
    %v186 = vld [vmem:[#allocation5 + $0x2c8] sm:$0xff]
    %v187 = vld [vmem:[#allocation5 + $0x2d0] sm:$0xff]
    %v188 = vld [vmem:[#allocation5 + $0x2d8] sm:$0xff]
    %v189 = vld [vmem:[#allocation5 + $0x2e0] sm:$0xff]
    %v190 = vld [vmem:[#allocation5 + $0x2e8] sm:$0xff]
    %v191 = vld [vmem:[#allocation5 + $0x2f0] sm:$0xff]
    %v192 = vld [vmem:[#allocation5 + $0x2f8] sm:$0xff]
    %v193 = vld [vmem:[#allocation5 + $0x300] sm:$0xff]
    %v194 = vld [vmem:[#allocation5 + $0x308] sm:$0xff]
    %v195 = vld [vmem:[#allocation5 + $0x310] sm:$0xff]
    %v196 = vld [vmem:[#allocation5 + $0x318] sm:$0xff]
    %v197 = vld [vmem:[#allocation5 + $0x320] sm:$0xff]
    %v198 = vld [vmem:[#allocation5 + $0x328] sm:$0xff]
    %v199 = vld [vmem:[#allocation5 + $0x330] sm:$0xff]
    %v200 = vld [vmem:[#allocation5 + $0x338] sm:$0xff]
    %v201 = vld [vmem:[#allocation5 + $0x340] sm:$0xff]
    %v202 = vld [vmem:[#allocation5 + $0x348] sm:$0xff]
    %v203 = vld [vmem:[#allocation5 + $0x350] sm:$0xff]
    %v204 = vld [vmem:[#allocation5 + $0x358] sm:$0xff]
    %v205 = vld [vmem:[#allocation5 + $0x360] sm:$0xff]
    %v206 = vld [vmem:[#allocation5 + $0x368] sm:$0xff]
    %v207 = vld [vmem:[#allocation5 + $0x370] sm:$0xff]
    %v208 = vld [vmem:[#allocation5 + $0x378] sm:$0xff]
    %v209 = vld [vmem:[#allocation5 + $0x380] sm:$0xff]
    %v210 = vld [vmem:[#allocation5 + $0x388] sm:$0xff]
    %v211 = vld [vmem:[#allocation5 + $0x390] sm:$0xff]
    %v212 = vld [vmem:[#allocation5 + $0x398] sm:$0xff]
    %v213 = vld [vmem:[#allocation5 + $0x3a0] sm:$0xff]
    %v214 = vld [vmem:[#allocation5 + $0x3a8] sm:$0xff]
    %v215 = vld [vmem:[#allocation5 + $0x3b0] sm:$0xff]
    %v216 = vld [vmem:[#allocation5 + $0x3b8] sm:$0xff]
    %v217 = vld [vmem:[#allocation5 + $0x3c0] sm:$0xff]
    %v218 = vld [vmem:[#allocation5 + $0x3c8] sm:$0xff]
    %v219 = vld [vmem:[#allocation5 + $0x3d0] sm:$0xff]
    %v220 = vld [vmem:[#allocation5 + $0x3d8] sm:$0xff]
    %v221 = vld [vmem:[#allocation5 + $0x3e0] sm:$0xff]
    %v222 = vld [vmem:[#allocation5 + $0x3e8] sm:$0xff]
    %v223 = vld [vmem:[#allocation5 + $0x3f0] sm:$0xff]
    %v224 = vld [vmem:[#allocation5 + $0x3f8] sm:$0xff]
    %v225 = vld [vmem:[#allocation5 + $0x400] sm:$0xff]
    %v226 = vld [vmem:[#allocation5 + $0x408] sm:$0xff]
    %v227 = vld [vmem:[#allocation5 + $0x410] sm:$0xff]
    %v228 = vld [vmem:[#allocation5 + $0x418] sm:$0xff]
    %v229 = vld [vmem:[#allocation5 + $0x420] sm:$0xff]
    %v230 = vld [vmem:[#allocation5 + $0x428] sm:$0xff]
    %v231 = vld [vmem:[#allocation5 + $0x430] sm:$0xff]
    %v232 = vld [vmem:[#allocation5 + $0x438] sm:$0xff]
    %v233 = vld [vmem:[#allocation5 + $0x440] sm:$0xff]
    %v234 = vld [vmem:[#allocation5 + $0x448] sm:$0xff]
    %v235 = vld [vmem:[#allocation5 + $0x450] sm:$0xff]
    %v236 = vld [vmem:[#allocation5 + $0x458] sm:$0xff]
    %v237 = vld [vmem:[#allocation5 + $0x460] sm:$0xff]
    %v238 = vld [vmem:[#allocation5 + $0x468] sm:$0xff]
    %v239 = vld [vmem:[#allocation5 + $0x470] sm:$0xff]
    %v240 = vld [vmem:[#allocation5 + $0x478] sm:$0xff]
    %v241 = vld [vmem:[#allocation5 + $0x480] sm:$0xff]
    %v242 = vld [vmem:[#allocation5 + $0x488] sm:$0xff]
    %v243 = vld [vmem:[#allocation5 + $0x490] sm:$0xff]
    %v244 = vld [vmem:[#allocation5 + $0x498] sm:$0xff]
    %v245 = vld [vmem:[#allocation5 + $0x4a0] sm:$0xff]
    %v246 = vld [vmem:[#allocation5 + $0x4a8] sm:$0xff]
    %v247 = vld [vmem:[#allocation5 + $0x4b0] sm:$0xff]
    %v248 = vld [vmem:[#allocation5 + $0x4b8] sm:$0xff]
    %v249 = vld [vmem:[#allocation5 + $0x4c0] sm:$0xff]
    %v250 = vld [vmem:[#allocation5 + $0x4c8] sm:$0xff]
    %v251 = vld [vmem:[#allocation5 + $0x4d0] sm:$0xff]
    %v252 = vld [vmem:[#allocation5 + $0x4d8] sm:$0xff]
    %v253 = vld [vmem:[#allocation5 + $0x4e0] sm:$0xff]
    %v254 = vld [vmem:[#allocation5 + $0x4e8] sm:$0xff]
    %v255 = vld [vmem:[#allocation5 + $0x4f0] sm:$0xff]
    %v256 = vld [vmem:[#allocation5 + $0x4f8] sm:$0xff]
    %v257 = vld [vmem:[#allocation5 + $0x500] sm:$0xff]
    %v258 = vld [vmem:[#allocation5 + $0x508] sm:$0xff]
    %v259 = vld [vmem:[#allocation5 + $0x510] sm:$0xff]
    %v260 = vld [vmem:[#allocation5 + $0x518] sm:$0xff]
    %v261 = vld [vmem:[#allocation5 + $0x520] sm:$0xff]
    %v262 = vld [vmem:[#allocation5 + $0x528] sm:$0xff]
    %v263 = vld [vmem:[#allocation5 + $0x530] sm:$0xff]
    %v264 = vld [vmem:[#allocation5 + $0x538] sm:$0xff]
    %v265 = vld [vmem:[#allocation5 + $0x540] sm:$0xff]
    %v266 = vld [vmem:[#allocation5 + $0x548] sm:$0xff]
    %v267 = vld [vmem:[#allocation5 + $0x550] sm:$0xff]
    %v268 = vld [vmem:[#allocation5 + $0x558] sm:$0xff]
    %v269 = vld [vmem:[#allocation5 + $0x560] sm:$0xff]
    %v270 = vld [vmem:[#allocation5 + $0x568] sm:$0xff]
    %v271 = vld [vmem:[#allocation5 + $0x570] sm:$0xff]
    %v272 = vld [vmem:[#allocation5 + $0x578] sm:$0xff]
    %v273 = vld [vmem:[#allocation5 + $0x580] sm:$0xff]
    %v274 = vld [vmem:[#allocation5 + $0x588] sm:$0xff]
    %v275 = vld [vmem:[#allocation5 + $0x590] sm:$0xff]
    %v276 = vld [vmem:[#allocation5 + $0x598] sm:$0xff]
    %v277 = vld [vmem:[#allocation5 + $0x5a0] sm:$0xff]
    %v278 = vld [vmem:[#allocation5 + $0x5a8] sm:$0xff]
    %v279 = vld [vmem:[#allocation5 + $0x5b0] sm:$0xff]
    %v280 = vld [vmem:[#allocation5 + $0x5b8] sm:$0xff]
    %v281 = vld [vmem:[#allocation5 + $0x5c0] sm:$0xff]
    %v282 = vld [vmem:[#allocation5 + $0x5c8] sm:$0xff]
    %v283 = vld [vmem:[#allocation5 + $0x5d0] sm:$0xff]
    %v284 = vld [vmem:[#allocation5 + $0x5d8] sm:$0xff]
    %v285 = vld [vmem:[#allocation5 + $0x5e0] sm:$0xff]
    %v286 = vld [vmem:[#allocation5 + $0x5e8] sm:$0xff]
    %v287 = vld [vmem:[#allocation5 + $0x5f0] sm:$0xff]
    %v288 = vld [vmem:[#allocation5 + $0x5f8] sm:$0xff]
    %v289 = vld [vmem:[#allocation5 + $0x600] sm:$0xff]
    %v290 = vld [vmem:[#allocation5 + $0x608] sm:$0xff]
    %v291 = vld [vmem:[#allocation5 + $0x610] sm:$0xff]
    %v292 = vld [vmem:[#allocation5 + $0x618] sm:$0xff]
    %v293 = vld [vmem:[#allocation5 + $0x620] sm:$0xff]
    %v294 = vld [vmem:[#allocation5 + $0x628] sm:$0xff]
    %v295 = vld [vmem:[#allocation5 + $0x630] sm:$0xff]
    %v296 = vld [vmem:[#allocation5 + $0x638] sm:$0xff]
    %v297 = vld [vmem:[#allocation5 + $0x640] sm:$0xff]
    %v298 = vld [vmem:[#allocation5 + $0x648] sm:$0xff]
    %v299 = vld [vmem:[#allocation5 + $0x650] sm:$0xff]
    %v300 = vld [vmem:[#allocation5 + $0x658] sm:$0xff]
    %v301 = vld [vmem:[#allocation5 + $0x660] sm:$0xff]
    %v302 = vld [vmem:[#allocation5 + $0x668] sm:$0xff]
    %v303 = vld [vmem:[#allocation5 + $0x670] sm:$0xff]
    %v304 = vld [vmem:[#allocation5 + $0x678] sm:$0xff]
    %v305 = vld [vmem:[#allocation5 + $0x680] sm:$0xff]
    %v306 = vld [vmem:[#allocation5 + $0x688] sm:$0xff]
    %v307 = vld [vmem:[#allocation5 + $0x690] sm:$0xff]
    %v308 = vld [vmem:[#allocation5 + $0x698] sm:$0xff]
    %v309 = vld [vmem:[#allocation5 + $0x6a0] sm:$0xff]
    %v310 = vld [vmem:[#allocation5 + $0x6a8] sm:$0xff]
    %v311 = vld [vmem:[#allocation5 + $0x6b0] sm:$0xff]
    %v312 = vld [vmem:[#allocation5 + $0x6b8] sm:$0xff]
    %v313 = vld [vmem:[#allocation5 + $0x6c0] sm:$0xff]
    %v314 = vld [vmem:[#allocation5 + $0x6c8] sm:$0xff]
    %v315 = vld [vmem:[#allocation5 + $0x6d0] sm:$0xff]
    %v316 = vld [vmem:[#allocation5 + $0x6d8] sm:$0xff]
    %v317 = vld [vmem:[#allocation5 + $0x6e0] sm:$0xff]
    %v318 = vld [vmem:[#allocation5 + $0x6e8] sm:$0xff]
    %v319 = vld [vmem:[#allocation5 + $0x6f0] sm:$0xff]
    %v320 = vld [vmem:[#allocation5 + $0x6f8] sm:$0xff]
    %v321 = vld [vmem:[#allocation5 + $0x700] sm:$0xff]
    %v322 = vld [vmem:[#allocation5 + $0x708] sm:$0xff]
    %v323 = vld [vmem:[#allocation5 + $0x710] sm:$0xff]
    %v324 = vld [vmem:[#allocation5 + $0x718] sm:$0xff]
    %v325 = vld [vmem:[#allocation5 + $0x720] sm:$0xff]
    %v326 = vld [vmem:[#allocation5 + $0x728] sm:$0xff]
    %v327 = vld [vmem:[#allocation5 + $0x730] sm:$0xff]
    %v328 = vld [vmem:[#allocation5 + $0x738] sm:$0xff]
    %v329 = vld [vmem:[#allocation5 + $0x740] sm:$0xff]
    %v330 = vld [vmem:[#allocation5 + $0x748] sm:$0xff]
    %v331 = vld [vmem:[#allocation5 + $0x750] sm:$0xff]
    %v332 = vld [vmem:[#allocation5 + $0x758] sm:$0xff]
    %v333 = vld [vmem:[#allocation5 + $0x760] sm:$0xff]
    %v334 = vld [vmem:[#allocation5 + $0x768] sm:$0xff]
    %v335 = vld [vmem:[#allocation5 + $0x770] sm:$0xff]
    %v336 = vld [vmem:[#allocation5 + $0x778] sm:$0xff]
    %v337 = vld [vmem:[#allocation5 + $0x780] sm:$0xff]
    %v338 = vld [vmem:[#allocation5 + $0x788] sm:$0xff]
    %v339 = vld [vmem:[#allocation5 + $0x790] sm:$0xff]
    %v340 = vld [vmem:[#allocation5 + $0x798] sm:$0xff]
    %v341 = vld [vmem:[#allocation5 + $0x7a0] sm:$0xff]
    %v342 = vld [vmem:[#allocation5 + $0x7a8] sm:$0xff]
    %v343 = vld [vmem:[#allocation5 + $0x7b0] sm:$0xff]
    %v344 = vld [vmem:[#allocation5 + $0x7b8] sm:$0xff]
    %v345 = vld [vmem:[#allocation5 + $0x7c0] sm:$0xff]
    %v346 = vld [vmem:[#allocation5 + $0x7c8] sm:$0xff]
    %v347 = vld [vmem:[#allocation5 + $0x7d0] sm:$0xff]
    %v348 = vld [vmem:[#allocation5 + $0x7d8] sm:$0xff]
    %v349 = vld [vmem:[#allocation5 + $0x7e0] sm:$0xff]
    %v350 = vld [vmem:[#allocation5 + $0x7e8] sm:$0xff]
    %v351 = vld [vmem:[#allocation5 + $0x7f0] sm:$0xff]
    %v352 = vld [vmem:[#allocation5 + $0x7f8] sm:$0xff]
    %v353 = vld [vmem:[#allocation5 + $0x800] sm:$0xff]
    %v354 = vld [vmem:[#allocation5 + $0x808] sm:$0xff]
    %v355 = vld [vmem:[#allocation5 + $0x810] sm:$0xff]
    %v356 = vld [vmem:[#allocation5 + $0x818] sm:$0xff]
    %v357 = vld [vmem:[#allocation5 + $0x820] sm:$0xff]
    %v358 = vld [vmem:[#allocation5 + $0x828] sm:$0xff]
    %v359 = vld [vmem:[#allocation5 + $0x830] sm:$0xff]
    %v360 = vld [vmem:[#allocation5 + $0x838] sm:$0xff]
    %v361 = vld [vmem:[#allocation5 + $0x840] sm:$0xff]
    %v362 = vld [vmem:[#allocation5 + $0x848] sm:$0xff]
    %v363 = vld [vmem:[#allocation5 + $0x850] sm:$0xff]
    %v364 = vld [vmem:[#allocation5 + $0x858] sm:$0xff]
    %v365 = vld [vmem:[#allocation5 + $0x860] sm:$0xff]
    %v366 = vld [vmem:[#allocation5 + $0x868] sm:$0xff]
    %v367 = vld [vmem:[#allocation5 + $0x870] sm:$0xff]
    %v368 = vld [vmem:[#allocation5 + $0x878] sm:$0xff]
    %v369 = vld [vmem:[#allocation5 + $0x880] sm:$0xff]
    %v370 = vld [vmem:[#allocation5 + $0x888] sm:$0xff]
    %v371 = vld [vmem:[#allocation5 + $0x890] sm:$0xff]
    %v372 = vld [vmem:[#allocation5 + $0x898] sm:$0xff]
    %v373 = vld [vmem:[#allocation5 + $0x8a0] sm:$0xff]
    %v374 = vld [vmem:[#allocation5 + $0x8a8] sm:$0xff]
    %v375 = vld [vmem:[#allocation5 + $0x8b0] sm:$0xff]
    %v376 = vld [vmem:[#allocation5 + $0x8b8] sm:$0xff]
    %v377 = vld [vmem:[#allocation5 + $0x8c0] sm:$0xff]
    %v378 = vld [vmem:[#allocation5 + $0x8c8] sm:$0xff]
    %v379 = vld [vmem:[#allocation5 + $0x8d0] sm:$0xff]
    %v380 = vld [vmem:[#allocation5 + $0x8d8] sm:$0xff]
    %v381 = vld [vmem:[#allocation5 + $0x8e0] sm:$0xff]
    %v382 = vld [vmem:[#allocation5 + $0x8e8] sm:$0xff]
    %v383 = vld [vmem:[#allocation5 + $0x8f0] sm:$0xff]
    %v384 = vld [vmem:[#allocation5 + $0x8f8] sm:$0xff]
    %v385 = vld [vmem:[#allocation5 + $0x900] sm:$0xff]
    %v386 = vld [vmem:[#allocation5 + $0x908] sm:$0xff]
    %v387 = vld [vmem:[#allocation5 + $0x910] sm:$0xff]
    %v388 = vld [vmem:[#allocation5 + $0x918] sm:$0xff]
    %v389 = vld [vmem:[#allocation5 + $0x920] sm:$0xff]
    %v390 = vld [vmem:[#allocation5 + $0x928] sm:$0xff]
    %v391 = vld [vmem:[#allocation5 + $0x930] sm:$0xff]
    %v392 = vld [vmem:[#allocation5 + $0x938] sm:$0xff]
    %v393 = vld [vmem:[#allocation5 + $0x940] sm:$0xff]
    %v394 = vld [vmem:[#allocation5 + $0x948] sm:$0xff]
    %v395 = vld [vmem:[#allocation5 + $0x950] sm:$0xff]
    %v396 = vld [vmem:[#allocation5 + $0x958] sm:$0xff]
    %v397 = vld [vmem:[#allocation5 + $0x960] sm:$0xff]
    %v398 = vld [vmem:[#allocation5 + $0x968] sm:$0xff]
    %v399 = vld [vmem:[#allocation5 + $0x970] sm:$0xff]
    %v400 = vld [vmem:[#allocation5 + $0x978] sm:$0xff]
    %v401 = vld [vmem:[#allocation5 + $0x980] sm:$0xff]
    %v402 = vld [vmem:[#allocation5 + $0x988] sm:$0xff]
    %v403 = vld [vmem:[#allocation5 + $0x990] sm:$0xff]
    %v404 = vld [vmem:[#allocation5 + $0x998] sm:$0xff]
    %v405 = vld [vmem:[#allocation5 + $0x9a0] sm:$0xff]
    %v406 = vld [vmem:[#allocation5 + $0x9a8] sm:$0xff]
    %v407 = vld [vmem:[#allocation5 + $0x9b0] sm:$0xff]
    %v408 = vld [vmem:[#allocation5 + $0x9b8] sm:$0xff]
    %v409 = vld [vmem:[#allocation5 + $0x9c0] sm:$0xff]
    %v410 = vld [vmem:[#allocation5 + $0x9c8] sm:$0xff]
    %v411 = vld [vmem:[#allocation5 + $0x9d0] sm:$0xff]
    %v412 = vld [vmem:[#allocation5 + $0x9d8] sm:$0xff]
    %v413 = vld [vmem:[#allocation5 + $0x9e0] sm:$0xff]
    %v414 = vld [vmem:[#allocation5 + $0x9e8] sm:$0xff]
    %v415 = vld [vmem:[#allocation5 + $0x9f0] sm:$0xff]
    %v416 = vld [vmem:[#allocation5 + $0x9f8] sm:$0xff]
    %v417 = vld [vmem:[#allocation5 + $0xa00] sm:$0xff]
    %v418 = vld [vmem:[#allocation5 + $0xa08] sm:$0xff]
    %v419 = vld [vmem:[#allocation5 + $0xa10] sm:$0xff]
    %v420 = vld [vmem:[#allocation5 + $0xa18] sm:$0xff]
    %v421 = vld [vmem:[#allocation5 + $0xa20] sm:$0xff]
    %v422 = vld [vmem:[#allocation5 + $0xa28] sm:$0xff]
    %v423 = vld [vmem:[#allocation5 + $0xa30] sm:$0xff]
    %v424 = vld [vmem:[#allocation5 + $0xa38] sm:$0xff]
    %v425 = vld [vmem:[#allocation5 + $0xa40] sm:$0xff]
    %v426 = vld [vmem:[#allocation5 + $0xa48] sm:$0xff]
    %v427 = vld [vmem:[#allocation5 + $0xa50] sm:$0xff]
    %v428 = vld [vmem:[#allocation5 + $0xa58] sm:$0xff]
    %v429 = vld [vmem:[#allocation5 + $0xa60] sm:$0xff]
    %v430 = vld [vmem:[#allocation5 + $0xa68] sm:$0xff]
    %v431 = vld [vmem:[#allocation5 + $0xa70] sm:$0xff]
    %v432 = vld [vmem:[#allocation5 + $0xa78] sm:$0xff]
    %v433 = vld [vmem:[#allocation5 + $0xa80] sm:$0xff]
    %v434 = vld [vmem:[#allocation5 + $0xa88] sm:$0xff]
    %v435 = vld [vmem:[#allocation5 + $0xa90] sm:$0xff]
    %v436 = vld [vmem:[#allocation5 + $0xa98] sm:$0xff]
    %v437 = vld [vmem:[#allocation5 + $0xaa0] sm:$0xff]
    %v438 = vld [vmem:[#allocation5 + $0xaa8] sm:$0xff]
    %v439 = vld [vmem:[#allocation5 + $0xab0] sm:$0xff]
    %v440 = vld [vmem:[#allocation5 + $0xab8] sm:$0xff]
    %v441 = vld [vmem:[#allocation5 + $0xac0] sm:$0xff]
    %v442 = vld [vmem:[#allocation5 + $0xac8] sm:$0xff]
    %v443 = vld [vmem:[#allocation5 + $0xad0] sm:$0xff]
    %v444 = vld [vmem:[#allocation5 + $0xad8] sm:$0xff]
    %v445 = vld [vmem:[#allocation5 + $0xae0] sm:$0xff]
    %v446 = vld [vmem:[#allocation5 + $0xae8] sm:$0xff]
    %v447 = vld [vmem:[#allocation5 + $0xaf0] sm:$0xff]
    %v448 = vld [vmem:[#allocation5 + $0xaf8] sm:$0xff]
    %v449 = vld [vmem:[#allocation5 + $0xb00] sm:$0xff]
    %v450 = vld [vmem:[#allocation5 + $0xb08] sm:$0xff]
    %v451 = vld [vmem:[#allocation5 + $0xb10] sm:$0xff]
    %v452 = vld [vmem:[#allocation5 + $0xb18] sm:$0xff]
    %v453 = vld [vmem:[#allocation5 + $0xb20] sm:$0xff]
    %v454 = vld [vmem:[#allocation5 + $0xb28] sm:$0xff]
    %v455 = vld [vmem:[#allocation5 + $0xb30] sm:$0xff]
    %v456 = vld [vmem:[#allocation5 + $0xb38] sm:$0xff]
    %v457 = vld [vmem:[#allocation5 + $0xb40] sm:$0xff]
    %v458 = vld [vmem:[#allocation5 + $0xb48] sm:$0xff]
    %v459 = vld [vmem:[#allocation5 + $0xb50] sm:$0xff]
    %v460 = vld [vmem:[#allocation5 + $0xb58] sm:$0xff]
    %v461 = vld [vmem:[#allocation5 + $0xb60] sm:$0xff]
    %v462 = vld [vmem:[#allocation5 + $0xb68] sm:$0xff]
    %v463 = vld [vmem:[#allocation5 + $0xb70] sm:$0xff]
    %v464 = vld [vmem:[#allocation5 + $0xb78] sm:$0xff]
    %v465 = vld [vmem:[#allocation5 + $0xb80] sm:$0xff]
    %v466 = vld [vmem:[#allocation5 + $0xb88] sm:$0xff]
    %v467 = vld [vmem:[#allocation5 + $0xb90] sm:$0xff]
    %v468 = vld [vmem:[#allocation5 + $0xb98] sm:$0xff]
    %v469 = vld [vmem:[#allocation5 + $0xba0] sm:$0xff]
    %v470 = vld [vmem:[#allocation5 + $0xba8] sm:$0xff]
    %v471 = vld [vmem:[#allocation5 + $0xbb0] sm:$0xff]
    %v472 = vld [vmem:[#allocation5 + $0xbb8] sm:$0xff]
    %v473 = vld [vmem:[#allocation5 + $0xbc0] sm:$0xff]
    %v474 = vld [vmem:[#allocation5 + $0xbc8] sm:$0xff]
    %v475 = vld [vmem:[#allocation5 + $0xbd0] sm:$0xff]
    %v476 = vld [vmem:[#allocation5 + $0xbd8] sm:$0xff]
    %v477 = vld [vmem:[#allocation5 + $0xbe0] sm:$0xff]
    %v478 = vld [vmem:[#allocation5 + $0xbe8] sm:$0xff]
    %v479 = vld [vmem:[#allocation5 + $0xbf0] sm:$0xff]
    %v480 = vld [vmem:[#allocation5 + $0xbf8] sm:$0xff]
    %v481 = vld [vmem:[#allocation5 + $0xc00] sm:$0xff]
    %v482 = vld [vmem:[#allocation5 + $0xc08] sm:$0xff]
    %v483 = vld [vmem:[#allocation5 + $0xc10] sm:$0xff]
    %v484 = vld [vmem:[#allocation5 + $0xc18] sm:$0xff]
    %v485 = vld [vmem:[#allocation5 + $0xc20] sm:$0xff]
    %v486 = vld [vmem:[#allocation5 + $0xc28] sm:$0xff]
    %v487 = vld [vmem:[#allocation5 + $0xc30] sm:$0xff]
    %v488 = vld [vmem:[#allocation5 + $0xc38] sm:$0xff]
    %v489 = vld [vmem:[#allocation5 + $0xc40] sm:$0xff]
    %v490 = vld [vmem:[#allocation5 + $0xc48] sm:$0xff]
    %v491 = vld [vmem:[#allocation5 + $0xc50] sm:$0xff]
    %v492 = vld [vmem:[#allocation5 + $0xc58] sm:$0xff]
    %v493 = vld [vmem:[#allocation5 + $0xc60] sm:$0xff]
    %v494 = vld [vmem:[#allocation5 + $0xc68] sm:$0xff]
    %v495 = vld [vmem:[#allocation5 + $0xc70] sm:$0xff]
    %v496 = vld [vmem:[#allocation5 + $0xc78] sm:$0xff]
    %v497 = vld [vmem:[#allocation5 + $0xc80] sm:$0xff]
    %v498 = vld [vmem:[#allocation5 + $0xc88] sm:$0xff]
    %v499 = vld [vmem:[#allocation5 + $0xc90] sm:$0xff]
    %v500 = vld [vmem:[#allocation5 + $0xc98] sm:$0xff]
    %v501 = vld [vmem:[#allocation5 + $0xca0] sm:$0xff]
    %v502 = vld [vmem:[#allocation5 + $0xca8] sm:$0xff]
    %v503 = vld [vmem:[#allocation5 + $0xcb0] sm:$0xff]
    %v504 = vld [vmem:[#allocation5 + $0xcb8] sm:$0xff]
    %v505 = vld [vmem:[#allocation5 + $0xcc0] sm:$0xff]
    %v506 = vld [vmem:[#allocation5 + $0xcc8] sm:$0xff]
    %v507 = vld [vmem:[#allocation5 + $0xcd0] sm:$0xff]
    %v508 = vld [vmem:[#allocation5 + $0xcd8] sm:$0xff]
    %v509 = vld [vmem:[#allocation5 + $0xce0] sm:$0xff]
    %v510 = vld [vmem:[#allocation5 + $0xce8] sm:$0xff]
    %v511 = vld [vmem:[#allocation5 + $0xcf0] sm:$0xff]
    %v512 = vld [vmem:[#allocation5 + $0xcf8] sm:$0xff]
    %v513 = vld [vmem:[#allocation5 + $0xd00] sm:$0xff]
    %v514 = vld [vmem:[#allocation5 + $0xd08] sm:$0xff]
    %v515 = vld [vmem:[#allocation5 + $0xd10] sm:$0xff]
    %v516 = vld [vmem:[#allocation5 + $0xd18] sm:$0xff]
    %v517 = vld [vmem:[#allocation5 + $0xd20] sm:$0xff]
    %v518 = vld [vmem:[#allocation5 + $0xd28] sm:$0xff]
    %v519 = vld [vmem:[#allocation5 + $0xd30] sm:$0xff]
    %v520 = vld [vmem:[#allocation5 + $0xd38] sm:$0xff]
    %v521 = vld [vmem:[#allocation5 + $0xd40] sm:$0xff]
    %v522 = vld [vmem:[#allocation5 + $0xd48] sm:$0xff]
    %v523 = vld [vmem:[#allocation5 + $0xd50] sm:$0xff]
    %v524 = vld [vmem:[#allocation5 + $0xd58] sm:$0xff]
    %v525 = vld [vmem:[#allocation5 + $0xd60] sm:$0xff]
    %v526 = vld [vmem:[#allocation5 + $0xd68] sm:$0xff]
    %v527 = vld [vmem:[#allocation5 + $0xd70] sm:$0xff]
    %v528 = vld [vmem:[#allocation5 + $0xd78] sm:$0xff]
    %v529 = vld [vmem:[#allocation5 + $0xd80] sm:$0xff]
    %v530 = vld [vmem:[#allocation5 + $0xd88] sm:$0xff]
    %v531 = vld [vmem:[#allocation5 + $0xd90] sm:$0xff]
    %v532 = vld [vmem:[#allocation5 + $0xd98] sm:$0xff]
    %v533 = vld [vmem:[#allocation5 + $0xda0] sm:$0xff]
    %v534 = vld [vmem:[#allocation5 + $0xda8] sm:$0xff]
    %v535 = vld [vmem:[#allocation5 + $0xdb0] sm:$0xff]
    %v536 = vld [vmem:[#allocation5 + $0xdb8] sm:$0xff]
    %v537 = vld [vmem:[#allocation5 + $0xdc0] sm:$0xff]
    %v538 = vld [vmem:[#allocation5 + $0xdc8] sm:$0xff]
    %v539 = vld [vmem:[#allocation5 + $0xdd0] sm:$0xff]
    %v540 = vld [vmem:[#allocation5 + $0xdd8] sm:$0xff]
    %v541 = vld [vmem:[#allocation5 + $0xde0] sm:$0xff]
    %v542 = vld [vmem:[#allocation5 + $0xde8] sm:$0xff]
    %v543 = vld [vmem:[#allocation5 + $0xdf0] sm:$0xff]
    %v544 = vld [vmem:[#allocation5 + $0xdf8] sm:$0xff]
    %v545 = vld [vmem:[#allocation5 + $0xe00] sm:$0xff]
    %v546 = vld [vmem:[#allocation5 + $0xe08] sm:$0xff]
    %v547 = vld [vmem:[#allocation5 + $0xe10] sm:$0xff]
    %v548 = vld [vmem:[#allocation5 + $0xe18] sm:$0xff]
    %v549 = vld [vmem:[#allocation5 + $0xe20] sm:$0xff]
    %v550 = vld [vmem:[#allocation5 + $0xe28] sm:$0xff]
    %v551 = vld [vmem:[#allocation5 + $0xe30] sm:$0xff]
    %v552 = vld [vmem:[#allocation5 + $0xe38] sm:$0xff]
    %v553 = vld [vmem:[#allocation5 + $0xe40] sm:$0xff]
    %v554 = vld [vmem:[#allocation5 + $0xe48] sm:$0xff]
    %v555 = vld [vmem:[#allocation5 + $0xe50] sm:$0xff]
    %v556 = vld [vmem:[#allocation5 + $0xe58] sm:$0xff]
    %v557 = vld [vmem:[#allocation5 + $0xe60] sm:$0xff]
    %v558 = vld [vmem:[#allocation5 + $0xe68] sm:$0xff]
    %v559 = vld [vmem:[#allocation5 + $0xe70] sm:$0xff]
    %v560 = vld [vmem:[#allocation5 + $0xe78] sm:$0xff]
    %v561 = vld [vmem:[#allocation5 + $0xe80] sm:$0xff]
    %v562 = vld [vmem:[#allocation5 + $0xe88] sm:$0xff]
    %v563 = vld [vmem:[#allocation5 + $0xe90] sm:$0xff]
    %v564 = vld [vmem:[#allocation5 + $0xe98] sm:$0xff]
    %v565 = vld [vmem:[#allocation5 + $0xea0] sm:$0xff]
    %v566 = vld [vmem:[#allocation5 + $0xea8] sm:$0xff]
    %v567 = vld [vmem:[#allocation5 + $0xeb0] sm:$0xff]
    %v568 = vld [vmem:[#allocation5 + $0xeb8] sm:$0xff]
    %v569 = vld [vmem:[#allocation5 + $0xec0] sm:$0xff]
    %v570 = vld [vmem:[#allocation5 + $0xec8] sm:$0xff]
    %v571 = vld [vmem:[#allocation5 + $0xed0] sm:$0xff]
    %v572 = vld [vmem:[#allocation5 + $0xed8] sm:$0xff]
    %v573 = vld [vmem:[#allocation5 + $0xee0] sm:$0xff]
    %v574 = vld [vmem:[#allocation5 + $0xee8] sm:$0xff]
    %v575 = vld [vmem:[#allocation5 + $0xef0] sm:$0xff]
    %v576 = vld [vmem:[#allocation5 + $0xef8] sm:$0xff]
    %v577 = vld [vmem:[#allocation5 + $0xf00] sm:$0xff]
    %v578 = vld [vmem:[#allocation5 + $0xf08] sm:$0xff]
    %v579 = vld [vmem:[#allocation5 + $0xf10] sm:$0xff]
    %v580 = vld [vmem:[#allocation5 + $0xf18] sm:$0xff]
    %v581 = vld [vmem:[#allocation5 + $0xf20] sm:$0xff]
    %v582 = vld [vmem:[#allocation5 + $0xf28] sm:$0xff]
    %v583 = vld [vmem:[#allocation5 + $0xf30] sm:$0xff]
    %v584 = vld [vmem:[#allocation5 + $0xf38] sm:$0xff]
    %v585 = vld [vmem:[#allocation5 + $0xf40] sm:$0xff]
    %v586 = vld [vmem:[#allocation5 + $0xf48] sm:$0xff]
    %v587 = vld [vmem:[#allocation5 + $0xf50] sm:$0xff]
    %v588 = vld [vmem:[#allocation5 + $0xf58] sm:$0xff]
    %v589 = vld [vmem:[#allocation5 + $0xf60] sm:$0xff]
    %v590 = vld [vmem:[#allocation5 + $0xf68] sm:$0xff]
    %v591 = vld [vmem:[#allocation5 + $0xf70] sm:$0xff]
    %v592 = vld [vmem:[#allocation5 + $0xf78] sm:$0xff]
    %v593 = vld [vmem:[#allocation5 + $0xf80] sm:$0xff]
    %v594 = vld [vmem:[#allocation5 + $0xf88] sm:$0xff]
    %v595 = vld [vmem:[#allocation5 + $0xf90] sm:$0xff]
    %v596 = vld [vmem:[#allocation5 + $0xf98] sm:$0xff]
    %v597 = vld [vmem:[#allocation5 + $0xfa0] sm:$0xff]
    %v598 = vld [vmem:[#allocation5 + $0xfa8] sm:$0xff]
    %v599 = vld [vmem:[#allocation5 + $0xfb0] sm:$0xff]
    %v600 = vld [vmem:[#allocation5 + $0xfb8] sm:$0xff]
    %v601 = vld [vmem:[#allocation5 + $0xfc0] sm:$0xff]
    %v602 = vld [vmem:[#allocation5 + $0xfc8] sm:$0xff]
    %v603 = vld [vmem:[#allocation5 + $0xfd0] sm:$0xff]
    %v604 = vld [vmem:[#allocation5 + $0xfd8] sm:$0xff]
    %v605 = vld [vmem:[#allocation5 + $0xfe0] sm:$0xff]
    %v606 = vld [vmem:[#allocation5 + $0xfe8] sm:$0xff]
    %v607 = vld [vmem:[#allocation5 + $0xff0] sm:$0xff]
    %v608 = vld [vmem:[#allocation5 + $0xff8] sm:$0xff]
    %v609 = vld [vmem:[#allocation7] sm:$0xff]
    %v610 = vld [vmem:[#allocation7 + $0x8] sm:$0xff]
    %v613 = vlaneseq
    %v614 = vshrl.u32 %v613, 7
    %v615 = vsub.s32 0, %v614
    %v616 = vrot.slane %v609, %v615
    %v617 = vlaneseq
    %v618 = vshrl.u32 %v617, 7
    %v619 = vsub.s32 1, %v618
    %v620 = vrot.slane %v609, %v619
    %v621 = vlaneseq
    %v622 = vshrl.u32 %v621, 7
    %v623 = vsub.s32 2, %v622
    %v624 = vrot.slane %v609, %v623
    %v625 = vlaneseq
    %v626 = vshrl.u32 %v625, 7
    %v627 = vsub.s32 3, %v626
    %v628 = vrot.slane %v609, %v627
    %v629 = vlaneseq
    %v630 = vshrl.u32 %v629, 7
    %v631 = vsub.s32 4, %v630
    %v632 = vrot.slane %v609, %v631
    %v633 = vlaneseq
    %v634 = vshrl.u32 %v633, 7
    %v635 = vsub.s32 5, %v634
    %v636 = vrot.slane %v609, %v635
    %v637 = vlaneseq
    %v638 = vshrl.u32 %v637, 7
    %v639 = vsub.s32 6, %v638
    %v640 = vrot.slane %v609, %v639
    %v641 = vlaneseq
    %v642 = vshrl.u32 %v641, 7
    %v643 = vsub.s32 7, %v642
    %v644 = vrot.slane %v609, %v643
    %v645 = vlaneseq
    %v646 = vshrl.u32 %v645, 7
    %v647 = vsub.s32 0, %v646
    %v648 = vrot.slane %v610, %v647
    %v649 = vlaneseq
    %v650 = vshrl.u32 %v649, 7
    %v651 = vsub.s32 1, %v650
    %v652 = vrot.slane %v610, %v651
    %v653 = vlaneseq
    %v654 = vshrl.u32 %v653, 7
    %v655 = vsub.s32 2, %v654
    %v656 = vrot.slane %v610, %v655
    %v657 = vlaneseq
    %v658 = vshrl.u32 %v657, 7
    %v659 = vsub.s32 3, %v658
    %v660 = vrot.slane %v610, %v659
    %v661 = vlaneseq
    %v662 = vshrl.u32 %v661, 7
    %v663 = vsub.s32 4, %v662
    %v664 = vrot.slane %v610, %v663
    %v665 = vlaneseq
    %v666 = vshrl.u32 %v665, 7
    %v667 = vsub.s32 5, %v666
    %v668 = vrot.slane %v610, %v667
    %v669 = vlaneseq
    %v670 = vshrl.u32 %v669, 7
    %v671 = vsub.s32 6, %v670
    %v672 = vrot.slane %v610, %v671
    %v673 = vlaneseq
    %v674 = vshrl.u32 %v673, 7
    %v675 = vsub.s32 7, %v674
    %v676 = vrot.slane %v610, %v675
    %v1205 = vunpack.c.l.b16 %v97
    %v1206 = vunpack.c.h.b16 %v97
    %v1207 = vunpack.c.l.b16 %v98
    %v1208 = vunpack.c.h.b16 %v98
    %v1209 = vunpack.c.l.b16 %v99
    %v1210 = vunpack.c.h.b16 %v99
    %v1211 = vunpack.c.l.b16 %v100
    %v1212 = vunpack.c.h.b16 %v100
    %v1213 = vunpack.c.l.b16 %v101
    %v1214 = vunpack.c.h.b16 %v101
    %v1215 = vunpack.c.l.b16 %v102
    %v1216 = vunpack.c.h.b16 %v102
    %v1217 = vunpack.c.l.b16 %v103
    %v1218 = vunpack.c.h.b16 %v103
    %v1219 = vunpack.c.l.b16 %v104
    %v1220 = vunpack.c.h.b16 %v104
    %v1221 = vunpack.c.l.b16 %v105
    %v1222 = vunpack.c.h.b16 %v105
    %v1223 = vunpack.c.l.b16 %v106
    %v1224 = vunpack.c.h.b16 %v106
    %v1225 = vunpack.c.l.b16 %v107
    %v1226 = vunpack.c.h.b16 %v107
    %v1227 = vunpack.c.l.b16 %v108
    %v1228 = vunpack.c.h.b16 %v108
    %v1229 = vunpack.c.l.b16 %v109
    %v1230 = vunpack.c.h.b16 %v109
    %v1231 = vunpack.c.l.b16 %v110
    %v1232 = vunpack.c.h.b16 %v110
    %v1233 = vunpack.c.l.b16 %v111
    %v1234 = vunpack.c.h.b16 %v111
    %v1235 = vunpack.c.l.b16 %v112
    %v1236 = vunpack.c.h.b16 %v112
    %v1237 = vunpack.c.l.b16 %v113
    %v1238 = vunpack.c.h.b16 %v113
    %v1239 = vunpack.c.l.b16 %v114
    %v1240 = vunpack.c.h.b16 %v114
    %v1241 = vunpack.c.l.b16 %v115
    %v1242 = vunpack.c.h.b16 %v115
    %v1243 = vunpack.c.l.b16 %v116
    %v1244 = vunpack.c.h.b16 %v116
    %v1245 = vunpack.c.l.b16 %v117
    %v1246 = vunpack.c.h.b16 %v117
    %v1247 = vunpack.c.l.b16 %v118
    %v1248 = vunpack.c.h.b16 %v118
    %v1249 = vunpack.c.l.b16 %v119
    %v1250 = vunpack.c.h.b16 %v119
    %v1251 = vunpack.c.l.b16 %v120
    %v1252 = vunpack.c.h.b16 %v120
    %v1253 = vunpack.c.l.b16 %v121
    %v1254 = vunpack.c.h.b16 %v121
    %v1255 = vunpack.c.l.b16 %v122
    %v1256 = vunpack.c.h.b16 %v122
    %v1257 = vunpack.c.l.b16 %v123
    %v1258 = vunpack.c.h.b16 %v123
    %v1259 = vunpack.c.l.b16 %v124
    %v1260 = vunpack.c.h.b16 %v124
    %v1261 = vunpack.c.l.b16 %v125
    %v1262 = vunpack.c.h.b16 %v125
    %v1263 = vunpack.c.l.b16 %v126
    %v1264 = vunpack.c.h.b16 %v126
    %v1265 = vunpack.c.l.b16 %v127
    %v1266 = vunpack.c.h.b16 %v127
    %v1267 = vunpack.c.l.b16 %v128
    %v1268 = vunpack.c.h.b16 %v128
    %v1269 = vunpack.c.l.b16 %v129
    %v1270 = vunpack.c.h.b16 %v129
    %v1271 = vunpack.c.l.b16 %v130
    %v1272 = vunpack.c.h.b16 %v130
    %v1273 = vunpack.c.l.b16 %v131
    %v1274 = vunpack.c.h.b16 %v131
    %v1275 = vunpack.c.l.b16 %v132
    %v1276 = vunpack.c.h.b16 %v132
    %v1277 = vunpack.c.l.b16 %v133
    %v1278 = vunpack.c.h.b16 %v133
    %v1279 = vunpack.c.l.b16 %v134
    %v1280 = vunpack.c.h.b16 %v134
    %v1281 = vunpack.c.l.b16 %v135
    %v1282 = vunpack.c.h.b16 %v135
    %v1283 = vunpack.c.l.b16 %v136
    %v1284 = vunpack.c.h.b16 %v136
    %v1285 = vunpack.c.l.b16 %v137
    %v1286 = vunpack.c.h.b16 %v137
    %v1287 = vunpack.c.l.b16 %v138
    %v1288 = vunpack.c.h.b16 %v138
    %v1289 = vunpack.c.l.b16 %v139
    %v1290 = vunpack.c.h.b16 %v139
    %v1291 = vunpack.c.l.b16 %v140
    %v1292 = vunpack.c.h.b16 %v140
    %v1293 = vunpack.c.l.b16 %v141
    %v1294 = vunpack.c.h.b16 %v141
    %v1295 = vunpack.c.l.b16 %v142
    %v1296 = vunpack.c.h.b16 %v142
    %v1297 = vunpack.c.l.b16 %v143
    %v1298 = vunpack.c.h.b16 %v143
    %v1299 = vunpack.c.l.b16 %v144
    %v1300 = vunpack.c.h.b16 %v144
    %v1301 = vunpack.c.l.b16 %v145
    %v1302 = vunpack.c.h.b16 %v145
    %v1303 = vunpack.c.l.b16 %v146
    %v1304 = vunpack.c.h.b16 %v146
    %v1305 = vunpack.c.l.b16 %v147
    %v1306 = vunpack.c.h.b16 %v147
    %v1307 = vunpack.c.l.b16 %v148
    %v1308 = vunpack.c.h.b16 %v148
    %v1309 = vunpack.c.l.b16 %v149
    %v1310 = vunpack.c.h.b16 %v149
    %v1311 = vunpack.c.l.b16 %v150
    %v1312 = vunpack.c.h.b16 %v150
    %v1313 = vunpack.c.l.b16 %v151
    %v1314 = vunpack.c.h.b16 %v151
    %v1315 = vunpack.c.l.b16 %v152
    %v1316 = vunpack.c.h.b16 %v152
    %v1317 = vunpack.c.l.b16 %v153
    %v1318 = vunpack.c.h.b16 %v153
    %v1319 = vunpack.c.l.b16 %v154
    %v1320 = vunpack.c.h.b16 %v154
    %v1321 = vunpack.c.l.b16 %v155
    %v1322 = vunpack.c.h.b16 %v155
    %v1323 = vunpack.c.l.b16 %v156
    %v1324 = vunpack.c.h.b16 %v156
    %v1325 = vunpack.c.l.b16 %v157
    %v1326 = vunpack.c.h.b16 %v157
    %v1327 = vunpack.c.l.b16 %v158
    %v1328 = vunpack.c.h.b16 %v158
    %v1329 = vunpack.c.l.b16 %v159
    %v1330 = vunpack.c.h.b16 %v159
    %v1331 = vunpack.c.l.b16 %v160
    %v1332 = vunpack.c.h.b16 %v160
    %v1333 = vunpack.c.l.b16 %v161
    %v1334 = vunpack.c.h.b16 %v161
    %v1335 = vunpack.c.l.b16 %v162
    %v1336 = vunpack.c.h.b16 %v162
    %v1337 = vunpack.c.l.b16 %v163
    %v1338 = vunpack.c.h.b16 %v163
    %v1339 = vunpack.c.l.b16 %v164
    %v1340 = vunpack.c.h.b16 %v164
    %v1341 = vunpack.c.l.b16 %v165
    %v1342 = vunpack.c.h.b16 %v165
    %v1343 = vunpack.c.l.b16 %v166
    %v1344 = vunpack.c.h.b16 %v166
    %v1345 = vunpack.c.l.b16 %v167
    %v1346 = vunpack.c.h.b16 %v167
    %v1347 = vunpack.c.l.b16 %v168
    %v1348 = vunpack.c.h.b16 %v168
    %v1349 = vunpack.c.l.b16 %v169
    %v1350 = vunpack.c.h.b16 %v169
    %v1351 = vunpack.c.l.b16 %v170
    %v1352 = vunpack.c.h.b16 %v170
    %v1353 = vunpack.c.l.b16 %v171
    %v1354 = vunpack.c.h.b16 %v171
    %v1355 = vunpack.c.l.b16 %v172
    %v1356 = vunpack.c.h.b16 %v172
    %v1357 = vunpack.c.l.b16 %v173
    %v1358 = vunpack.c.h.b16 %v173
    %v1359 = vunpack.c.l.b16 %v174
    %v1360 = vunpack.c.h.b16 %v174
    %v1361 = vunpack.c.l.b16 %v175
    %v1362 = vunpack.c.h.b16 %v175
    %v1363 = vunpack.c.l.b16 %v176
    %v1364 = vunpack.c.h.b16 %v176
    %v1365 = vunpack.c.l.b16 %v177
    %v1366 = vunpack.c.h.b16 %v177
    %v1367 = vunpack.c.l.b16 %v178
    %v1368 = vunpack.c.h.b16 %v178
    %v1369 = vunpack.c.l.b16 %v179
    %v1370 = vunpack.c.h.b16 %v179
    %v1371 = vunpack.c.l.b16 %v180
    %v1372 = vunpack.c.h.b16 %v180
    %v1373 = vunpack.c.l.b16 %v181
    %v1374 = vunpack.c.h.b16 %v181
    %v1375 = vunpack.c.l.b16 %v182
    %v1376 = vunpack.c.h.b16 %v182
    %v1377 = vunpack.c.l.b16 %v183
    %v1378 = vunpack.c.h.b16 %v183
    %v1379 = vunpack.c.l.b16 %v184
    %v1380 = vunpack.c.h.b16 %v184
    %v1381 = vunpack.c.l.b16 %v185
    %v1382 = vunpack.c.h.b16 %v185
    %v1383 = vunpack.c.l.b16 %v186
    %v1384 = vunpack.c.h.b16 %v186
    %v1385 = vunpack.c.l.b16 %v187
    %v1386 = vunpack.c.h.b16 %v187
    %v1387 = vunpack.c.l.b16 %v188
    %v1388 = vunpack.c.h.b16 %v188
    %v1389 = vunpack.c.l.b16 %v189
    %v1390 = vunpack.c.h.b16 %v189
    %v1391 = vunpack.c.l.b16 %v190
    %v1392 = vunpack.c.h.b16 %v190
    %v1393 = vunpack.c.l.b16 %v191
    %v1394 = vunpack.c.h.b16 %v191
    %v1395 = vunpack.c.l.b16 %v192
    %v1396 = vunpack.c.h.b16 %v192
    %v1397 = vunpack.c.l.b16 %v193
    %v1398 = vunpack.c.h.b16 %v193
    %v1399 = vunpack.c.l.b16 %v194
    %v1400 = vunpack.c.h.b16 %v194
    %v1401 = vunpack.c.l.b16 %v195
    %v1402 = vunpack.c.h.b16 %v195
    %v1403 = vunpack.c.l.b16 %v196
    %v1404 = vunpack.c.h.b16 %v196
    %v1405 = vunpack.c.l.b16 %v197
    %v1406 = vunpack.c.h.b16 %v197
    %v1407 = vunpack.c.l.b16 %v198
    %v1408 = vunpack.c.h.b16 %v198
    %v1409 = vunpack.c.l.b16 %v199
    %v1410 = vunpack.c.h.b16 %v199
    %v1411 = vunpack.c.l.b16 %v200
    %v1412 = vunpack.c.h.b16 %v200
    %v1413 = vunpack.c.l.b16 %v201
    %v1414 = vunpack.c.h.b16 %v201
    %v1415 = vunpack.c.l.b16 %v202
    %v1416 = vunpack.c.h.b16 %v202
    %v1417 = vunpack.c.l.b16 %v203
    %v1418 = vunpack.c.h.b16 %v203
    %v1419 = vunpack.c.l.b16 %v204
    %v1420 = vunpack.c.h.b16 %v204
    %v1421 = vunpack.c.l.b16 %v205
    %v1422 = vunpack.c.h.b16 %v205
    %v1423 = vunpack.c.l.b16 %v206
    %v1424 = vunpack.c.h.b16 %v206
    %v1425 = vunpack.c.l.b16 %v207
    %v1426 = vunpack.c.h.b16 %v207
    %v1427 = vunpack.c.l.b16 %v208
    %v1428 = vunpack.c.h.b16 %v208
    %v1429 = vunpack.c.l.b16 %v209
    %v1430 = vunpack.c.h.b16 %v209
    %v1431 = vunpack.c.l.b16 %v210
    %v1432 = vunpack.c.h.b16 %v210
    %v1433 = vunpack.c.l.b16 %v211
    %v1434 = vunpack.c.h.b16 %v211
    %v1435 = vunpack.c.l.b16 %v212
    %v1436 = vunpack.c.h.b16 %v212
    %v1437 = vunpack.c.l.b16 %v213
    %v1438 = vunpack.c.h.b16 %v213
    %v1439 = vunpack.c.l.b16 %v214
    %v1440 = vunpack.c.h.b16 %v214
    %v1441 = vunpack.c.l.b16 %v215
    %v1442 = vunpack.c.h.b16 %v215
    %v1443 = vunpack.c.l.b16 %v216
    %v1444 = vunpack.c.h.b16 %v216
    %v1445 = vunpack.c.l.b16 %v217
    %v1446 = vunpack.c.h.b16 %v217
    %v1447 = vunpack.c.l.b16 %v218
    %v1448 = vunpack.c.h.b16 %v218
    %v1449 = vunpack.c.l.b16 %v219
    %v1450 = vunpack.c.h.b16 %v219
    %v1451 = vunpack.c.l.b16 %v220
    %v1452 = vunpack.c.h.b16 %v220
    %v1453 = vunpack.c.l.b16 %v221
    %v1454 = vunpack.c.h.b16 %v221
    %v1455 = vunpack.c.l.b16 %v222
    %v1456 = vunpack.c.h.b16 %v222
    %v1457 = vunpack.c.l.b16 %v223
    %v1458 = vunpack.c.h.b16 %v223
    %v1459 = vunpack.c.l.b16 %v224
    %v1460 = vunpack.c.h.b16 %v224
    %v1461 = vunpack.c.l.b16 %v225
    %v1462 = vunpack.c.h.b16 %v225
    %v1463 = vunpack.c.l.b16 %v226
    %v1464 = vunpack.c.h.b16 %v226
    %v1465 = vunpack.c.l.b16 %v227
    %v1466 = vunpack.c.h.b16 %v227
    %v1467 = vunpack.c.l.b16 %v228
    %v1468 = vunpack.c.h.b16 %v228
    %v1469 = vunpack.c.l.b16 %v229
    %v1470 = vunpack.c.h.b16 %v229
    %v1471 = vunpack.c.l.b16 %v230
    %v1472 = vunpack.c.h.b16 %v230
    %v1473 = vunpack.c.l.b16 %v231
    %v1474 = vunpack.c.h.b16 %v231
    %v1475 = vunpack.c.l.b16 %v232
    %v1476 = vunpack.c.h.b16 %v232
    %v1477 = vunpack.c.l.b16 %v233
    %v1478 = vunpack.c.h.b16 %v233
    %v1479 = vunpack.c.l.b16 %v234
    %v1480 = vunpack.c.h.b16 %v234
    %v1481 = vunpack.c.l.b16 %v235
    %v1482 = vunpack.c.h.b16 %v235
    %v1483 = vunpack.c.l.b16 %v236
    %v1484 = vunpack.c.h.b16 %v236
    %v1485 = vunpack.c.l.b16 %v237
    %v1486 = vunpack.c.h.b16 %v237
    %v1487 = vunpack.c.l.b16 %v238
    %v1488 = vunpack.c.h.b16 %v238
    %v1489 = vunpack.c.l.b16 %v239
    %v1490 = vunpack.c.h.b16 %v239
    %v1491 = vunpack.c.l.b16 %v240
    %v1492 = vunpack.c.h.b16 %v240
    %v1493 = vunpack.c.l.b16 %v241
    %v1494 = vunpack.c.h.b16 %v241
    %v1495 = vunpack.c.l.b16 %v242
    %v1496 = vunpack.c.h.b16 %v242
    %v1497 = vunpack.c.l.b16 %v243
    %v1498 = vunpack.c.h.b16 %v243
    %v1499 = vunpack.c.l.b16 %v244
    %v1500 = vunpack.c.h.b16 %v244
    %v1501 = vunpack.c.l.b16 %v245
    %v1502 = vunpack.c.h.b16 %v245
    %v1503 = vunpack.c.l.b16 %v246
    %v1504 = vunpack.c.h.b16 %v246
    %v1505 = vunpack.c.l.b16 %v247
    %v1506 = vunpack.c.h.b16 %v247
    %v1507 = vunpack.c.l.b16 %v248
    %v1508 = vunpack.c.h.b16 %v248
    %v1509 = vunpack.c.l.b16 %v249
    %v1510 = vunpack.c.h.b16 %v249
    %v1511 = vunpack.c.l.b16 %v250
    %v1512 = vunpack.c.h.b16 %v250
    %v1513 = vunpack.c.l.b16 %v251
    %v1514 = vunpack.c.h.b16 %v251
    %v1515 = vunpack.c.l.b16 %v252
    %v1516 = vunpack.c.h.b16 %v252
    %v1517 = vunpack.c.l.b16 %v253
    %v1518 = vunpack.c.h.b16 %v253
    %v1519 = vunpack.c.l.b16 %v254
    %v1520 = vunpack.c.h.b16 %v254
    %v1521 = vunpack.c.l.b16 %v255
    %v1522 = vunpack.c.h.b16 %v255
    %v1523 = vunpack.c.l.b16 %v256
    %v1524 = vunpack.c.h.b16 %v256
    %v1525 = vunpack.c.l.b16 %v257
    %v1526 = vunpack.c.h.b16 %v257
    %v1527 = vunpack.c.l.b16 %v258
    %v1528 = vunpack.c.h.b16 %v258
    %v1529 = vunpack.c.l.b16 %v259
    %v1530 = vunpack.c.h.b16 %v259
    %v1531 = vunpack.c.l.b16 %v260
    %v1532 = vunpack.c.h.b16 %v260
    %v1533 = vunpack.c.l.b16 %v261
    %v1534 = vunpack.c.h.b16 %v261
    %v1535 = vunpack.c.l.b16 %v262
    %v1536 = vunpack.c.h.b16 %v262
    %v1537 = vunpack.c.l.b16 %v263
    %v1538 = vunpack.c.h.b16 %v263
    %v1539 = vunpack.c.l.b16 %v264
    %v1540 = vunpack.c.h.b16 %v264
    %v1541 = vunpack.c.l.b16 %v265
    %v1542 = vunpack.c.h.b16 %v265
    %v1543 = vunpack.c.l.b16 %v266
    %v1544 = vunpack.c.h.b16 %v266
    %v1545 = vunpack.c.l.b16 %v267
    %v1546 = vunpack.c.h.b16 %v267
    %v1547 = vunpack.c.l.b16 %v268
    %v1548 = vunpack.c.h.b16 %v268
    %v1549 = vunpack.c.l.b16 %v269
    %v1550 = vunpack.c.h.b16 %v269
    %v1551 = vunpack.c.l.b16 %v270
    %v1552 = vunpack.c.h.b16 %v270
    %v1553 = vunpack.c.l.b16 %v271
    %v1554 = vunpack.c.h.b16 %v271
    %v1555 = vunpack.c.l.b16 %v272
    %v1556 = vunpack.c.h.b16 %v272
    %v1557 = vunpack.c.l.b16 %v273
    %v1558 = vunpack.c.h.b16 %v273
    %v1559 = vunpack.c.l.b16 %v274
    %v1560 = vunpack.c.h.b16 %v274
    %v1561 = vunpack.c.l.b16 %v275
    %v1562 = vunpack.c.h.b16 %v275
    %v1563 = vunpack.c.l.b16 %v276
    %v1564 = vunpack.c.h.b16 %v276
    %v1565 = vunpack.c.l.b16 %v277
    %v1566 = vunpack.c.h.b16 %v277
    %v1567 = vunpack.c.l.b16 %v278
    %v1568 = vunpack.c.h.b16 %v278
    %v1569 = vunpack.c.l.b16 %v279
    %v1570 = vunpack.c.h.b16 %v279
    %v1571 = vunpack.c.l.b16 %v280
    %v1572 = vunpack.c.h.b16 %v280
    %v1573 = vunpack.c.l.b16 %v281
    %v1574 = vunpack.c.h.b16 %v281
    %v1575 = vunpack.c.l.b16 %v282
    %v1576 = vunpack.c.h.b16 %v282
    %v1577 = vunpack.c.l.b16 %v283
    %v1578 = vunpack.c.h.b16 %v283
    %v1579 = vunpack.c.l.b16 %v284
    %v1580 = vunpack.c.h.b16 %v284
    %v1581 = vunpack.c.l.b16 %v285
    %v1582 = vunpack.c.h.b16 %v285
    %v1583 = vunpack.c.l.b16 %v286
    %v1584 = vunpack.c.h.b16 %v286
    %v1585 = vunpack.c.l.b16 %v287
    %v1586 = vunpack.c.h.b16 %v287
    %v1587 = vunpack.c.l.b16 %v288
    %v1588 = vunpack.c.h.b16 %v288
    %v1589 = vunpack.c.l.b16 %v289
    %v1590 = vunpack.c.h.b16 %v289
    %v1591 = vunpack.c.l.b16 %v290
    %v1592 = vunpack.c.h.b16 %v290
    %v1593 = vunpack.c.l.b16 %v291
    %v1594 = vunpack.c.h.b16 %v291
    %v1595 = vunpack.c.l.b16 %v292
    %v1596 = vunpack.c.h.b16 %v292
    %v1597 = vunpack.c.l.b16 %v293
    %v1598 = vunpack.c.h.b16 %v293
    %v1599 = vunpack.c.l.b16 %v294
    %v1600 = vunpack.c.h.b16 %v294
    %v1601 = vunpack.c.l.b16 %v295
    %v1602 = vunpack.c.h.b16 %v295
    %v1603 = vunpack.c.l.b16 %v296
    %v1604 = vunpack.c.h.b16 %v296
    %v1605 = vunpack.c.l.b16 %v297
    %v1606 = vunpack.c.h.b16 %v297
    %v1607 = vunpack.c.l.b16 %v298
    %v1608 = vunpack.c.h.b16 %v298
    %v1609 = vunpack.c.l.b16 %v299
    %v1610 = vunpack.c.h.b16 %v299
    %v1611 = vunpack.c.l.b16 %v300
    %v1612 = vunpack.c.h.b16 %v300
    %v1613 = vunpack.c.l.b16 %v301
    %v1614 = vunpack.c.h.b16 %v301
    %v1615 = vunpack.c.l.b16 %v302
    %v1616 = vunpack.c.h.b16 %v302
    %v1617 = vunpack.c.l.b16 %v303
    %v1618 = vunpack.c.h.b16 %v303
    %v1619 = vunpack.c.l.b16 %v304
    %v1620 = vunpack.c.h.b16 %v304
    %v1621 = vunpack.c.l.b16 %v305
    %v1622 = vunpack.c.h.b16 %v305
    %v1623 = vunpack.c.l.b16 %v306
    %v1624 = vunpack.c.h.b16 %v306
    %v1625 = vunpack.c.l.b16 %v307
    %v1626 = vunpack.c.h.b16 %v307
    %v1627 = vunpack.c.l.b16 %v308
    %v1628 = vunpack.c.h.b16 %v308
    %v1629 = vunpack.c.l.b16 %v309
    %v1630 = vunpack.c.h.b16 %v309
    %v1631 = vunpack.c.l.b16 %v310
    %v1632 = vunpack.c.h.b16 %v310
    %v1633 = vunpack.c.l.b16 %v311
    %v1634 = vunpack.c.h.b16 %v311
    %v1635 = vunpack.c.l.b16 %v312
    %v1636 = vunpack.c.h.b16 %v312
    %v1637 = vunpack.c.l.b16 %v313
    %v1638 = vunpack.c.h.b16 %v313
    %v1639 = vunpack.c.l.b16 %v314
    %v1640 = vunpack.c.h.b16 %v314
    %v1641 = vunpack.c.l.b16 %v315
    %v1642 = vunpack.c.h.b16 %v315
    %v1643 = vunpack.c.l.b16 %v316
    %v1644 = vunpack.c.h.b16 %v316
    %v1645 = vunpack.c.l.b16 %v317
    %v1646 = vunpack.c.h.b16 %v317
    %v1647 = vunpack.c.l.b16 %v318
    %v1648 = vunpack.c.h.b16 %v318
    %v1649 = vunpack.c.l.b16 %v319
    %v1650 = vunpack.c.h.b16 %v319
    %v1651 = vunpack.c.l.b16 %v320
    %v1652 = vunpack.c.h.b16 %v320
    %v1653 = vunpack.c.l.b16 %v321
    %v1654 = vunpack.c.h.b16 %v321
    %v1655 = vunpack.c.l.b16 %v322
    %v1656 = vunpack.c.h.b16 %v322
    %v1657 = vunpack.c.l.b16 %v323
    %v1658 = vunpack.c.h.b16 %v323
    %v1659 = vunpack.c.l.b16 %v324
    %v1660 = vunpack.c.h.b16 %v324
    %v1661 = vunpack.c.l.b16 %v325
    %v1662 = vunpack.c.h.b16 %v325
    %v1663 = vunpack.c.l.b16 %v326
    %v1664 = vunpack.c.h.b16 %v326
    %v1665 = vunpack.c.l.b16 %v327
    %v1666 = vunpack.c.h.b16 %v327
    %v1667 = vunpack.c.l.b16 %v328
    %v1668 = vunpack.c.h.b16 %v328
    %v1669 = vunpack.c.l.b16 %v329
    %v1670 = vunpack.c.h.b16 %v329
    %v1671 = vunpack.c.l.b16 %v330
    %v1672 = vunpack.c.h.b16 %v330
    %v1673 = vunpack.c.l.b16 %v331
    %v1674 = vunpack.c.h.b16 %v331
    %v1675 = vunpack.c.l.b16 %v332
    %v1676 = vunpack.c.h.b16 %v332
    %v1677 = vunpack.c.l.b16 %v333
    %v1678 = vunpack.c.h.b16 %v333
    %v1679 = vunpack.c.l.b16 %v334
    %v1680 = vunpack.c.h.b16 %v334
    %v1681 = vunpack.c.l.b16 %v335
    %v1682 = vunpack.c.h.b16 %v335
    %v1683 = vunpack.c.l.b16 %v336
    %v1684 = vunpack.c.h.b16 %v336
    %v1685 = vunpack.c.l.b16 %v337
    %v1686 = vunpack.c.h.b16 %v337
    %v1687 = vunpack.c.l.b16 %v338
    %v1688 = vunpack.c.h.b16 %v338
    %v1689 = vunpack.c.l.b16 %v339
    %v1690 = vunpack.c.h.b16 %v339
    %v1691 = vunpack.c.l.b16 %v340
    %v1692 = vunpack.c.h.b16 %v340
    %v1693 = vunpack.c.l.b16 %v341
    %v1694 = vunpack.c.h.b16 %v341
    %v1695 = vunpack.c.l.b16 %v342
    %v1696 = vunpack.c.h.b16 %v342
    %v1697 = vunpack.c.l.b16 %v343
    %v1698 = vunpack.c.h.b16 %v343
    %v1699 = vunpack.c.l.b16 %v344
    %v1700 = vunpack.c.h.b16 %v344
    %v1701 = vunpack.c.l.b16 %v345
    %v1702 = vunpack.c.h.b16 %v345
    %v1703 = vunpack.c.l.b16 %v346
    %v1704 = vunpack.c.h.b16 %v346
    %v1705 = vunpack.c.l.b16 %v347
    %v1706 = vunpack.c.h.b16 %v347
    %v1707 = vunpack.c.l.b16 %v348
    %v1708 = vunpack.c.h.b16 %v348
    %v1709 = vunpack.c.l.b16 %v349
    %v1710 = vunpack.c.h.b16 %v349
    %v1711 = vunpack.c.l.b16 %v350
    %v1712 = vunpack.c.h.b16 %v350
    %v1713 = vunpack.c.l.b16 %v351
    %v1714 = vunpack.c.h.b16 %v351
    %v1715 = vunpack.c.l.b16 %v352
    %v1716 = vunpack.c.h.b16 %v352
    %v1717 = vunpack.c.l.b16 %v353
    %v1718 = vunpack.c.h.b16 %v353
    %v1719 = vunpack.c.l.b16 %v354
    %v1720 = vunpack.c.h.b16 %v354
    %v1721 = vunpack.c.l.b16 %v355
    %v1722 = vunpack.c.h.b16 %v355
    %v1723 = vunpack.c.l.b16 %v356
    %v1724 = vunpack.c.h.b16 %v356
    %v1725 = vunpack.c.l.b16 %v357
    %v1726 = vunpack.c.h.b16 %v357
    %v1727 = vunpack.c.l.b16 %v358
    %v1728 = vunpack.c.h.b16 %v358
    %v1729 = vunpack.c.l.b16 %v359
    %v1730 = vunpack.c.h.b16 %v359
    %v1731 = vunpack.c.l.b16 %v360
    %v1732 = vunpack.c.h.b16 %v360
    %v1733 = vunpack.c.l.b16 %v361
    %v1734 = vunpack.c.h.b16 %v361
    %v1735 = vunpack.c.l.b16 %v362
    %v1736 = vunpack.c.h.b16 %v362
    %v1737 = vunpack.c.l.b16 %v363
    %v1738 = vunpack.c.h.b16 %v363
    %v1739 = vunpack.c.l.b16 %v364
    %v1740 = vunpack.c.h.b16 %v364
    %v1741 = vunpack.c.l.b16 %v365
    %v1742 = vunpack.c.h.b16 %v365
    %v1743 = vunpack.c.l.b16 %v366
    %v1744 = vunpack.c.h.b16 %v366
    %v1745 = vunpack.c.l.b16 %v367
    %v1746 = vunpack.c.h.b16 %v367
    %v1747 = vunpack.c.l.b16 %v368
    %v1748 = vunpack.c.h.b16 %v368
    %v1749 = vunpack.c.l.b16 %v369
    %v1750 = vunpack.c.h.b16 %v369
    %v1751 = vunpack.c.l.b16 %v370
    %v1752 = vunpack.c.h.b16 %v370
    %v1753 = vunpack.c.l.b16 %v371
    %v1754 = vunpack.c.h.b16 %v371
    %v1755 = vunpack.c.l.b16 %v372
    %v1756 = vunpack.c.h.b16 %v372
    %v1757 = vunpack.c.l.b16 %v373
    %v1758 = vunpack.c.h.b16 %v373
    %v1759 = vunpack.c.l.b16 %v374
    %v1760 = vunpack.c.h.b16 %v374
    %v1761 = vunpack.c.l.b16 %v375
    %v1762 = vunpack.c.h.b16 %v375
    %v1763 = vunpack.c.l.b16 %v376
    %v1764 = vunpack.c.h.b16 %v376
    %v1765 = vunpack.c.l.b16 %v377
    %v1766 = vunpack.c.h.b16 %v377
    %v1767 = vunpack.c.l.b16 %v378
    %v1768 = vunpack.c.h.b16 %v378
    %v1769 = vunpack.c.l.b16 %v379
    %v1770 = vunpack.c.h.b16 %v379
    %v1771 = vunpack.c.l.b16 %v380
    %v1772 = vunpack.c.h.b16 %v380
    %v1773 = vunpack.c.l.b16 %v381
    %v1774 = vunpack.c.h.b16 %v381
    %v1775 = vunpack.c.l.b16 %v382
    %v1776 = vunpack.c.h.b16 %v382
    %v1777 = vunpack.c.l.b16 %v383
    %v1778 = vunpack.c.h.b16 %v383
    %v1779 = vunpack.c.l.b16 %v384
    %v1780 = vunpack.c.h.b16 %v384
    %v1781 = vunpack.c.l.b16 %v385
    %v1782 = vunpack.c.h.b16 %v385
    %v1783 = vunpack.c.l.b16 %v386
    %v1784 = vunpack.c.h.b16 %v386
    %v1785 = vunpack.c.l.b16 %v387
    %v1786 = vunpack.c.h.b16 %v387
    %v1787 = vunpack.c.l.b16 %v388
    %v1788 = vunpack.c.h.b16 %v388
    %v1789 = vunpack.c.l.b16 %v389
    %v1790 = vunpack.c.h.b16 %v389
    %v1791 = vunpack.c.l.b16 %v390
    %v1792 = vunpack.c.h.b16 %v390
    %v1793 = vunpack.c.l.b16 %v391
    %v1794 = vunpack.c.h.b16 %v391
    %v1795 = vunpack.c.l.b16 %v392
    %v1796 = vunpack.c.h.b16 %v392
    %v1797 = vunpack.c.l.b16 %v393
    %v1798 = vunpack.c.h.b16 %v393
    %v1799 = vunpack.c.l.b16 %v394
    %v1800 = vunpack.c.h.b16 %v394
    %v1801 = vunpack.c.l.b16 %v395
    %v1802 = vunpack.c.h.b16 %v395
    %v1803 = vunpack.c.l.b16 %v396
    %v1804 = vunpack.c.h.b16 %v396
    %v1805 = vunpack.c.l.b16 %v397
    %v1806 = vunpack.c.h.b16 %v397
    %v1807 = vunpack.c.l.b16 %v398
    %v1808 = vunpack.c.h.b16 %v398
    %v1809 = vunpack.c.l.b16 %v399
    %v1810 = vunpack.c.h.b16 %v399
    %v1811 = vunpack.c.l.b16 %v400
    %v1812 = vunpack.c.h.b16 %v400
    %v1813 = vunpack.c.l.b16 %v401
    %v1814 = vunpack.c.h.b16 %v401
    %v1815 = vunpack.c.l.b16 %v402
    %v1816 = vunpack.c.h.b16 %v402
    %v1817 = vunpack.c.l.b16 %v403
    %v1818 = vunpack.c.h.b16 %v403
    %v1819 = vunpack.c.l.b16 %v404
    %v1820 = vunpack.c.h.b16 %v404
    %v1821 = vunpack.c.l.b16 %v405
    %v1822 = vunpack.c.h.b16 %v405
    %v1823 = vunpack.c.l.b16 %v406
    %v1824 = vunpack.c.h.b16 %v406
    %v1825 = vunpack.c.l.b16 %v407
    %v1826 = vunpack.c.h.b16 %v407
    %v1827 = vunpack.c.l.b16 %v408
    %v1828 = vunpack.c.h.b16 %v408
    %v1829 = vunpack.c.l.b16 %v409
    %v1830 = vunpack.c.h.b16 %v409
    %v1831 = vunpack.c.l.b16 %v410
    %v1832 = vunpack.c.h.b16 %v410
    %v1833 = vunpack.c.l.b16 %v411
    %v1834 = vunpack.c.h.b16 %v411
    %v1835 = vunpack.c.l.b16 %v412
    %v1836 = vunpack.c.h.b16 %v412
    %v1837 = vunpack.c.l.b16 %v413
    %v1838 = vunpack.c.h.b16 %v413
    %v1839 = vunpack.c.l.b16 %v414
    %v1840 = vunpack.c.h.b16 %v414
    %v1841 = vunpack.c.l.b16 %v415
    %v1842 = vunpack.c.h.b16 %v415
    %v1843 = vunpack.c.l.b16 %v416
    %v1844 = vunpack.c.h.b16 %v416
    %v1845 = vunpack.c.l.b16 %v417
    %v1846 = vunpack.c.h.b16 %v417
    %v1847 = vunpack.c.l.b16 %v418
    %v1848 = vunpack.c.h.b16 %v418
    %v1849 = vunpack.c.l.b16 %v419
    %v1850 = vunpack.c.h.b16 %v419
    %v1851 = vunpack.c.l.b16 %v420
    %v1852 = vunpack.c.h.b16 %v420
    %v1853 = vunpack.c.l.b16 %v421
    %v1854 = vunpack.c.h.b16 %v421
    %v1855 = vunpack.c.l.b16 %v422
    %v1856 = vunpack.c.h.b16 %v422
    %v1857 = vunpack.c.l.b16 %v423
    %v1858 = vunpack.c.h.b16 %v423
    %v1859 = vunpack.c.l.b16 %v424
    %v1860 = vunpack.c.h.b16 %v424
    %v1861 = vunpack.c.l.b16 %v425
    %v1862 = vunpack.c.h.b16 %v425
    %v1863 = vunpack.c.l.b16 %v426
    %v1864 = vunpack.c.h.b16 %v426
    %v1865 = vunpack.c.l.b16 %v427
    %v1866 = vunpack.c.h.b16 %v427
    %v1867 = vunpack.c.l.b16 %v428
    %v1868 = vunpack.c.h.b16 %v428
    %v1869 = vunpack.c.l.b16 %v429
    %v1870 = vunpack.c.h.b16 %v429
    %v1871 = vunpack.c.l.b16 %v430
    %v1872 = vunpack.c.h.b16 %v430
    %v1873 = vunpack.c.l.b16 %v431
    %v1874 = vunpack.c.h.b16 %v431
    %v1875 = vunpack.c.l.b16 %v432
    %v1876 = vunpack.c.h.b16 %v432
    %v1877 = vunpack.c.l.b16 %v433
    %v1878 = vunpack.c.h.b16 %v433
    %v1879 = vunpack.c.l.b16 %v434
    %v1880 = vunpack.c.h.b16 %v434
    %v1881 = vunpack.c.l.b16 %v435
    %v1882 = vunpack.c.h.b16 %v435
    %v1883 = vunpack.c.l.b16 %v436
    %v1884 = vunpack.c.h.b16 %v436
    %v1885 = vunpack.c.l.b16 %v437
    %v1886 = vunpack.c.h.b16 %v437
    %v1887 = vunpack.c.l.b16 %v438
    %v1888 = vunpack.c.h.b16 %v438
    %v1889 = vunpack.c.l.b16 %v439
    %v1890 = vunpack.c.h.b16 %v439
    %v1891 = vunpack.c.l.b16 %v440
    %v1892 = vunpack.c.h.b16 %v440
    %v1893 = vunpack.c.l.b16 %v441
    %v1894 = vunpack.c.h.b16 %v441
    %v1895 = vunpack.c.l.b16 %v442
    %v1896 = vunpack.c.h.b16 %v442
    %v1897 = vunpack.c.l.b16 %v443
    %v1898 = vunpack.c.h.b16 %v443
    %v1899 = vunpack.c.l.b16 %v444
    %v1900 = vunpack.c.h.b16 %v444
    %v1901 = vunpack.c.l.b16 %v445
    %v1902 = vunpack.c.h.b16 %v445
    %v1903 = vunpack.c.l.b16 %v446
    %v1904 = vunpack.c.h.b16 %v446
    %v1905 = vunpack.c.l.b16 %v447
    %v1906 = vunpack.c.h.b16 %v447
    %v1907 = vunpack.c.l.b16 %v448
    %v1908 = vunpack.c.h.b16 %v448
    %v1909 = vunpack.c.l.b16 %v449
    %v1910 = vunpack.c.h.b16 %v449
    %v1911 = vunpack.c.l.b16 %v450
    %v1912 = vunpack.c.h.b16 %v450
    %v1913 = vunpack.c.l.b16 %v451
    %v1914 = vunpack.c.h.b16 %v451
    %v1915 = vunpack.c.l.b16 %v452
    %v1916 = vunpack.c.h.b16 %v452
    %v1917 = vunpack.c.l.b16 %v453
    %v1918 = vunpack.c.h.b16 %v453
    %v1919 = vunpack.c.l.b16 %v454
    %v1920 = vunpack.c.h.b16 %v454
    %v1921 = vunpack.c.l.b16 %v455
    %v1922 = vunpack.c.h.b16 %v455
    %v1923 = vunpack.c.l.b16 %v456
    %v1924 = vunpack.c.h.b16 %v456
    %v1925 = vunpack.c.l.b16 %v457
    %v1926 = vunpack.c.h.b16 %v457
    %v1927 = vunpack.c.l.b16 %v458
    %v1928 = vunpack.c.h.b16 %v458
    %v1929 = vunpack.c.l.b16 %v459
    %v1930 = vunpack.c.h.b16 %v459
    %v1931 = vunpack.c.l.b16 %v460
    %v1932 = vunpack.c.h.b16 %v460
    %v1933 = vunpack.c.l.b16 %v461
    %v1934 = vunpack.c.h.b16 %v461
    %v1935 = vunpack.c.l.b16 %v462
    %v1936 = vunpack.c.h.b16 %v462
    %v1937 = vunpack.c.l.b16 %v463
    %v1938 = vunpack.c.h.b16 %v463
    %v1939 = vunpack.c.l.b16 %v464
    %v1940 = vunpack.c.h.b16 %v464
    %v1941 = vunpack.c.l.b16 %v465
    %v1942 = vunpack.c.h.b16 %v465
    %v1943 = vunpack.c.l.b16 %v466
    %v1944 = vunpack.c.h.b16 %v466
    %v1945 = vunpack.c.l.b16 %v467
    %v1946 = vunpack.c.h.b16 %v467
    %v1947 = vunpack.c.l.b16 %v468
    %v1948 = vunpack.c.h.b16 %v468
    %v1949 = vunpack.c.l.b16 %v469
    %v1950 = vunpack.c.h.b16 %v469
    %v1951 = vunpack.c.l.b16 %v470
    %v1952 = vunpack.c.h.b16 %v470
    %v1953 = vunpack.c.l.b16 %v471
    %v1954 = vunpack.c.h.b16 %v471
    %v1955 = vunpack.c.l.b16 %v472
    %v1956 = vunpack.c.h.b16 %v472
    %v1957 = vunpack.c.l.b16 %v473
    %v1958 = vunpack.c.h.b16 %v473
    %v1959 = vunpack.c.l.b16 %v474
    %v1960 = vunpack.c.h.b16 %v474
    %v1961 = vunpack.c.l.b16 %v475
    %v1962 = vunpack.c.h.b16 %v475
    %v1963 = vunpack.c.l.b16 %v476
    %v1964 = vunpack.c.h.b16 %v476
    %v1965 = vunpack.c.l.b16 %v477
    %v1966 = vunpack.c.h.b16 %v477
    %v1967 = vunpack.c.l.b16 %v478
    %v1968 = vunpack.c.h.b16 %v478
    %v1969 = vunpack.c.l.b16 %v479
    %v1970 = vunpack.c.h.b16 %v479
    %v1971 = vunpack.c.l.b16 %v480
    %v1972 = vunpack.c.h.b16 %v480
    %v1973 = vunpack.c.l.b16 %v481
    %v1974 = vunpack.c.h.b16 %v481
    %v1975 = vunpack.c.l.b16 %v482
    %v1976 = vunpack.c.h.b16 %v482
    %v1977 = vunpack.c.l.b16 %v483
    %v1978 = vunpack.c.h.b16 %v483
    %v1979 = vunpack.c.l.b16 %v484
    %v1980 = vunpack.c.h.b16 %v484
    %v1981 = vunpack.c.l.b16 %v485
    %v1982 = vunpack.c.h.b16 %v485
    %v1983 = vunpack.c.l.b16 %v486
    %v1984 = vunpack.c.h.b16 %v486
    %v1985 = vunpack.c.l.b16 %v487
    %v1986 = vunpack.c.h.b16 %v487
    %v1987 = vunpack.c.l.b16 %v488
    %v1988 = vunpack.c.h.b16 %v488
    %v1989 = vunpack.c.l.b16 %v489
    %v1990 = vunpack.c.h.b16 %v489
    %v1991 = vunpack.c.l.b16 %v490
    %v1992 = vunpack.c.h.b16 %v490
    %v1993 = vunpack.c.l.b16 %v491
    %v1994 = vunpack.c.h.b16 %v491
    %v1995 = vunpack.c.l.b16 %v492
    %v1996 = vunpack.c.h.b16 %v492
    %v1997 = vunpack.c.l.b16 %v493
    %v1998 = vunpack.c.h.b16 %v493
    %v1999 = vunpack.c.l.b16 %v494
    %v2000 = vunpack.c.h.b16 %v494
    %v2001 = vunpack.c.l.b16 %v495
    %v2002 = vunpack.c.h.b16 %v495
    %v2003 = vunpack.c.l.b16 %v496
    %v2004 = vunpack.c.h.b16 %v496
    %v2005 = vunpack.c.l.b16 %v497
    %v2006 = vunpack.c.h.b16 %v497
    %v2007 = vunpack.c.l.b16 %v498
    %v2008 = vunpack.c.h.b16 %v498
    %v2009 = vunpack.c.l.b16 %v499
    %v2010 = vunpack.c.h.b16 %v499
    %v2011 = vunpack.c.l.b16 %v500
    %v2012 = vunpack.c.h.b16 %v500
    %v2013 = vunpack.c.l.b16 %v501
    %v2014 = vunpack.c.h.b16 %v501
    %v2015 = vunpack.c.l.b16 %v502
    %v2016 = vunpack.c.h.b16 %v502
    %v2017 = vunpack.c.l.b16 %v503
    %v2018 = vunpack.c.h.b16 %v503
    %v2019 = vunpack.c.l.b16 %v504
    %v2020 = vunpack.c.h.b16 %v504
    %v2021 = vunpack.c.l.b16 %v505
    %v2022 = vunpack.c.h.b16 %v505
    %v2023 = vunpack.c.l.b16 %v506
    %v2024 = vunpack.c.h.b16 %v506
    %v2025 = vunpack.c.l.b16 %v507
    %v2026 = vunpack.c.h.b16 %v507
    %v2027 = vunpack.c.l.b16 %v508
    %v2028 = vunpack.c.h.b16 %v508
    %v2029 = vunpack.c.l.b16 %v509
    %v2030 = vunpack.c.h.b16 %v509
    %v2031 = vunpack.c.l.b16 %v510
    %v2032 = vunpack.c.h.b16 %v510
    %v2033 = vunpack.c.l.b16 %v511
    %v2034 = vunpack.c.h.b16 %v511
    %v2035 = vunpack.c.l.b16 %v512
    %v2036 = vunpack.c.h.b16 %v512
    %v2037 = vunpack.c.l.b16 %v513
    %v2038 = vunpack.c.h.b16 %v513
    %v2039 = vunpack.c.l.b16 %v514
    %v2040 = vunpack.c.h.b16 %v514
    %v2041 = vunpack.c.l.b16 %v515
    %v2042 = vunpack.c.h.b16 %v515
    %v2043 = vunpack.c.l.b16 %v516
    %v2044 = vunpack.c.h.b16 %v516
    %v2045 = vunpack.c.l.b16 %v517
    %v2046 = vunpack.c.h.b16 %v517
    %v2047 = vunpack.c.l.b16 %v518
    %v2048 = vunpack.c.h.b16 %v518
    %v2049 = vunpack.c.l.b16 %v519
    %v2050 = vunpack.c.h.b16 %v519
    %v2051 = vunpack.c.l.b16 %v520
    %v2052 = vunpack.c.h.b16 %v520
    %v2053 = vunpack.c.l.b16 %v521
    %v2054 = vunpack.c.h.b16 %v521
    %v2055 = vunpack.c.l.b16 %v522
    %v2056 = vunpack.c.h.b16 %v522
    %v2057 = vunpack.c.l.b16 %v523
    %v2058 = vunpack.c.h.b16 %v523
    %v2059 = vunpack.c.l.b16 %v524
    %v2060 = vunpack.c.h.b16 %v524
    %v2061 = vunpack.c.l.b16 %v525
    %v2062 = vunpack.c.h.b16 %v525
    %v2063 = vunpack.c.l.b16 %v526
    %v2064 = vunpack.c.h.b16 %v526
    %v2065 = vunpack.c.l.b16 %v527
    %v2066 = vunpack.c.h.b16 %v527
    %v2067 = vunpack.c.l.b16 %v528
    %v2068 = vunpack.c.h.b16 %v528
    %v2069 = vunpack.c.l.b16 %v529
    %v2070 = vunpack.c.h.b16 %v529
    %v2071 = vunpack.c.l.b16 %v530
    %v2072 = vunpack.c.h.b16 %v530
    %v2073 = vunpack.c.l.b16 %v531
    %v2074 = vunpack.c.h.b16 %v531
    %v2075 = vunpack.c.l.b16 %v532
    %v2076 = vunpack.c.h.b16 %v532
    %v2077 = vunpack.c.l.b16 %v533
    %v2078 = vunpack.c.h.b16 %v533
    %v2079 = vunpack.c.l.b16 %v534
    %v2080 = vunpack.c.h.b16 %v534
    %v2081 = vunpack.c.l.b16 %v535
    %v2082 = vunpack.c.h.b16 %v535
    %v2083 = vunpack.c.l.b16 %v536
    %v2084 = vunpack.c.h.b16 %v536
    %v2085 = vunpack.c.l.b16 %v537
    %v2086 = vunpack.c.h.b16 %v537
    %v2087 = vunpack.c.l.b16 %v538
    %v2088 = vunpack.c.h.b16 %v538
    %v2089 = vunpack.c.l.b16 %v539
    %v2090 = vunpack.c.h.b16 %v539
    %v2091 = vunpack.c.l.b16 %v540
    %v2092 = vunpack.c.h.b16 %v540
    %v2093 = vunpack.c.l.b16 %v541
    %v2094 = vunpack.c.h.b16 %v541
    %v2095 = vunpack.c.l.b16 %v542
    %v2096 = vunpack.c.h.b16 %v542
    %v2097 = vunpack.c.l.b16 %v543
    %v2098 = vunpack.c.h.b16 %v543
    %v2099 = vunpack.c.l.b16 %v544
    %v2100 = vunpack.c.h.b16 %v544
    %v2101 = vunpack.c.l.b16 %v545
    %v2102 = vunpack.c.h.b16 %v545
    %v2103 = vunpack.c.l.b16 %v546
    %v2104 = vunpack.c.h.b16 %v546
    %v2105 = vunpack.c.l.b16 %v547
    %v2106 = vunpack.c.h.b16 %v547
    %v2107 = vunpack.c.l.b16 %v548
    %v2108 = vunpack.c.h.b16 %v548
    %v2109 = vunpack.c.l.b16 %v549
    %v2110 = vunpack.c.h.b16 %v549
    %v2111 = vunpack.c.l.b16 %v550
    %v2112 = vunpack.c.h.b16 %v550
    %v2113 = vunpack.c.l.b16 %v551
    %v2114 = vunpack.c.h.b16 %v551
    %v2115 = vunpack.c.l.b16 %v552
    %v2116 = vunpack.c.h.b16 %v552
    %v2117 = vunpack.c.l.b16 %v553
    %v2118 = vunpack.c.h.b16 %v553
    %v2119 = vunpack.c.l.b16 %v554
    %v2120 = vunpack.c.h.b16 %v554
    %v2121 = vunpack.c.l.b16 %v555
    %v2122 = vunpack.c.h.b16 %v555
    %v2123 = vunpack.c.l.b16 %v556
    %v2124 = vunpack.c.h.b16 %v556
    %v2125 = vunpack.c.l.b16 %v557
    %v2126 = vunpack.c.h.b16 %v557
    %v2127 = vunpack.c.l.b16 %v558
    %v2128 = vunpack.c.h.b16 %v558
    %v2129 = vunpack.c.l.b16 %v559
    %v2130 = vunpack.c.h.b16 %v559
    %v2131 = vunpack.c.l.b16 %v560
    %v2132 = vunpack.c.h.b16 %v560
    %v2133 = vunpack.c.l.b16 %v561
    %v2134 = vunpack.c.h.b16 %v561
    %v2135 = vunpack.c.l.b16 %v562
    %v2136 = vunpack.c.h.b16 %v562
    %v2137 = vunpack.c.l.b16 %v563
    %v2138 = vunpack.c.h.b16 %v563
    %v2139 = vunpack.c.l.b16 %v564
    %v2140 = vunpack.c.h.b16 %v564
    %v2141 = vunpack.c.l.b16 %v565
    %v2142 = vunpack.c.h.b16 %v565
    %v2143 = vunpack.c.l.b16 %v566
    %v2144 = vunpack.c.h.b16 %v566
    %v2145 = vunpack.c.l.b16 %v567
    %v2146 = vunpack.c.h.b16 %v567
    %v2147 = vunpack.c.l.b16 %v568
    %v2148 = vunpack.c.h.b16 %v568
    %v2149 = vunpack.c.l.b16 %v569
    %v2150 = vunpack.c.h.b16 %v569
    %v2151 = vunpack.c.l.b16 %v570
    %v2152 = vunpack.c.h.b16 %v570
    %v2153 = vunpack.c.l.b16 %v571
    %v2154 = vunpack.c.h.b16 %v571
    %v2155 = vunpack.c.l.b16 %v572
    %v2156 = vunpack.c.h.b16 %v572
    %v2157 = vunpack.c.l.b16 %v573
    %v2158 = vunpack.c.h.b16 %v573
    %v2159 = vunpack.c.l.b16 %v574
    %v2160 = vunpack.c.h.b16 %v574
    %v2161 = vunpack.c.l.b16 %v575
    %v2162 = vunpack.c.h.b16 %v575
    %v2163 = vunpack.c.l.b16 %v576
    %v2164 = vunpack.c.h.b16 %v576
    %v2165 = vunpack.c.l.b16 %v577
    %v2166 = vunpack.c.h.b16 %v577
    %v2167 = vunpack.c.l.b16 %v578
    %v2168 = vunpack.c.h.b16 %v578
    %v2169 = vunpack.c.l.b16 %v579
    %v2170 = vunpack.c.h.b16 %v579
    %v2171 = vunpack.c.l.b16 %v580
    %v2172 = vunpack.c.h.b16 %v580
    %v2173 = vunpack.c.l.b16 %v581
    %v2174 = vunpack.c.h.b16 %v581
    %v2175 = vunpack.c.l.b16 %v582
    %v2176 = vunpack.c.h.b16 %v582
    %v2177 = vunpack.c.l.b16 %v583
    %v2178 = vunpack.c.h.b16 %v583
    %v2179 = vunpack.c.l.b16 %v584
    %v2180 = vunpack.c.h.b16 %v584
    %v2181 = vunpack.c.l.b16 %v585
    %v2182 = vunpack.c.h.b16 %v585
    %v2183 = vunpack.c.l.b16 %v586
    %v2184 = vunpack.c.h.b16 %v586
    %v2185 = vunpack.c.l.b16 %v587
    %v2186 = vunpack.c.h.b16 %v587
    %v2187 = vunpack.c.l.b16 %v588
    %v2188 = vunpack.c.h.b16 %v588
    %v2189 = vunpack.c.l.b16 %v589
    %v2190 = vunpack.c.h.b16 %v589
    %v2191 = vunpack.c.l.b16 %v590
    %v2192 = vunpack.c.h.b16 %v590
    %v2193 = vunpack.c.l.b16 %v591
    %v2194 = vunpack.c.h.b16 %v591
    %v2195 = vunpack.c.l.b16 %v592
    %v2196 = vunpack.c.h.b16 %v592
    %v2197 = vunpack.c.l.b16 %v593
    %v2198 = vunpack.c.h.b16 %v593
    %v2199 = vunpack.c.l.b16 %v594
    %v2200 = vunpack.c.h.b16 %v594
    %v2201 = vunpack.c.l.b16 %v595
    %v2202 = vunpack.c.h.b16 %v595
    %v2203 = vunpack.c.l.b16 %v596
    %v2204 = vunpack.c.h.b16 %v596
    %v2205 = vunpack.c.l.b16 %v597
    %v2206 = vunpack.c.h.b16 %v597
    %v2207 = vunpack.c.l.b16 %v598
    %v2208 = vunpack.c.h.b16 %v598
    %v2209 = vunpack.c.l.b16 %v599
    %v2210 = vunpack.c.h.b16 %v599
    %v2211 = vunpack.c.l.b16 %v600
    %v2212 = vunpack.c.h.b16 %v600
    %v2213 = vunpack.c.l.b16 %v601
    %v2214 = vunpack.c.h.b16 %v601
    %v2215 = vunpack.c.l.b16 %v602
    %v2216 = vunpack.c.h.b16 %v602
    %v2217 = vunpack.c.l.b16 %v603
    %v2218 = vunpack.c.h.b16 %v603
    %v2219 = vunpack.c.l.b16 %v604
    %v2220 = vunpack.c.h.b16 %v604
    %v2221 = vunpack.c.l.b16 %v605
    %v2222 = vunpack.c.h.b16 %v605
    %v2223 = vunpack.c.l.b16 %v606
    %v2224 = vunpack.c.h.b16 %v606
    %v2225 = vunpack.c.l.b16 %v607
    %v2226 = vunpack.c.h.b16 %v607
    %v2227 = vunpack.c.l.b16 %v608
    %v2228 = vunpack.c.h.b16 %v608
    %v2229 = vpack.c.b16 %v1221, %v1205
    %v2230 = vpack.c.b16 %v1222, %v1206
    %v2231 = vpack.c.b16 %v1223, %v1207
    %v2232 = vpack.c.b16 %v1224, %v1208
    %v2233 = vpack.c.b16 %v1225, %v1209
    %v2234 = vpack.c.b16 %v1226, %v1210
    %v2235 = vpack.c.b16 %v1227, %v1211
    %v2236 = vpack.c.b16 %v1228, %v1212
    %v2237 = vpack.c.b16 %v1229, %v1213
    %v2238 = vpack.c.b16 %v1230, %v1214
    %v2239 = vpack.c.b16 %v1231, %v1215
    %v2240 = vpack.c.b16 %v1232, %v1216
    %v2241 = vpack.c.b16 %v1233, %v1217
    %v2242 = vpack.c.b16 %v1234, %v1218
    %v2243 = vpack.c.b16 %v1235, %v1219
    %v2244 = vpack.c.b16 %v1236, %v1220
    %v2245 = vpack.c.b16 %v1253, %v1237
    %v2246 = vpack.c.b16 %v1254, %v1238
    %v2247 = vpack.c.b16 %v1255, %v1239
    %v2248 = vpack.c.b16 %v1256, %v1240
    %v2249 = vpack.c.b16 %v1257, %v1241
    %v2250 = vpack.c.b16 %v1258, %v1242
    %v2251 = vpack.c.b16 %v1259, %v1243
    %v2252 = vpack.c.b16 %v1260, %v1244
    %v2253 = vpack.c.b16 %v1261, %v1245
    %v2254 = vpack.c.b16 %v1262, %v1246
    %v2255 = vpack.c.b16 %v1263, %v1247
    %v2256 = vpack.c.b16 %v1264, %v1248
    %v2257 = vpack.c.b16 %v1265, %v1249
    %v2258 = vpack.c.b16 %v1266, %v1250
    %v2259 = vpack.c.b16 %v1267, %v1251
    %v2260 = vpack.c.b16 %v1268, %v1252
    %v2261 = vpack.c.b16 %v1285, %v1269
    %v2262 = vpack.c.b16 %v1286, %v1270
    %v2263 = vpack.c.b16 %v1287, %v1271
    %v2264 = vpack.c.b16 %v1288, %v1272
    %v2265 = vpack.c.b16 %v1289, %v1273
    %v2266 = vpack.c.b16 %v1290, %v1274
    %v2267 = vpack.c.b16 %v1291, %v1275
    %v2268 = vpack.c.b16 %v1292, %v1276
    %v2269 = vpack.c.b16 %v1293, %v1277
    %v2270 = vpack.c.b16 %v1294, %v1278
    %v2271 = vpack.c.b16 %v1295, %v1279
    %v2272 = vpack.c.b16 %v1296, %v1280
    %v2273 = vpack.c.b16 %v1297, %v1281
    %v2274 = vpack.c.b16 %v1298, %v1282
    %v2275 = vpack.c.b16 %v1299, %v1283
    %v2276 = vpack.c.b16 %v1300, %v1284
    %v2277 = vpack.c.b16 %v1317, %v1301
    %v2278 = vpack.c.b16 %v1318, %v1302
    %v2279 = vpack.c.b16 %v1319, %v1303
    %v2280 = vpack.c.b16 %v1320, %v1304
    %v2281 = vpack.c.b16 %v1321, %v1305
    %v2282 = vpack.c.b16 %v1322, %v1306
    %v2283 = vpack.c.b16 %v1323, %v1307
    %v2284 = vpack.c.b16 %v1324, %v1308
    %v2285 = vpack.c.b16 %v1325, %v1309
    %v2286 = vpack.c.b16 %v1326, %v1310
    %v2287 = vpack.c.b16 %v1327, %v1311
    %v2288 = vpack.c.b16 %v1328, %v1312
    %v2289 = vpack.c.b16 %v1329, %v1313
    %v2290 = vpack.c.b16 %v1330, %v1314
    %v2291 = vpack.c.b16 %v1331, %v1315
    %v2292 = vpack.c.b16 %v1332, %v1316
    %v2293 = vpack.c.b16 %v1349, %v1333
    %v2294 = vpack.c.b16 %v1350, %v1334
    %v2295 = vpack.c.b16 %v1351, %v1335
    %v2296 = vpack.c.b16 %v1352, %v1336
    %v2297 = vpack.c.b16 %v1353, %v1337
    %v2298 = vpack.c.b16 %v1354, %v1338
    %v2299 = vpack.c.b16 %v1355, %v1339
    %v2300 = vpack.c.b16 %v1356, %v1340
    %v2301 = vpack.c.b16 %v1357, %v1341
    %v2302 = vpack.c.b16 %v1358, %v1342
    %v2303 = vpack.c.b16 %v1359, %v1343
    %v2304 = vpack.c.b16 %v1360, %v1344
    %v2305 = vpack.c.b16 %v1361, %v1345
    %v2306 = vpack.c.b16 %v1362, %v1346
    %v2307 = vpack.c.b16 %v1363, %v1347
    %v2308 = vpack.c.b16 %v1364, %v1348
    %v2309 = vpack.c.b16 %v1381, %v1365
    %v2310 = vpack.c.b16 %v1382, %v1366
    %v2311 = vpack.c.b16 %v1383, %v1367
    %v2312 = vpack.c.b16 %v1384, %v1368
    %v2313 = vpack.c.b16 %v1385, %v1369
    %v2314 = vpack.c.b16 %v1386, %v1370
    %v2315 = vpack.c.b16 %v1387, %v1371
    %v2316 = vpack.c.b16 %v1388, %v1372
    %v2317 = vpack.c.b16 %v1389, %v1373
    %v2318 = vpack.c.b16 %v1390, %v1374
    %v2319 = vpack.c.b16 %v1391, %v1375
    %v2320 = vpack.c.b16 %v1392, %v1376
    %v2321 = vpack.c.b16 %v1393, %v1377
    %v2322 = vpack.c.b16 %v1394, %v1378
    %v2323 = vpack.c.b16 %v1395, %v1379
    %v2324 = vpack.c.b16 %v1396, %v1380
    %v2325 = vpack.c.b16 %v1413, %v1397
    %v2326 = vpack.c.b16 %v1414, %v1398
    %v2327 = vpack.c.b16 %v1415, %v1399
    %v2328 = vpack.c.b16 %v1416, %v1400
    %v2329 = vpack.c.b16 %v1417, %v1401
    %v2330 = vpack.c.b16 %v1418, %v1402
    %v2331 = vpack.c.b16 %v1419, %v1403
    %v2332 = vpack.c.b16 %v1420, %v1404
    %v2333 = vpack.c.b16 %v1421, %v1405
    %v2334 = vpack.c.b16 %v1422, %v1406
    %v2335 = vpack.c.b16 %v1423, %v1407
    %v2336 = vpack.c.b16 %v1424, %v1408
    %v2337 = vpack.c.b16 %v1425, %v1409
    %v2338 = vpack.c.b16 %v1426, %v1410
    %v2339 = vpack.c.b16 %v1427, %v1411
    %v2340 = vpack.c.b16 %v1428, %v1412
    %v2341 = vpack.c.b16 %v1445, %v1429
    %v2342 = vpack.c.b16 %v1446, %v1430
    %v2343 = vpack.c.b16 %v1447, %v1431
    %v2344 = vpack.c.b16 %v1448, %v1432
    %v2345 = vpack.c.b16 %v1449, %v1433
    %v2346 = vpack.c.b16 %v1450, %v1434
    %v2347 = vpack.c.b16 %v1451, %v1435
    %v2348 = vpack.c.b16 %v1452, %v1436
    %v2349 = vpack.c.b16 %v1453, %v1437
    %v2350 = vpack.c.b16 %v1454, %v1438
    %v2351 = vpack.c.b16 %v1455, %v1439
    %v2352 = vpack.c.b16 %v1456, %v1440
    %v2353 = vpack.c.b16 %v1457, %v1441
    %v2354 = vpack.c.b16 %v1458, %v1442
    %v2355 = vpack.c.b16 %v1459, %v1443
    %v2356 = vpack.c.b16 %v1460, %v1444
    %v2357 = vpack.c.b16 %v1477, %v1461
    %v2358 = vpack.c.b16 %v1478, %v1462
    %v2359 = vpack.c.b16 %v1479, %v1463
    %v2360 = vpack.c.b16 %v1480, %v1464
    %v2361 = vpack.c.b16 %v1481, %v1465
    %v2362 = vpack.c.b16 %v1482, %v1466
    %v2363 = vpack.c.b16 %v1483, %v1467
    %v2364 = vpack.c.b16 %v1484, %v1468
    %v2365 = vpack.c.b16 %v1485, %v1469
    %v2366 = vpack.c.b16 %v1486, %v1470
    %v2367 = vpack.c.b16 %v1487, %v1471
    %v2368 = vpack.c.b16 %v1488, %v1472
    %v2369 = vpack.c.b16 %v1489, %v1473
    %v2370 = vpack.c.b16 %v1490, %v1474
    %v2371 = vpack.c.b16 %v1491, %v1475
    %v2372 = vpack.c.b16 %v1492, %v1476
    %v2373 = vpack.c.b16 %v1509, %v1493
    %v2374 = vpack.c.b16 %v1510, %v1494
    %v2375 = vpack.c.b16 %v1511, %v1495
    %v2376 = vpack.c.b16 %v1512, %v1496
    %v2377 = vpack.c.b16 %v1513, %v1497
    %v2378 = vpack.c.b16 %v1514, %v1498
    %v2379 = vpack.c.b16 %v1515, %v1499
    %v2380 = vpack.c.b16 %v1516, %v1500
    %v2381 = vpack.c.b16 %v1517, %v1501
    %v2382 = vpack.c.b16 %v1518, %v1502
    %v2383 = vpack.c.b16 %v1519, %v1503
    %v2384 = vpack.c.b16 %v1520, %v1504
    %v2385 = vpack.c.b16 %v1521, %v1505
    %v2386 = vpack.c.b16 %v1522, %v1506
    %v2387 = vpack.c.b16 %v1523, %v1507
    %v2388 = vpack.c.b16 %v1524, %v1508
    %v2389 = vpack.c.b16 %v1541, %v1525
    %v2390 = vpack.c.b16 %v1542, %v1526
    %v2391 = vpack.c.b16 %v1543, %v1527
    %v2392 = vpack.c.b16 %v1544, %v1528
    %v2393 = vpack.c.b16 %v1545, %v1529
    %v2394 = vpack.c.b16 %v1546, %v1530
    %v2395 = vpack.c.b16 %v1547, %v1531
    %v2396 = vpack.c.b16 %v1548, %v1532
    %v2397 = vpack.c.b16 %v1549, %v1533
    %v2398 = vpack.c.b16 %v1550, %v1534
    %v2399 = vpack.c.b16 %v1551, %v1535
    %v2400 = vpack.c.b16 %v1552, %v1536
    %v2401 = vpack.c.b16 %v1553, %v1537
    %v2402 = vpack.c.b16 %v1554, %v1538
    %v2403 = vpack.c.b16 %v1555, %v1539
    %v2404 = vpack.c.b16 %v1556, %v1540
    %v2405 = vpack.c.b16 %v1573, %v1557
    %v2406 = vpack.c.b16 %v1574, %v1558
    %v2407 = vpack.c.b16 %v1575, %v1559
    %v2408 = vpack.c.b16 %v1576, %v1560
    %v2409 = vpack.c.b16 %v1577, %v1561
    %v2410 = vpack.c.b16 %v1578, %v1562
    %v2411 = vpack.c.b16 %v1579, %v1563
    %v2412 = vpack.c.b16 %v1580, %v1564
    %v2413 = vpack.c.b16 %v1581, %v1565
    %v2414 = vpack.c.b16 %v1582, %v1566
    %v2415 = vpack.c.b16 %v1583, %v1567
    %v2416 = vpack.c.b16 %v1584, %v1568
    %v2417 = vpack.c.b16 %v1585, %v1569
    %v2418 = vpack.c.b16 %v1586, %v1570
    %v2419 = vpack.c.b16 %v1587, %v1571
    %v2420 = vpack.c.b16 %v1588, %v1572
    %v2421 = vpack.c.b16 %v1605, %v1589
    %v2422 = vpack.c.b16 %v1606, %v1590
    %v2423 = vpack.c.b16 %v1607, %v1591
    %v2424 = vpack.c.b16 %v1608, %v1592
    %v2425 = vpack.c.b16 %v1609, %v1593
    %v2426 = vpack.c.b16 %v1610, %v1594
    %v2427 = vpack.c.b16 %v1611, %v1595
    %v2428 = vpack.c.b16 %v1612, %v1596
    %v2429 = vpack.c.b16 %v1613, %v1597
    %v2430 = vpack.c.b16 %v1614, %v1598
    %v2431 = vpack.c.b16 %v1615, %v1599
    %v2432 = vpack.c.b16 %v1616, %v1600
    %v2433 = vpack.c.b16 %v1617, %v1601
    %v2434 = vpack.c.b16 %v1618, %v1602
    %v2435 = vpack.c.b16 %v1619, %v1603
    %v2436 = vpack.c.b16 %v1620, %v1604
    %v2437 = vpack.c.b16 %v1637, %v1621
    %v2438 = vpack.c.b16 %v1638, %v1622
    %v2439 = vpack.c.b16 %v1639, %v1623
    %v2440 = vpack.c.b16 %v1640, %v1624
    %v2441 = vpack.c.b16 %v1641, %v1625
    %v2442 = vpack.c.b16 %v1642, %v1626
    %v2443 = vpack.c.b16 %v1643, %v1627
    %v2444 = vpack.c.b16 %v1644, %v1628
    %v2445 = vpack.c.b16 %v1645, %v1629
    %v2446 = vpack.c.b16 %v1646, %v1630
    %v2447 = vpack.c.b16 %v1647, %v1631
    %v2448 = vpack.c.b16 %v1648, %v1632
    %v2449 = vpack.c.b16 %v1649, %v1633
    %v2450 = vpack.c.b16 %v1650, %v1634
    %v2451 = vpack.c.b16 %v1651, %v1635
    %v2452 = vpack.c.b16 %v1652, %v1636
    %v2453 = vpack.c.b16 %v1669, %v1653
    %v2454 = vpack.c.b16 %v1670, %v1654
    %v2455 = vpack.c.b16 %v1671, %v1655
    %v2456 = vpack.c.b16 %v1672, %v1656
    %v2457 = vpack.c.b16 %v1673, %v1657
    %v2458 = vpack.c.b16 %v1674, %v1658
    %v2459 = vpack.c.b16 %v1675, %v1659
    %v2460 = vpack.c.b16 %v1676, %v1660
    %v2461 = vpack.c.b16 %v1677, %v1661
    %v2462 = vpack.c.b16 %v1678, %v1662
    %v2463 = vpack.c.b16 %v1679, %v1663
    %v2464 = vpack.c.b16 %v1680, %v1664
    %v2465 = vpack.c.b16 %v1681, %v1665
    %v2466 = vpack.c.b16 %v1682, %v1666
    %v2467 = vpack.c.b16 %v1683, %v1667
    %v2468 = vpack.c.b16 %v1684, %v1668
    %v2469 = vpack.c.b16 %v1701, %v1685
    %v2470 = vpack.c.b16 %v1702, %v1686
    %v2471 = vpack.c.b16 %v1703, %v1687
    %v2472 = vpack.c.b16 %v1704, %v1688
    %v2473 = vpack.c.b16 %v1705, %v1689
    %v2474 = vpack.c.b16 %v1706, %v1690
    %v2475 = vpack.c.b16 %v1707, %v1691
    %v2476 = vpack.c.b16 %v1708, %v1692
    %v2477 = vpack.c.b16 %v1709, %v1693
    %v2478 = vpack.c.b16 %v1710, %v1694
    %v2479 = vpack.c.b16 %v1711, %v1695
    %v2480 = vpack.c.b16 %v1712, %v1696
    %v2481 = vpack.c.b16 %v1713, %v1697
    %v2482 = vpack.c.b16 %v1714, %v1698
    %v2483 = vpack.c.b16 %v1715, %v1699
    %v2484 = vpack.c.b16 %v1716, %v1700
    %v2485 = vpack.c.b16 %v1733, %v1717
    %v2486 = vpack.c.b16 %v1734, %v1718
    %v2487 = vpack.c.b16 %v1735, %v1719
    %v2488 = vpack.c.b16 %v1736, %v1720
    %v2489 = vpack.c.b16 %v1737, %v1721
    %v2490 = vpack.c.b16 %v1738, %v1722
    %v2491 = vpack.c.b16 %v1739, %v1723
    %v2492 = vpack.c.b16 %v1740, %v1724
    %v2493 = vpack.c.b16 %v1741, %v1725
    %v2494 = vpack.c.b16 %v1742, %v1726
    %v2495 = vpack.c.b16 %v1743, %v1727
    %v2496 = vpack.c.b16 %v1744, %v1728
    %v2497 = vpack.c.b16 %v1745, %v1729
    %v2498 = vpack.c.b16 %v1746, %v1730
    %v2499 = vpack.c.b16 %v1747, %v1731
    %v2500 = vpack.c.b16 %v1748, %v1732
    %v2501 = vpack.c.b16 %v1765, %v1749
    %v2502 = vpack.c.b16 %v1766, %v1750
    %v2503 = vpack.c.b16 %v1767, %v1751
    %v2504 = vpack.c.b16 %v1768, %v1752
    %v2505 = vpack.c.b16 %v1769, %v1753
    %v2506 = vpack.c.b16 %v1770, %v1754
    %v2507 = vpack.c.b16 %v1771, %v1755
    %v2508 = vpack.c.b16 %v1772, %v1756
    %v2509 = vpack.c.b16 %v1773, %v1757
    %v2510 = vpack.c.b16 %v1774, %v1758
    %v2511 = vpack.c.b16 %v1775, %v1759
    %v2512 = vpack.c.b16 %v1776, %v1760
    %v2513 = vpack.c.b16 %v1777, %v1761
    %v2514 = vpack.c.b16 %v1778, %v1762
    %v2515 = vpack.c.b16 %v1779, %v1763
    %v2516 = vpack.c.b16 %v1780, %v1764
    %v2517 = vpack.c.b16 %v1797, %v1781
    %v2518 = vpack.c.b16 %v1798, %v1782
    %v2519 = vpack.c.b16 %v1799, %v1783
    %v2520 = vpack.c.b16 %v1800, %v1784
    %v2521 = vpack.c.b16 %v1801, %v1785
    %v2522 = vpack.c.b16 %v1802, %v1786
    %v2523 = vpack.c.b16 %v1803, %v1787
    %v2524 = vpack.c.b16 %v1804, %v1788
    %v2525 = vpack.c.b16 %v1805, %v1789
    %v2526 = vpack.c.b16 %v1806, %v1790
    %v2527 = vpack.c.b16 %v1807, %v1791
    %v2528 = vpack.c.b16 %v1808, %v1792
    %v2529 = vpack.c.b16 %v1809, %v1793
    %v2530 = vpack.c.b16 %v1810, %v1794
    %v2531 = vpack.c.b16 %v1811, %v1795
    %v2532 = vpack.c.b16 %v1812, %v1796
    %v2533 = vpack.c.b16 %v1829, %v1813
    %v2534 = vpack.c.b16 %v1830, %v1814
    %v2535 = vpack.c.b16 %v1831, %v1815
    %v2536 = vpack.c.b16 %v1832, %v1816
    %v2537 = vpack.c.b16 %v1833, %v1817
    %v2538 = vpack.c.b16 %v1834, %v1818
    %v2539 = vpack.c.b16 %v1835, %v1819
    %v2540 = vpack.c.b16 %v1836, %v1820
    %v2541 = vpack.c.b16 %v1837, %v1821
    %v2542 = vpack.c.b16 %v1838, %v1822
    %v2543 = vpack.c.b16 %v1839, %v1823
    %v2544 = vpack.c.b16 %v1840, %v1824
    %v2545 = vpack.c.b16 %v1841, %v1825
    %v2546 = vpack.c.b16 %v1842, %v1826
    %v2547 = vpack.c.b16 %v1843, %v1827
    %v2548 = vpack.c.b16 %v1844, %v1828
    %v2549 = vpack.c.b16 %v1861, %v1845
    %v2550 = vpack.c.b16 %v1862, %v1846
    %v2551 = vpack.c.b16 %v1863, %v1847
    %v2552 = vpack.c.b16 %v1864, %v1848
    %v2553 = vpack.c.b16 %v1865, %v1849
    %v2554 = vpack.c.b16 %v1866, %v1850
    %v2555 = vpack.c.b16 %v1867, %v1851
    %v2556 = vpack.c.b16 %v1868, %v1852
    %v2557 = vpack.c.b16 %v1869, %v1853
    %v2558 = vpack.c.b16 %v1870, %v1854
    %v2559 = vpack.c.b16 %v1871, %v1855
    %v2560 = vpack.c.b16 %v1872, %v1856
    %v2561 = vpack.c.b16 %v1873, %v1857
    %v2562 = vpack.c.b16 %v1874, %v1858
    %v2563 = vpack.c.b16 %v1875, %v1859
    %v2564 = vpack.c.b16 %v1876, %v1860
    %v2565 = vpack.c.b16 %v1893, %v1877
    %v2566 = vpack.c.b16 %v1894, %v1878
    %v2567 = vpack.c.b16 %v1895, %v1879
    %v2568 = vpack.c.b16 %v1896, %v1880
    %v2569 = vpack.c.b16 %v1897, %v1881
    %v2570 = vpack.c.b16 %v1898, %v1882
    %v2571 = vpack.c.b16 %v1899, %v1883
    %v2572 = vpack.c.b16 %v1900, %v1884
    %v2573 = vpack.c.b16 %v1901, %v1885
    %v2574 = vpack.c.b16 %v1902, %v1886
    %v2575 = vpack.c.b16 %v1903, %v1887
    %v2576 = vpack.c.b16 %v1904, %v1888
    %v2577 = vpack.c.b16 %v1905, %v1889
    %v2578 = vpack.c.b16 %v1906, %v1890
    %v2579 = vpack.c.b16 %v1907, %v1891
    %v2580 = vpack.c.b16 %v1908, %v1892
    %v2581 = vpack.c.b16 %v1925, %v1909
    %v2582 = vpack.c.b16 %v1926, %v1910
    %v2583 = vpack.c.b16 %v1927, %v1911
    %v2584 = vpack.c.b16 %v1928, %v1912
    %v2585 = vpack.c.b16 %v1929, %v1913
    %v2586 = vpack.c.b16 %v1930, %v1914
    %v2587 = vpack.c.b16 %v1931, %v1915
    %v2588 = vpack.c.b16 %v1932, %v1916
    %v2589 = vpack.c.b16 %v1933, %v1917
    %v2590 = vpack.c.b16 %v1934, %v1918
    %v2591 = vpack.c.b16 %v1935, %v1919
    %v2592 = vpack.c.b16 %v1936, %v1920
    %v2593 = vpack.c.b16 %v1937, %v1921
    %v2594 = vpack.c.b16 %v1938, %v1922
    %v2595 = vpack.c.b16 %v1939, %v1923
    %v2596 = vpack.c.b16 %v1940, %v1924
    %v2597 = vpack.c.b16 %v1957, %v1941
    %v2598 = vpack.c.b16 %v1958, %v1942
    %v2599 = vpack.c.b16 %v1959, %v1943
    %v2600 = vpack.c.b16 %v1960, %v1944
    %v2601 = vpack.c.b16 %v1961, %v1945
    %v2602 = vpack.c.b16 %v1962, %v1946
    %v2603 = vpack.c.b16 %v1963, %v1947
    %v2604 = vpack.c.b16 %v1964, %v1948
    %v2605 = vpack.c.b16 %v1965, %v1949
    %v2606 = vpack.c.b16 %v1966, %v1950
    %v2607 = vpack.c.b16 %v1967, %v1951
    %v2608 = vpack.c.b16 %v1968, %v1952
    %v2609 = vpack.c.b16 %v1969, %v1953
    %v2610 = vpack.c.b16 %v1970, %v1954
    %v2611 = vpack.c.b16 %v1971, %v1955
    %v2612 = vpack.c.b16 %v1972, %v1956
    %v2613 = vpack.c.b16 %v1989, %v1973
    %v2614 = vpack.c.b16 %v1990, %v1974
    %v2615 = vpack.c.b16 %v1991, %v1975
    %v2616 = vpack.c.b16 %v1992, %v1976
    %v2617 = vpack.c.b16 %v1993, %v1977
    %v2618 = vpack.c.b16 %v1994, %v1978
    %v2619 = vpack.c.b16 %v1995, %v1979
    %v2620 = vpack.c.b16 %v1996, %v1980
    %v2621 = vpack.c.b16 %v1997, %v1981
    %v2622 = vpack.c.b16 %v1998, %v1982
    %v2623 = vpack.c.b16 %v1999, %v1983
    %v2624 = vpack.c.b16 %v2000, %v1984
    %v2625 = vpack.c.b16 %v2001, %v1985
    %v2626 = vpack.c.b16 %v2002, %v1986
    %v2627 = vpack.c.b16 %v2003, %v1987
    %v2628 = vpack.c.b16 %v2004, %v1988
    %v2629 = vpack.c.b16 %v2021, %v2005
    %v2630 = vpack.c.b16 %v2022, %v2006
    %v2631 = vpack.c.b16 %v2023, %v2007
    %v2632 = vpack.c.b16 %v2024, %v2008
    %v2633 = vpack.c.b16 %v2025, %v2009
    %v2634 = vpack.c.b16 %v2026, %v2010
    %v2635 = vpack.c.b16 %v2027, %v2011
    %v2636 = vpack.c.b16 %v2028, %v2012
    %v2637 = vpack.c.b16 %v2029, %v2013
    %v2638 = vpack.c.b16 %v2030, %v2014
    %v2639 = vpack.c.b16 %v2031, %v2015
    %v2640 = vpack.c.b16 %v2032, %v2016
    %v2641 = vpack.c.b16 %v2033, %v2017
    %v2642 = vpack.c.b16 %v2034, %v2018
    %v2643 = vpack.c.b16 %v2035, %v2019
    %v2644 = vpack.c.b16 %v2036, %v2020
    %v2645 = vpack.c.b16 %v2053, %v2037
    %v2646 = vpack.c.b16 %v2054, %v2038
    %v2647 = vpack.c.b16 %v2055, %v2039
    %v2648 = vpack.c.b16 %v2056, %v2040
    %v2649 = vpack.c.b16 %v2057, %v2041
    %v2650 = vpack.c.b16 %v2058, %v2042
    %v2651 = vpack.c.b16 %v2059, %v2043
    %v2652 = vpack.c.b16 %v2060, %v2044
    %v2653 = vpack.c.b16 %v2061, %v2045
    %v2654 = vpack.c.b16 %v2062, %v2046
    %v2655 = vpack.c.b16 %v2063, %v2047
    %v2656 = vpack.c.b16 %v2064, %v2048
    %v2657 = vpack.c.b16 %v2065, %v2049
    %v2658 = vpack.c.b16 %v2066, %v2050
    %v2659 = vpack.c.b16 %v2067, %v2051
    %v2660 = vpack.c.b16 %v2068, %v2052
    %v2661 = vpack.c.b16 %v2085, %v2069
    %v2662 = vpack.c.b16 %v2086, %v2070
    %v2663 = vpack.c.b16 %v2087, %v2071
    %v2664 = vpack.c.b16 %v2088, %v2072
    %v2665 = vpack.c.b16 %v2089, %v2073
    %v2666 = vpack.c.b16 %v2090, %v2074
    %v2667 = vpack.c.b16 %v2091, %v2075
    %v2668 = vpack.c.b16 %v2092, %v2076
    %v2669 = vpack.c.b16 %v2093, %v2077
    %v2670 = vpack.c.b16 %v2094, %v2078
    %v2671 = vpack.c.b16 %v2095, %v2079
    %v2672 = vpack.c.b16 %v2096, %v2080
    %v2673 = vpack.c.b16 %v2097, %v2081
    %v2674 = vpack.c.b16 %v2098, %v2082
    %v2675 = vpack.c.b16 %v2099, %v2083
    %v2676 = vpack.c.b16 %v2100, %v2084
    %v2677 = vpack.c.b16 %v2117, %v2101
    %v2678 = vpack.c.b16 %v2118, %v2102
    %v2679 = vpack.c.b16 %v2119, %v2103
    %v2680 = vpack.c.b16 %v2120, %v2104
    %v2681 = vpack.c.b16 %v2121, %v2105
    %v2682 = vpack.c.b16 %v2122, %v2106
    %v2683 = vpack.c.b16 %v2123, %v2107
    %v2684 = vpack.c.b16 %v2124, %v2108
    %v2685 = vpack.c.b16 %v2125, %v2109
    %v2686 = vpack.c.b16 %v2126, %v2110
    %v2687 = vpack.c.b16 %v2127, %v2111
    %v2688 = vpack.c.b16 %v2128, %v2112
    %v2689 = vpack.c.b16 %v2129, %v2113
    %v2690 = vpack.c.b16 %v2130, %v2114
    %v2691 = vpack.c.b16 %v2131, %v2115
    %v2692 = vpack.c.b16 %v2132, %v2116
    %v2693 = vpack.c.b16 %v2149, %v2133
    %v2694 = vpack.c.b16 %v2150, %v2134
    %v2695 = vpack.c.b16 %v2151, %v2135
    %v2696 = vpack.c.b16 %v2152, %v2136
    %v2697 = vpack.c.b16 %v2153, %v2137
    %v2698 = vpack.c.b16 %v2154, %v2138
    %v2699 = vpack.c.b16 %v2155, %v2139
    %v2700 = vpack.c.b16 %v2156, %v2140
    %v2701 = vpack.c.b16 %v2157, %v2141
    %v2702 = vpack.c.b16 %v2158, %v2142
    %v2703 = vpack.c.b16 %v2159, %v2143
    %v2704 = vpack.c.b16 %v2160, %v2144
    %v2705 = vpack.c.b16 %v2161, %v2145
    %v2706 = vpack.c.b16 %v2162, %v2146
    %v2707 = vpack.c.b16 %v2163, %v2147
    %v2708 = vpack.c.b16 %v2164, %v2148
    %v2709 = vpack.c.b16 %v2181, %v2165
    %v2710 = vpack.c.b16 %v2182, %v2166
    %v2711 = vpack.c.b16 %v2183, %v2167
    %v2712 = vpack.c.b16 %v2184, %v2168
    %v2713 = vpack.c.b16 %v2185, %v2169
    %v2714 = vpack.c.b16 %v2186, %v2170
    %v2715 = vpack.c.b16 %v2187, %v2171
    %v2716 = vpack.c.b16 %v2188, %v2172
    %v2717 = vpack.c.b16 %v2189, %v2173
    %v2718 = vpack.c.b16 %v2190, %v2174
    %v2719 = vpack.c.b16 %v2191, %v2175
    %v2720 = vpack.c.b16 %v2192, %v2176
    %v2721 = vpack.c.b16 %v2193, %v2177
    %v2722 = vpack.c.b16 %v2194, %v2178
    %v2723 = vpack.c.b16 %v2195, %v2179
    %v2724 = vpack.c.b16 %v2196, %v2180
    %v2725 = vpack.c.b16 %v2213, %v2197
    %v2726 = vpack.c.b16 %v2214, %v2198
    %v2727 = vpack.c.b16 %v2215, %v2199
    %v2728 = vpack.c.b16 %v2216, %v2200
    %v2729 = vpack.c.b16 %v2217, %v2201
    %v2730 = vpack.c.b16 %v2218, %v2202
    %v2731 = vpack.c.b16 %v2219, %v2203
    %v2732 = vpack.c.b16 %v2220, %v2204
    %v2733 = vpack.c.b16 %v2221, %v2205
    %v2734 = vpack.c.b16 %v2222, %v2206
    %v2735 = vpack.c.b16 %v2223, %v2207
    %v2736 = vpack.c.b16 %v2224, %v2208
    %v2737 = vpack.c.b16 %v2225, %v2209
    %v2738 = vpack.c.b16 %v2226, %v2210
    %v2739 = vpack.c.b16 %v2227, %v2211
    %v2740 = vpack.c.b16 %v2228, %v2212
    %3253 = vmatprep.subr.bf16.mxu0 %v2230
    %3254 = vmatpush1.bf16.msra.mxu0 %v2229
    %3255 = vmatprep.subr.bf16.mxu0 %v2246
    %3256 = vmatpush1.bf16.msra.mxu0 %v2245
    %3257 = vmatprep.subr.bf16.mxu0 %v2262
    %3258 = vmatpush1.bf16.msra.mxu0 %v2261
    %3259 = vmatprep.subr.bf16.mxu0 %v2278
    %3260 = vmatpush1.bf16.msra.mxu0 %v2277
    %3261 = vmatprep.subr.bf16.mxu0 %v2294
    %3262 = vmatpush1.bf16.msra.mxu0 %v2293
    %3263 = vmatprep.subr.bf16.mxu0 %v2310
    %3264 = vmatpush1.bf16.msra.mxu0 %v2309
    %3265 = vmatprep.subr.bf16.mxu0 %v2326
    %3266 = vmatpush1.bf16.msra.mxu0 %v2325
    %3267 = vmatprep.subr.bf16.mxu0 %v2342
    %3268 = vmatpush1.bf16.msra.mxu0 %v2341
    %3269 = vmatprep.subr.bf16.mxu0 %v2358
    %3270 = vmatpush1.bf16.msra.mxu0 %v2357
    %3271 = vmatprep.subr.bf16.mxu0 %v2374
    %3272 = vmatpush1.bf16.msra.mxu0 %v2373
    %3273 = vmatprep.subr.bf16.mxu0 %v2390
    %3274 = vmatpush1.bf16.msra.mxu0 %v2389
    %3275 = vmatprep.subr.bf16.mxu0 %v2406
    %3276 = vmatpush1.bf16.msra.mxu0 %v2405
    %3277 = vmatprep.subr.bf16.mxu0 %v2422
    %3278 = vmatpush1.bf16.msra.mxu0 %v2421
    %3279 = vmatprep.subr.bf16.mxu0 %v2438
    %3280 = vmatpush1.bf16.msra.mxu0 %v2437
    %3281 = vmatprep.subr.bf16.mxu0 %v2454
    %3282 = vmatpush1.bf16.msra.mxu0 %v2453
    %3283 = vmatprep.subr.bf16.mxu0 %v2470
    %3284 = vmatpush1.bf16.msra.mxu0 %v2469
    %3285 = vmatprep.mubr.bf16.mxu0 %v94
    %3286 = vmatmul.mubr.bf16.gmra.mrb[0].mxu0 %v93
    %v3287 = vpop.f32.mrb[0].mxu0
    %v3288 = vadd.f32 %v616, %v3287
    %v3289 = vpop.f32.mrb[0].mxu0
    %v3290 = vadd.f32 %v620, %v3289
    %v3291 = vpop.f32.mrb[0].mxu0
    %v3292 = vadd.f32 %v616, %v3291
    %v3293 = vpop.f32.mrb[0].mxu0
    %v3294 = vadd.f32 %v620, %v3293
    %3295 = vdwg.mxu0
    %3296 = vmatprep.subr.bf16.mxu0 %v2486
    %3297 = vmatpush1.bf16.msra.mxu0 %v2485
    %3298 = vmatprep.subr.bf16.mxu0 %v2502
    %3299 = vmatpush1.bf16.msra.mxu0 %v2501
    %3300 = vmatprep.subr.bf16.mxu0 %v2518
    %3301 = vmatpush1.bf16.msra.mxu0 %v2517
    %3302 = vmatprep.subr.bf16.mxu0 %v2534
    %3303 = vmatpush1.bf16.msra.mxu0 %v2533
    %3304 = vmatprep.subr.bf16.mxu0 %v2550
    %3305 = vmatpush1.bf16.msra.mxu0 %v2549
    %3306 = vmatprep.subr.bf16.mxu0 %v2566
    %3307 = vmatpush1.bf16.msra.mxu0 %v2565
    %3308 = vmatprep.subr.bf16.mxu0 %v2582
    %3309 = vmatpush1.bf16.msra.mxu0 %v2581
    %3310 = vmatprep.subr.bf16.mxu0 %v2598
    %3311 = vmatpush1.bf16.msra.mxu0 %v2597
    %3312 = vmatprep.subr.bf16.mxu0 %v2614
    %3313 = vmatpush1.bf16.msra.mxu0 %v2613
    %3314 = vmatprep.subr.bf16.mxu0 %v2630
    %3315 = vmatpush1.bf16.msra.mxu0 %v2629
    %3316 = vmatprep.subr.bf16.mxu0 %v2646
    %3317 = vmatpush1.bf16.msra.mxu0 %v2645
    %3318 = vmatprep.subr.bf16.mxu0 %v2662
    %3319 = vmatpush1.bf16.msra.mxu0 %v2661
    %3320 = vmatprep.subr.bf16.mxu0 %v2678
    %3321 = vmatpush1.bf16.msra.mxu0 %v2677
    %3322 = vmatprep.subr.bf16.mxu0 %v2694
    %3323 = vmatpush1.bf16.msra.mxu0 %v2693
    %3324 = vmatprep.subr.bf16.mxu0 %v2710
    %3325 = vmatpush1.bf16.msra.mxu0 %v2709
    %3326 = vmatprep.subr.bf16.mxu0 %v2726
    %3327 = vmatpush1.bf16.msra.mxu0 %v2725
    %3328 = vmatprep.mubr.bf16.mxu0 %v96
    %3329 = vmatmul.mubr.bf16.gmra.mrb[0].mxu0 %v95
    %v3330 = vpop.f32.mrb[0].mxu0
    %v3331 = vadd.f32 %v3288, %v3330
    %v3332 = vpop.f32.mrb[0].mxu0
    %v3333 = vadd.f32 %v3290, %v3332
    %v3334 = vpop.f32.mrb[0].mxu0
    %v3335 = vadd.f32 %v3292, %v3334
    %v3336 = vpop.f32.mrb[0].mxu0
    %v3337 = vadd.f32 %v3294, %v3336
    %3338 = vdwg.mxu0
    %3339 = vmatprep.subr.bf16.mxu0 %v2232
    %3340 = vmatpush1.bf16.msra.mxu0 %v2231
    %3341 = vmatprep.subr.bf16.mxu0 %v2248
    %3342 = vmatpush1.bf16.msra.mxu0 %v2247
    %3343 = vmatprep.subr.bf16.mxu0 %v2264
    %3344 = vmatpush1.bf16.msra.mxu0 %v2263
    %3345 = vmatprep.subr.bf16.mxu0 %v2280
    %3346 = vmatpush1.bf16.msra.mxu0 %v2279
    %3347 = vmatprep.subr.bf16.mxu0 %v2296
    %3348 = vmatpush1.bf16.msra.mxu0 %v2295
    %3349 = vmatprep.subr.bf16.mxu0 %v2312
    %3350 = vmatpush1.bf16.msra.mxu0 %v2311
    %3351 = vmatprep.subr.bf16.mxu0 %v2328
    %3352 = vmatpush1.bf16.msra.mxu0 %v2327
    %3353 = vmatprep.subr.bf16.mxu0 %v2344
    %3354 = vmatpush1.bf16.msra.mxu0 %v2343
    %3355 = vmatprep.subr.bf16.mxu0 %v2360
    %3356 = vmatpush1.bf16.msra.mxu0 %v2359
    %3357 = vmatprep.subr.bf16.mxu0 %v2376
    %3358 = vmatpush1.bf16.msra.mxu0 %v2375
    %3359 = vmatprep.subr.bf16.mxu0 %v2392
    %3360 = vmatpush1.bf16.msra.mxu0 %v2391
    %3361 = vmatprep.subr.bf16.mxu0 %v2408
    %3362 = vmatpush1.bf16.msra.mxu0 %v2407
    %3363 = vmatprep.subr.bf16.mxu0 %v2424
    %3364 = vmatpush1.bf16.msra.mxu0 %v2423
    %3365 = vmatprep.subr.bf16.mxu0 %v2440
    %3366 = vmatpush1.bf16.msra.mxu0 %v2439
    %3367 = vmatprep.subr.bf16.mxu0 %v2456
    %3368 = vmatpush1.bf16.msra.mxu0 %v2455
    %3369 = vmatprep.subr.bf16.mxu0 %v2472
    %3370 = vmatpush1.bf16.msra.mxu0 %v2471
    %3371 = vmatprep.mubr.bf16.mxu0 %v94
    %3372 = vmatmul.mubr.bf16.gmra.mrb[0].mxu0 %v93
    %v3373 = vpop.f32.mrb[0].mxu0
    %v3374 = vadd.f32 %v624, %v3373
    %v3375 = vpop.f32.mrb[0].mxu0
    %v3376 = vadd.f32 %v628, %v3375
    %v3377 = vpop.f32.mrb[0].mxu0
    %v3378 = vadd.f32 %v624, %v3377
    %v3379 = vpop.f32.mrb[0].mxu0
    %v3380 = vadd.f32 %v628, %v3379
    %3381 = vdwg.mxu0
    %3382 = vmatprep.subr.bf16.mxu0 %v2488
    %3383 = vmatpush1.bf16.msra.mxu0 %v2487
    %3384 = vmatprep.subr.bf16.mxu0 %v2504
    %3385 = vmatpush1.bf16.msra.mxu0 %v2503
    %3386 = vmatprep.subr.bf16.mxu0 %v2520
    %3387 = vmatpush1.bf16.msra.mxu0 %v2519
    %3388 = vmatprep.subr.bf16.mxu0 %v2536
    %3389 = vmatpush1.bf16.msra.mxu0 %v2535
    %3390 = vmatprep.subr.bf16.mxu0 %v2552
    %3391 = vmatpush1.bf16.msra.mxu0 %v2551
    %3392 = vmatprep.subr.bf16.mxu0 %v2568
    %3393 = vmatpush1.bf16.msra.mxu0 %v2567
    %3394 = vmatprep.subr.bf16.mxu0 %v2584
    %3395 = vmatpush1.bf16.msra.mxu0 %v2583
    %3396 = vmatprep.subr.bf16.mxu0 %v2600
    %3397 = vmatpush1.bf16.msra.mxu0 %v2599
    %3398 = vmatprep.subr.bf16.mxu0 %v2616
    %3399 = vmatpush1.bf16.msra.mxu0 %v2615
    %3400 = vmatprep.subr.bf16.mxu0 %v2632
    %3401 = vmatpush1.bf16.msra.mxu0 %v2631
    %3402 = vmatprep.subr.bf16.mxu0 %v2648
    %3403 = vmatpush1.bf16.msra.mxu0 %v2647
    %3404 = vmatprep.subr.bf16.mxu0 %v2664
    %3405 = vmatpush1.bf16.msra.mxu0 %v2663
    %3406 = vmatprep.subr.bf16.mxu0 %v2680
    %3407 = vmatpush1.bf16.msra.mxu0 %v2679
    %3408 = vmatprep.subr.bf16.mxu0 %v2696
    %3409 = vmatpush1.bf16.msra.mxu0 %v2695
    %3410 = vmatprep.subr.bf16.mxu0 %v2712
    %3411 = vmatpush1.bf16.msra.mxu0 %v2711
    %3412 = vmatprep.subr.bf16.mxu0 %v2728
    %3413 = vmatpush1.bf16.msra.mxu0 %v2727
    %3414 = vmatprep.mubr.bf16.mxu0 %v96
    %3415 = vmatmul.mubr.bf16.gmra.mrb[0].mxu0 %v95
    %v3416 = vpop.f32.mrb[0].mxu0
    %v3417 = vadd.f32 %v3374, %v3416
    %v3418 = vpop.f32.mrb[0].mxu0
    %v3419 = vadd.f32 %v3376, %v3418
    %v3420 = vpop.f32.mrb[0].mxu0
    %v3421 = vadd.f32 %v3378, %v3420
    %v3422 = vpop.f32.mrb[0].mxu0
    %v3423 = vadd.f32 %v3380, %v3422
    %3424 = vdwg.mxu0
    %3425 = vmatprep.subr.bf16.mxu0 %v2234
    %3426 = vmatpush1.bf16.msra.mxu0 %v2233
    %3427 = vmatprep.subr.bf16.mxu0 %v2250
    %3428 = vmatpush1.bf16.msra.mxu0 %v2249
    %3429 = vmatprep.subr.bf16.mxu0 %v2266
    %3430 = vmatpush1.bf16.msra.mxu0 %v2265
    %3431 = vmatprep.subr.bf16.mxu0 %v2282
    %3432 = vmatpush1.bf16.msra.mxu0 %v2281
    %3433 = vmatprep.subr.bf16.mxu0 %v2298
    %3434 = vmatpush1.bf16.msra.mxu0 %v2297
    %3435 = vmatprep.subr.bf16.mxu0 %v2314
    %3436 = vmatpush1.bf16.msra.mxu0 %v2313
    %3437 = vmatprep.subr.bf16.mxu0 %v2330
    %3438 = vmatpush1.bf16.msra.mxu0 %v2329
    %3439 = vmatprep.subr.bf16.mxu0 %v2346
    %3440 = vmatpush1.bf16.msra.mxu0 %v2345
    %3441 = vmatprep.subr.bf16.mxu0 %v2362
    %3442 = vmatpush1.bf16.msra.mxu0 %v2361
    %3443 = vmatprep.subr.bf16.mxu0 %v2378
    %3444 = vmatpush1.bf16.msra.mxu0 %v2377
    %3445 = vmatprep.subr.bf16.mxu0 %v2394
    %3446 = vmatpush1.bf16.msra.mxu0 %v2393
    %3447 = vmatprep.subr.bf16.mxu0 %v2410
    %3448 = vmatpush1.bf16.msra.mxu0 %v2409
    %3449 = vmatprep.subr.bf16.mxu0 %v2426
    %3450 = vmatpush1.bf16.msra.mxu0 %v2425
    %3451 = vmatprep.subr.bf16.mxu0 %v2442
    %3452 = vmatpush1.bf16.msra.mxu0 %v2441
    %3453 = vmatprep.subr.bf16.mxu0 %v2458
    %3454 = vmatpush1.bf16.msra.mxu0 %v2457
    %3455 = vmatprep.subr.bf16.mxu0 %v2474
    %3456 = vmatpush1.bf16.msra.mxu0 %v2473
    %3457 = vmatprep.mubr.bf16.mxu0 %v94
    %3458 = vmatmul.mubr.bf16.gmra.mrb[0].mxu0 %v93
    %v3459 = vpop.f32.mrb[0].mxu0
    %v3460 = vadd.f32 %v632, %v3459
    %v3461 = vpop.f32.mrb[0].mxu0
    %v3462 = vadd.f32 %v636, %v3461
    %v3463 = vpop.f32.mrb[0].mxu0
    %v3464 = vadd.f32 %v632, %v3463
    %v3465 = vpop.f32.mrb[0].mxu0
    %v3466 = vadd.f32 %v636, %v3465
    %3467 = vdwg.mxu0
    %3468 = vmatprep.subr.bf16.mxu0 %v2490
    %3469 = vmatpush1.bf16.msra.mxu0 %v2489
    %3470 = vmatprep.subr.bf16.mxu0 %v2506
    %3471 = vmatpush1.bf16.msra.mxu0 %v2505
    %3472 = vmatprep.subr.bf16.mxu0 %v2522
    %3473 = vmatpush1.bf16.msra.mxu0 %v2521
    %3474 = vmatprep.subr.bf16.mxu0 %v2538
    %3475 = vmatpush1.bf16.msra.mxu0 %v2537
    %3476 = vmatprep.subr.bf16.mxu0 %v2554
    %3477 = vmatpush1.bf16.msra.mxu0 %v2553
    %3478 = vmatprep.subr.bf16.mxu0 %v2570
    %3479 = vmatpush1.bf16.msra.mxu0 %v2569
    %3480 = vmatprep.subr.bf16.mxu0 %v2586
    %3481 = vmatpush1.bf16.msra.mxu0 %v2585
    %3482 = vmatprep.subr.bf16.mxu0 %v2602
    %3483 = vmatpush1.bf16.msra.mxu0 %v2601
    %3484 = vmatprep.subr.bf16.mxu0 %v2618
    %3485 = vmatpush1.bf16.msra.mxu0 %v2617
    %3486 = vmatprep.subr.bf16.mxu0 %v2634
    %3487 = vmatpush1.bf16.msra.mxu0 %v2633
    %3488 = vmatprep.subr.bf16.mxu0 %v2650
    %3489 = vmatpush1.bf16.msra.mxu0 %v2649
    %3490 = vmatprep.subr.bf16.mxu0 %v2666
    %3491 = vmatpush1.bf16.msra.mxu0 %v2665
    %3492 = vmatprep.subr.bf16.mxu0 %v2682
    %3493 = vmatpush1.bf16.msra.mxu0 %v2681
    %3494 = vmatprep.subr.bf16.mxu0 %v2698
    %3495 = vmatpush1.bf16.msra.mxu0 %v2697
    %3496 = vmatprep.subr.bf16.mxu0 %v2714
    %3497 = vmatpush1.bf16.msra.mxu0 %v2713
    %3498 = vmatprep.subr.bf16.mxu0 %v2730
    %3499 = vmatpush1.bf16.msra.mxu0 %v2729
    %3500 = vmatprep.mubr.bf16.mxu0 %v96
    %3501 = vmatmul.mubr.bf16.gmra.mrb[0].mxu0 %v95
    %v3502 = vpop.f32.mrb[0].mxu0
    %v3503 = vadd.f32 %v3460, %v3502
    %v3504 = vpop.f32.mrb[0].mxu0
    %v3505 = vadd.f32 %v3462, %v3504
    %v3506 = vpop.f32.mrb[0].mxu0
    %v3507 = vadd.f32 %v3464, %v3506
    %v3508 = vpop.f32.mrb[0].mxu0
    %v3509 = vadd.f32 %v3466, %v3508
    %3510 = vdwg.mxu0
    %3511 = vmatprep.subr.bf16.mxu0 %v2236
    %3512 = vmatpush1.bf16.msra.mxu0 %v2235
    %3513 = vmatprep.subr.bf16.mxu0 %v2252
    %3514 = vmatpush1.bf16.msra.mxu0 %v2251
    %3515 = vmatprep.subr.bf16.mxu0 %v2268
    %3516 = vmatpush1.bf16.msra.mxu0 %v2267
    %3517 = vmatprep.subr.bf16.mxu0 %v2284
    %3518 = vmatpush1.bf16.msra.mxu0 %v2283
    %3519 = vmatprep.subr.bf16.mxu0 %v2300
    %3520 = vmatpush1.bf16.msra.mxu0 %v2299
    %3521 = vmatprep.subr.bf16.mxu0 %v2316
    %3522 = vmatpush1.bf16.msra.mxu0 %v2315
    %3523 = vmatprep.subr.bf16.mxu0 %v2332
    %3524 = vmatpush1.bf16.msra.mxu0 %v2331
    %3525 = vmatprep.subr.bf16.mxu0 %v2348
    %3526 = vmatpush1.bf16.msra.mxu0 %v2347
    %3527 = vmatprep.subr.bf16.mxu0 %v2364
    %3528 = vmatpush1.bf16.msra.mxu0 %v2363
    %3529 = vmatprep.subr.bf16.mxu0 %v2380
    %3530 = vmatpush1.bf16.msra.mxu0 %v2379
    %3531 = vmatprep.subr.bf16.mxu0 %v2396
    %3532 = vmatpush1.bf16.msra.mxu0 %v2395
    %3533 = vmatprep.subr.bf16.mxu0 %v2412
    %3534 = vmatpush1.bf16.msra.mxu0 %v2411
    %3535 = vmatprep.subr.bf16.mxu0 %v2428
    %3536 = vmatpush1.bf16.msra.mxu0 %v2427
    %3537 = vmatprep.subr.bf16.mxu0 %v2444
    %3538 = vmatpush1.bf16.msra.mxu0 %v2443
    %3539 = vmatprep.subr.bf16.mxu0 %v2460
    %3540 = vmatpush1.bf16.msra.mxu0 %v2459
    %3541 = vmatprep.subr.bf16.mxu0 %v2476
    %3542 = vmatpush1.bf16.msra.mxu0 %v2475
    %3543 = vmatprep.mubr.bf16.mxu0 %v94
    %3544 = vmatmul.mubr.bf16.gmra.mrb[0].mxu0 %v93
    %v3545 = vpop.f32.mrb[0].mxu0
    %v3546 = vadd.f32 %v640, %v3545
    %v3547 = vpop.f32.mrb[0].mxu0
    %v3548 = vadd.f32 %v644, %v3547
    %v3549 = vpop.f32.mrb[0].mxu0
    %v3550 = vadd.f32 %v640, %v3549
    %v3551 = vpop.f32.mrb[0].mxu0
    %v3552 = vadd.f32 %v644, %v3551
    %3553 = vdwg.mxu0
    %3554 = vmatprep.subr.bf16.mxu0 %v2492
    %3555 = vmatpush1.bf16.msra.mxu0 %v2491
    %3556 = vmatprep.subr.bf16.mxu0 %v2508
    %3557 = vmatpush1.bf16.msra.mxu0 %v2507
    %3558 = vmatprep.subr.bf16.mxu0 %v2524
    %3559 = vmatpush1.bf16.msra.mxu0 %v2523
    %3560 = vmatprep.subr.bf16.mxu0 %v2540
    %3561 = vmatpush1.bf16.msra.mxu0 %v2539
    %3562 = vmatprep.subr.bf16.mxu0 %v2556
    %3563 = vmatpush1.bf16.msra.mxu0 %v2555
    %3564 = vmatprep.subr.bf16.mxu0 %v2572
    %3565 = vmatpush1.bf16.msra.mxu0 %v2571
    %3566 = vmatprep.subr.bf16.mxu0 %v2588
    %3567 = vmatpush1.bf16.msra.mxu0 %v2587
    %3568 = vmatprep.subr.bf16.mxu0 %v2604
    %3569 = vmatpush1.bf16.msra.mxu0 %v2603
    %3570 = vmatprep.subr.bf16.mxu0 %v2620
    %3571 = vmatpush1.bf16.msra.mxu0 %v2619
    %3572 = vmatprep.subr.bf16.mxu0 %v2636
    %3573 = vmatpush1.bf16.msra.mxu0 %v2635
    %3574 = vmatprep.subr.bf16.mxu0 %v2652
    %3575 = vmatpush1.bf16.msra.mxu0 %v2651
    %3576 = vmatprep.subr.bf16.mxu0 %v2668
    %3577 = vmatpush1.bf16.msra.mxu0 %v2667
    %3578 = vmatprep.subr.bf16.mxu0 %v2684
    %3579 = vmatpush1.bf16.msra.mxu0 %v2683
    %3580 = vmatprep.subr.bf16.mxu0 %v2700
    %3581 = vmatpush1.bf16.msra.mxu0 %v2699
    %3582 = vmatprep.subr.bf16.mxu0 %v2716
    %3583 = vmatpush1.bf16.msra.mxu0 %v2715
    %3584 = vmatprep.subr.bf16.mxu0 %v2732
    %3585 = vmatpush1.bf16.msra.mxu0 %v2731
    %3586 = vmatprep.mubr.bf16.mxu0 %v96
    %3587 = vmatmul.mubr.bf16.gmra.mrb[0].mxu0 %v95
    %v3588 = vpop.f32.mrb[0].mxu0
    %v3589 = vadd.f32 %v3546, %v3588
    %v3590 = vpop.f32.mrb[0].mxu0
    %v3591 = vadd.f32 %v3548, %v3590
    %v3592 = vpop.f32.mrb[0].mxu0
    %v3593 = vadd.f32 %v3550, %v3592
    %v3594 = vpop.f32.mrb[0].mxu0
    %v3595 = vadd.f32 %v3552, %v3594
    %3596 = vdwg.mxu0
    %3597 = vmatprep.subr.bf16.mxu0 %v2238
    %3598 = vmatpush1.bf16.msra.mxu0 %v2237
    %3599 = vmatprep.subr.bf16.mxu0 %v2254
    %3600 = vmatpush1.bf16.msra.mxu0 %v2253
    %3601 = vmatprep.subr.bf16.mxu0 %v2270
    %3602 = vmatpush1.bf16.msra.mxu0 %v2269
    %3603 = vmatprep.subr.bf16.mxu0 %v2286
    %3604 = vmatpush1.bf16.msra.mxu0 %v2285
    %3605 = vmatprep.subr.bf16.mxu0 %v2302
    %3606 = vmatpush1.bf16.msra.mxu0 %v2301
    %3607 = vmatprep.subr.bf16.mxu0 %v2318
    %3608 = vmatpush1.bf16.msra.mxu0 %v2317
    %3609 = vmatprep.subr.bf16.mxu0 %v2334
    %3610 = vmatpush1.bf16.msra.mxu0 %v2333
    %3611 = vmatprep.subr.bf16.mxu0 %v2350
    %3612 = vmatpush1.bf16.msra.mxu0 %v2349
    %3613 = vmatprep.subr.bf16.mxu0 %v2366
    %3614 = vmatpush1.bf16.msra.mxu0 %v2365
    %3615 = vmatprep.subr.bf16.mxu0 %v2382
    %3616 = vmatpush1.bf16.msra.mxu0 %v2381
    %3617 = vmatprep.subr.bf16.mxu0 %v2398
    %3618 = vmatpush1.bf16.msra.mxu0 %v2397
    %3619 = vmatprep.subr.bf16.mxu0 %v2414
    %3620 = vmatpush1.bf16.msra.mxu0 %v2413
    %3621 = vmatprep.subr.bf16.mxu0 %v2430
    %3622 = vmatpush1.bf16.msra.mxu0 %v2429
    %3623 = vmatprep.subr.bf16.mxu0 %v2446
    %3624 = vmatpush1.bf16.msra.mxu0 %v2445
    %3625 = vmatprep.subr.bf16.mxu0 %v2462
    %3626 = vmatpush1.bf16.msra.mxu0 %v2461
    %3627 = vmatprep.subr.bf16.mxu0 %v2478
    %3628 = vmatpush1.bf16.msra.mxu0 %v2477
    %3629 = vmatprep.mubr.bf16.mxu0 %v94
    %3630 = vmatmul.mubr.bf16.gmra.mrb[0].mxu0 %v93
    %v3631 = vpop.f32.mrb[0].mxu0
    %v3632 = vadd.f32 %v648, %v3631
    %v3633 = vpop.f32.mrb[0].mxu0
    %v3634 = vadd.f32 %v652, %v3633
    %v3635 = vpop.f32.mrb[0].mxu0
    %v3636 = vadd.f32 %v648, %v3635
    %v3637 = vpop.f32.mrb[0].mxu0
    %v3638 = vadd.f32 %v652, %v3637
    %3639 = vdwg.mxu0
    %3640 = vmatprep.subr.bf16.mxu0 %v2494
    %3641 = vmatpush1.bf16.msra.mxu0 %v2493
    %3642 = vmatprep.subr.bf16.mxu0 %v2510
    %3643 = vmatpush1.bf16.msra.mxu0 %v2509
    %3644 = vmatprep.subr.bf16.mxu0 %v2526
    %3645 = vmatpush1.bf16.msra.mxu0 %v2525
    %3646 = vmatprep.subr.bf16.mxu0 %v2542
    %3647 = vmatpush1.bf16.msra.mxu0 %v2541
    %3648 = vmatprep.subr.bf16.mxu0 %v2558
    %3649 = vmatpush1.bf16.msra.mxu0 %v2557
    %3650 = vmatprep.subr.bf16.mxu0 %v2574
    %3651 = vmatpush1.bf16.msra.mxu0 %v2573
    %3652 = vmatprep.subr.bf16.mxu0 %v2590
    %3653 = vmatpush1.bf16.msra.mxu0 %v2589
    %3654 = vmatprep.subr.bf16.mxu0 %v2606
    %3655 = vmatpush1.bf16.msra.mxu0 %v2605
    %3656 = vmatprep.subr.bf16.mxu0 %v2622
    %3657 = vmatpush1.bf16.msra.mxu0 %v2621
    %3658 = vmatprep.subr.bf16.mxu0 %v2638
    %3659 = vmatpush1.bf16.msra.mxu0 %v2637
    %3660 = vmatprep.subr.bf16.mxu0 %v2654
    %3661 = vmatpush1.bf16.msra.mxu0 %v2653
    %3662 = vmatprep.subr.bf16.mxu0 %v2670
    %3663 = vmatpush1.bf16.msra.mxu0 %v2669
    %3664 = vmatprep.subr.bf16.mxu0 %v2686
    %3665 = vmatpush1.bf16.msra.mxu0 %v2685
    %3666 = vmatprep.subr.bf16.mxu0 %v2702
    %3667 = vmatpush1.bf16.msra.mxu0 %v2701
    %3668 = vmatprep.subr.bf16.mxu0 %v2718
    %3669 = vmatpush1.bf16.msra.mxu0 %v2717
    %3670 = vmatprep.subr.bf16.mxu0 %v2734
    %3671 = vmatpush1.bf16.msra.mxu0 %v2733
    %3672 = vmatprep.mubr.bf16.mxu0 %v96
    %3673 = vmatmul.mubr.bf16.gmra.mrb[0].mxu0 %v95
    %v3674 = vpop.f32.mrb[0].mxu0
    %v3675 = vadd.f32 %v3632, %v3674
    %v3676 = vpop.f32.mrb[0].mxu0
    %v3677 = vadd.f32 %v3634, %v3676
    %v3678 = vpop.f32.mrb[0].mxu0
    %v3679 = vadd.f32 %v3636, %v3678
    %v3680 = vpop.f32.mrb[0].mxu0
    %v3681 = vadd.f32 %v3638, %v3680
    %3682 = vdwg.mxu0
    %3683 = vmatprep.subr.bf16.mxu0 %v2240
    %3684 = vmatpush1.bf16.msra.mxu0 %v2239
    %3685 = vmatprep.subr.bf16.mxu0 %v2256
    %3686 = vmatpush1.bf16.msra.mxu0 %v2255
    %3687 = vmatprep.subr.bf16.mxu0 %v2272
    %3688 = vmatpush1.bf16.msra.mxu0 %v2271
    %3689 = vmatprep.subr.bf16.mxu0 %v2288
    %3690 = vmatpush1.bf16.msra.mxu0 %v2287
    %3691 = vmatprep.subr.bf16.mxu0 %v2304
    %3692 = vmatpush1.bf16.msra.mxu0 %v2303
    %3693 = vmatprep.subr.bf16.mxu0 %v2320
    %3694 = vmatpush1.bf16.msra.mxu0 %v2319
    %3695 = vmatprep.subr.bf16.mxu0 %v2336
    %3696 = vmatpush1.bf16.msra.mxu0 %v2335
    %3697 = vmatprep.subr.bf16.mxu0 %v2352
    %3698 = vmatpush1.bf16.msra.mxu0 %v2351
    %3699 = vmatprep.subr.bf16.mxu0 %v2368
    %3700 = vmatpush1.bf16.msra.mxu0 %v2367
    %3701 = vmatprep.subr.bf16.mxu0 %v2384
    %3702 = vmatpush1.bf16.msra.mxu0 %v2383
    %3703 = vmatprep.subr.bf16.mxu0 %v2400
    %3704 = vmatpush1.bf16.msra.mxu0 %v2399
    %3705 = vmatprep.subr.bf16.mxu0 %v2416
    %3706 = vmatpush1.bf16.msra.mxu0 %v2415
    %3707 = vmatprep.subr.bf16.mxu0 %v2432
    %3708 = vmatpush1.bf16.msra.mxu0 %v2431
    %3709 = vmatprep.subr.bf16.mxu0 %v2448
    %3710 = vmatpush1.bf16.msra.mxu0 %v2447
    %3711 = vmatprep.subr.bf16.mxu0 %v2464
    %3712 = vmatpush1.bf16.msra.mxu0 %v2463
    %3713 = vmatprep.subr.bf16.mxu0 %v2480
    %3714 = vmatpush1.bf16.msra.mxu0 %v2479
    %3715 = vmatprep.mubr.bf16.mxu0 %v94
    %3716 = vmatmul.mubr.bf16.gmra.mrb[0].mxu0 %v93
    %v3717 = vpop.f32.mrb[0].mxu0
    %v3718 = vadd.f32 %v656, %v3717
    %v3719 = vpop.f32.mrb[0].mxu0
    %v3720 = vadd.f32 %v660, %v3719
    %v3721 = vpop.f32.mrb[0].mxu0
    %v3722 = vadd.f32 %v656, %v3721
    %v3723 = vpop.f32.mrb[0].mxu0
    %v3724 = vadd.f32 %v660, %v3723
    %3725 = vdwg.mxu0
    %3726 = vmatprep.subr.bf16.mxu0 %v2496
    %3727 = vmatpush1.bf16.msra.mxu0 %v2495
    %3728 = vmatprep.subr.bf16.mxu0 %v2512
    %3729 = vmatpush1.bf16.msra.mxu0 %v2511
    %3730 = vmatprep.subr.bf16.mxu0 %v2528
    %3731 = vmatpush1.bf16.msra.mxu0 %v2527
    %3732 = vmatprep.subr.bf16.mxu0 %v2544
    %3733 = vmatpush1.bf16.msra.mxu0 %v2543
    %3734 = vmatprep.subr.bf16.mxu0 %v2560
    %3735 = vmatpush1.bf16.msra.mxu0 %v2559
    %3736 = vmatprep.subr.bf16.mxu0 %v2576
    %3737 = vmatpush1.bf16.msra.mxu0 %v2575
    %3738 = vmatprep.subr.bf16.mxu0 %v2592
    %3739 = vmatpush1.bf16.msra.mxu0 %v2591
    %3740 = vmatprep.subr.bf16.mxu0 %v2608
    %3741 = vmatpush1.bf16.msra.mxu0 %v2607
    %3742 = vmatprep.subr.bf16.mxu0 %v2624
    %3743 = vmatpush1.bf16.msra.mxu0 %v2623
    %3744 = vmatprep.subr.bf16.mxu0 %v2640
    %3745 = vmatpush1.bf16.msra.mxu0 %v2639
    %3746 = vmatprep.subr.bf16.mxu0 %v2656
    %3747 = vmatpush1.bf16.msra.mxu0 %v2655
    %3748 = vmatprep.subr.bf16.mxu0 %v2672
    %3749 = vmatpush1.bf16.msra.mxu0 %v2671
    %3750 = vmatprep.subr.bf16.mxu0 %v2688
    %3751 = vmatpush1.bf16.msra.mxu0 %v2687
    %3752 = vmatprep.subr.bf16.mxu0 %v2704
    %3753 = vmatpush1.bf16.msra.mxu0 %v2703
    %3754 = vmatprep.subr.bf16.mxu0 %v2720
    %3755 = vmatpush1.bf16.msra.mxu0 %v2719
    %3756 = vmatprep.subr.bf16.mxu0 %v2736
    %3757 = vmatpush1.bf16.msra.mxu0 %v2735
    %3758 = vmatprep.mubr.bf16.mxu0 %v96
    %3759 = vmatmul.mubr.bf16.gmra.mrb[0].mxu0 %v95
    %v3760 = vpop.f32.mrb[0].mxu0
    %v3761 = vadd.f32 %v3718, %v3760
    %v3762 = vpop.f32.mrb[0].mxu0
    %v3763 = vadd.f32 %v3720, %v3762
    %v3764 = vpop.f32.mrb[0].mxu0
    %v3765 = vadd.f32 %v3722, %v3764
    %v3766 = vpop.f32.mrb[0].mxu0
    %v3767 = vadd.f32 %v3724, %v3766
    %3768 = vdwg.mxu0
    %3769 = vmatprep.subr.bf16.mxu0 %v2242
    %3770 = vmatpush1.bf16.msra.mxu0 %v2241
    %3771 = vmatprep.subr.bf16.mxu0 %v2258
    %3772 = vmatpush1.bf16.msra.mxu0 %v2257
    %3773 = vmatprep.subr.bf16.mxu0 %v2274
    %3774 = vmatpush1.bf16.msra.mxu0 %v2273
    %3775 = vmatprep.subr.bf16.mxu0 %v2290
    %3776 = vmatpush1.bf16.msra.mxu0 %v2289
    %3777 = vmatprep.subr.bf16.mxu0 %v2306
    %3778 = vmatpush1.bf16.msra.mxu0 %v2305
    %3779 = vmatprep.subr.bf16.mxu0 %v2322
    %3780 = vmatpush1.bf16.msra.mxu0 %v2321
    %3781 = vmatprep.subr.bf16.mxu0 %v2338
    %3782 = vmatpush1.bf16.msra.mxu0 %v2337
    %3783 = vmatprep.subr.bf16.mxu0 %v2354
    %3784 = vmatpush1.bf16.msra.mxu0 %v2353
    %3785 = vmatprep.subr.bf16.mxu0 %v2370
    %3786 = vmatpush1.bf16.msra.mxu0 %v2369
    %3787 = vmatprep.subr.bf16.mxu0 %v2386
    %3788 = vmatpush1.bf16.msra.mxu0 %v2385
    %3789 = vmatprep.subr.bf16.mxu0 %v2402
    %3790 = vmatpush1.bf16.msra.mxu0 %v2401
    %3791 = vmatprep.subr.bf16.mxu0 %v2418
    %3792 = vmatpush1.bf16.msra.mxu0 %v2417
    %3793 = vmatprep.subr.bf16.mxu0 %v2434
    %3794 = vmatpush1.bf16.msra.mxu0 %v2433
    %3795 = vmatprep.subr.bf16.mxu0 %v2450
    %3796 = vmatpush1.bf16.msra.mxu0 %v2449
    %3797 = vmatprep.subr.bf16.mxu0 %v2466
    %3798 = vmatpush1.bf16.msra.mxu0 %v2465
    %3799 = vmatprep.subr.bf16.mxu0 %v2482
    %3800 = vmatpush1.bf16.msra.mxu0 %v2481
    %3801 = vmatprep.mubr.bf16.mxu0 %v94
    %3802 = vmatmul.mubr.bf16.gmra.mrb[0].mxu0 %v93
    %v3803 = vpop.f32.mrb[0].mxu0
    %v3804 = vadd.f32 %v664, %v3803
    %v3805 = vpop.f32.mrb[0].mxu0
    %v3806 = vadd.f32 %v668, %v3805
    %v3807 = vpop.f32.mrb[0].mxu0
    %v3808 = vadd.f32 %v664, %v3807
    %v3809 = vpop.f32.mrb[0].mxu0
    %v3810 = vadd.f32 %v668, %v3809
    %3811 = vdwg.mxu0
    %3812 = vmatprep.subr.bf16.mxu0 %v2498
    %3813 = vmatpush1.bf16.msra.mxu0 %v2497
    %3814 = vmatprep.subr.bf16.mxu0 %v2514
    %3815 = vmatpush1.bf16.msra.mxu0 %v2513
    %3816 = vmatprep.subr.bf16.mxu0 %v2530
    %3817 = vmatpush1.bf16.msra.mxu0 %v2529
    %3818 = vmatprep.subr.bf16.mxu0 %v2546
    %3819 = vmatpush1.bf16.msra.mxu0 %v2545
    %3820 = vmatprep.subr.bf16.mxu0 %v2562
    %3821 = vmatpush1.bf16.msra.mxu0 %v2561
    %3822 = vmatprep.subr.bf16.mxu0 %v2578
    %3823 = vmatpush1.bf16.msra.mxu0 %v2577
    %3824 = vmatprep.subr.bf16.mxu0 %v2594
    %3825 = vmatpush1.bf16.msra.mxu0 %v2593
    %3826 = vmatprep.subr.bf16.mxu0 %v2610
    %3827 = vmatpush1.bf16.msra.mxu0 %v2609
    %3828 = vmatprep.subr.bf16.mxu0 %v2626
    %3829 = vmatpush1.bf16.msra.mxu0 %v2625
    %3830 = vmatprep.subr.bf16.mxu0 %v2642
    %3831 = vmatpush1.bf16.msra.mxu0 %v2641
    %3832 = vmatprep.subr.bf16.mxu0 %v2658
    %3833 = vmatpush1.bf16.msra.mxu0 %v2657
    %3834 = vmatprep.subr.bf16.mxu0 %v2674
    %3835 = vmatpush1.bf16.msra.mxu0 %v2673
    %3836 = vmatprep.subr.bf16.mxu0 %v2690
    %3837 = vmatpush1.bf16.msra.mxu0 %v2689
    %3838 = vmatprep.subr.bf16.mxu0 %v2706
    %3839 = vmatpush1.bf16.msra.mxu0 %v2705
    %3840 = vmatprep.subr.bf16.mxu0 %v2722
    %3841 = vmatpush1.bf16.msra.mxu0 %v2721
    %3842 = vmatprep.subr.bf16.mxu0 %v2738
    %3843 = vmatpush1.bf16.msra.mxu0 %v2737
    %3844 = vmatprep.mubr.bf16.mxu0 %v96
    %3845 = vmatmul.mubr.bf16.gmra.mrb[0].mxu0 %v95
    %v3846 = vpop.f32.mrb[0].mxu0
    %v3847 = vadd.f32 %v3804, %v3846
    %v3848 = vpop.f32.mrb[0].mxu0
    %v3849 = vadd.f32 %v3806, %v3848
    %v3850 = vpop.f32.mrb[0].mxu0
    %v3851 = vadd.f32 %v3808, %v3850
    %v3852 = vpop.f32.mrb[0].mxu0
    %v3853 = vadd.f32 %v3810, %v3852
    %3854 = vdwg.mxu0
    %3855 = vmatprep.subr.bf16.mxu0 %v2244
    %3856 = vmatpush1.bf16.msra.mxu0 %v2243
    %3857 = vmatprep.subr.bf16.mxu0 %v2260
    %3858 = vmatpush1.bf16.msra.mxu0 %v2259
    %3859 = vmatprep.subr.bf16.mxu0 %v2276
    %3860 = vmatpush1.bf16.msra.mxu0 %v2275
    %3861 = vmatprep.subr.bf16.mxu0 %v2292
    %3862 = vmatpush1.bf16.msra.mxu0 %v2291
    %3863 = vmatprep.subr.bf16.mxu0 %v2308
    %3864 = vmatpush1.bf16.msra.mxu0 %v2307
    %3865 = vmatprep.subr.bf16.mxu0 %v2324
    %3866 = vmatpush1.bf16.msra.mxu0 %v2323
    %3867 = vmatprep.subr.bf16.mxu0 %v2340
    %3868 = vmatpush1.bf16.msra.mxu0 %v2339
    %3869 = vmatprep.subr.bf16.mxu0 %v2356
    %3870 = vmatpush1.bf16.msra.mxu0 %v2355
    %3871 = vmatprep.subr.bf16.mxu0 %v2372
    %3872 = vmatpush1.bf16.msra.mxu0 %v2371
    %3873 = vmatprep.subr.bf16.mxu0 %v2388
    %3874 = vmatpush1.bf16.msra.mxu0 %v2387
    %3875 = vmatprep.subr.bf16.mxu0 %v2404
    %3876 = vmatpush1.bf16.msra.mxu0 %v2403
    %3877 = vmatprep.subr.bf16.mxu0 %v2420
    %3878 = vmatpush1.bf16.msra.mxu0 %v2419
    %3879 = vmatprep.subr.bf16.mxu0 %v2436
    %3880 = vmatpush1.bf16.msra.mxu0 %v2435
    %3881 = vmatprep.subr.bf16.mxu0 %v2452
    %3882 = vmatpush1.bf16.msra.mxu0 %v2451
    %3883 = vmatprep.subr.bf16.mxu0 %v2468
    %3884 = vmatpush1.bf16.msra.mxu0 %v2467
    %3885 = vmatprep.subr.bf16.mxu0 %v2484
    %3886 = vmatpush1.bf16.msra.mxu0 %v2483
    %3887 = vmatprep.mubr.bf16.mxu0 %v94
    %3888 = vmatmul.mubr.bf16.gmra.mrb[0].mxu0 %v93
    %v3889 = vpop.f32.mrb[0].mxu0
    %v3890 = vadd.f32 %v672, %v3889
    %v3891 = vpop.f32.mrb[0].mxu0
    %v3892 = vadd.f32 %v676, %v3891
    %v3893 = vpop.f32.mrb[0].mxu0
    %v3894 = vadd.f32 %v672, %v3893
    %v3895 = vpop.f32.mrb[0].mxu0
    %v3896 = vadd.f32 %v676, %v3895
    %3897 = vdwg.mxu0
    %3898 = vmatprep.subr.bf16.mxu0 %v2500
    %3899 = vmatpush1.bf16.msra.mxu0 %v2499
    %3900 = vmatprep.subr.bf16.mxu0 %v2516
    %3901 = vmatpush1.bf16.msra.mxu0 %v2515
    %3902 = vmatprep.subr.bf16.mxu0 %v2532
    %3903 = vmatpush1.bf16.msra.mxu0 %v2531
    %3904 = vmatprep.subr.bf16.mxu0 %v2548
    %3905 = vmatpush1.bf16.msra.mxu0 %v2547
    %3906 = vmatprep.subr.bf16.mxu0 %v2564
    %3907 = vmatpush1.bf16.msra.mxu0 %v2563
    %3908 = vmatprep.subr.bf16.mxu0 %v2580
    %3909 = vmatpush1.bf16.msra.mxu0 %v2579
    %3910 = vmatprep.subr.bf16.mxu0 %v2596
    %3911 = vmatpush1.bf16.msra.mxu0 %v2595
    %3912 = vmatprep.subr.bf16.mxu0 %v2612
    %3913 = vmatpush1.bf16.msra.mxu0 %v2611
    %3914 = vmatprep.subr.bf16.mxu0 %v2628
    %3915 = vmatpush1.bf16.msra.mxu0 %v2627
    %3916 = vmatprep.subr.bf16.mxu0 %v2644
    %3917 = vmatpush1.bf16.msra.mxu0 %v2643
    %3918 = vmatprep.subr.bf16.mxu0 %v2660
    %3919 = vmatpush1.bf16.msra.mxu0 %v2659
    %3920 = vmatprep.subr.bf16.mxu0 %v2676
    %3921 = vmatpush1.bf16.msra.mxu0 %v2675
    %3922 = vmatprep.subr.bf16.mxu0 %v2692
    %3923 = vmatpush1.bf16.msra.mxu0 %v2691
    %3924 = vmatprep.subr.bf16.mxu0 %v2708
    %3925 = vmatpush1.bf16.msra.mxu0 %v2707
    %3926 = vmatprep.subr.bf16.mxu0 %v2724
    %3927 = vmatpush1.bf16.msra.mxu0 %v2723
    %3928 = vmatprep.subr.bf16.mxu0 %v2740
    %3929 = vmatpush1.bf16.msra.mxu0 %v2739
    %3930 = vmatprep.mubr.bf16.mxu0 %v96
    %3931 = vmatmul.mubr.bf16.gmra.mrb[0].mxu0 %v95
    %v3932 = vpop.f32.mrb[0].mxu0
    %v3933 = vadd.f32 %v3890, %v3932
    %v3934 = vpop.f32.mrb[0].mxu0
    %v3935 = vadd.f32 %v3892, %v3934
    %v3936 = vpop.f32.mrb[0].mxu0
    %v3937 = vadd.f32 %v3894, %v3936
    %v3938 = vpop.f32.mrb[0].mxu0
    %v3939 = vadd.f32 %v3896, %v3938
    %3940 = vdwg.mxu0
    %v3941 = vmax.f32 %v3331, 0.0
    %v3942 = vmax.f32 %v3333, 0.0
    %v3943 = vmax.f32 %v3417, 0.0
    %v3944 = vmax.f32 %v3419, 0.0
    %v3945 = vmax.f32 %v3503, 0.0
    %v3946 = vmax.f32 %v3505, 0.0
    %v3947 = vmax.f32 %v3589, 0.0
    %v3948 = vmax.f32 %v3591, 0.0
    %v3949 = vmax.f32 %v3675, 0.0
    %v3950 = vmax.f32 %v3677, 0.0
    %v3951 = vmax.f32 %v3761, 0.0
    %v3952 = vmax.f32 %v3763, 0.0
    %v3953 = vmax.f32 %v3847, 0.0
    %v3954 = vmax.f32 %v3849, 0.0
    %v3955 = vmax.f32 %v3933, 0.0
    %v3956 = vmax.f32 %v3935, 0.0
    %v3957 = vmax.f32 %v3335, 0.0
    %v3958 = vmax.f32 %v3337, 0.0
    %v3959 = vmax.f32 %v3421, 0.0
    %v3960 = vmax.f32 %v3423, 0.0
    %v3961 = vmax.f32 %v3507, 0.0
    %v3962 = vmax.f32 %v3509, 0.0
    %v3963 = vmax.f32 %v3593, 0.0
    %v3964 = vmax.f32 %v3595, 0.0
    %v3965 = vmax.f32 %v3679, 0.0
    %v3966 = vmax.f32 %v3681, 0.0
    %v3967 = vmax.f32 %v3765, 0.0
    %v3968 = vmax.f32 %v3767, 0.0
    %v3969 = vmax.f32 %v3851, 0.0
    %v3970 = vmax.f32 %v3853, 0.0
    %v3971 = vmax.f32 %v3937, 0.0
    %v3972 = vmax.f32 %v3939, 0.0
    %v3973 = vpack.c.bf16 %v3957, %v3941
    %v3974 = vpack.c.bf16 %v3958, %v3942
    %v3975 = vpack.c.bf16 %v3959, %v3943
    %v3976 = vpack.c.bf16 %v3960, %v3944
    %v3977 = vpack.c.bf16 %v3961, %v3945
    %v3978 = vpack.c.bf16 %v3962, %v3946
    %v3979 = vpack.c.bf16 %v3963, %v3947
    %v3980 = vpack.c.bf16 %v3964, %v3948
    %v3981 = vpack.c.bf16 %v3965, %v3949
    %v3982 = vpack.c.bf16 %v3966, %v3950
    %v3983 = vpack.c.bf16 %v3967, %v3951
    %v3984 = vpack.c.bf16 %v3968, %v3952
    %v3985 = vpack.c.bf16 %v3969, %v3953
    %v3986 = vpack.c.bf16 %v3970, %v3954
    %v3987 = vpack.c.bf16 %v3971, %v3955
    %v3988 = vpack.c.bf16 %v3972, %v3956
    %v3989 = vld [vmem:[#allocation8] sm:$0xff]
    %v3990 = vld [vmem:[#allocation8 + $0x8] sm:$0xff]
    %v3991 = vld [vmem:[#allocation8 + $0x10] sm:$0xff]
    %v3992 = vld [vmem:[#allocation8 + $0x18] sm:$0xff]
    %v3993 = vld [vmem:[#allocation8 + $0x20] sm:$0xff]
    %v3994 = vld [vmem:[#allocation8 + $0x28] sm:$0xff]
    %v3995 = vld [vmem:[#allocation8 + $0x30] sm:$0xff]
    %v3996 = vld [vmem:[#allocation8 + $0x38] sm:$0xff]
    %v3997 = vld [vmem:[#allocation8 + $0x40] sm:$0xff]
    %v3998 = vld [vmem:[#allocation8 + $0x48] sm:$0xff]
    %v3999 = vld [vmem:[#allocation8 + $0x50] sm:$0xff]
    %v4000 = vld [vmem:[#allocation8 + $0x58] sm:$0xff]
    %v4001 = vld [vmem:[#allocation8 + $0x60] sm:$0xff]
    %v4002 = vld [vmem:[#allocation8 + $0x68] sm:$0xff]
    %v4003 = vld [vmem:[#allocation8 + $0x70] sm:$0xff]
    %v4004 = vld [vmem:[#allocation8 + $0x78] sm:$0xff]
    %v4005 = vld [vmem:[#allocation8 + $0x80] sm:$0xff]
    %v4006 = vld [vmem:[#allocation8 + $0x88] sm:$0xff]
    %v4007 = vld [vmem:[#allocation8 + $0x90] sm:$0xff]
    %v4008 = vld [vmem:[#allocation8 + $0x98] sm:$0xff]
    %v4009 = vld [vmem:[#allocation8 + $0xa0] sm:$0xff]
    %v4010 = vld [vmem:[#allocation8 + $0xa8] sm:$0xff]
    %v4011 = vld [vmem:[#allocation8 + $0xb0] sm:$0xff]
    %v4012 = vld [vmem:[#allocation8 + $0xb8] sm:$0xff]
    %v4013 = vld [vmem:[#allocation8 + $0xc0] sm:$0xff]
    %v4014 = vld [vmem:[#allocation8 + $0xc8] sm:$0xff]
    %v4015 = vld [vmem:[#allocation8 + $0xd0] sm:$0xff]
    %v4016 = vld [vmem:[#allocation8 + $0xd8] sm:$0xff]
    %v4017 = vld [vmem:[#allocation8 + $0xe0] sm:$0xff]
    %v4018 = vld [vmem:[#allocation8 + $0xe8] sm:$0xff]
    %v4019 = vld [vmem:[#allocation8 + $0xf0] sm:$0xff]
    %v4020 = vld [vmem:[#allocation8 + $0xf8] sm:$0xff]
    %v4021 = vld [vmem:[#allocation8 + $0x100] sm:$0xff]
    %v4022 = vld [vmem:[#allocation8 + $0x108] sm:$0xff]
    %v4023 = vld [vmem:[#allocation8 + $0x110] sm:$0xff]
    %v4024 = vld [vmem:[#allocation8 + $0x118] sm:$0xff]
    %v4025 = vld [vmem:[#allocation8 + $0x120] sm:$0xff]
    %v4026 = vld [vmem:[#allocation8 + $0x128] sm:$0xff]
    %v4027 = vld [vmem:[#allocation8 + $0x130] sm:$0xff]
    %v4028 = vld [vmem:[#allocation8 + $0x138] sm:$0xff]
    %v4029 = vld [vmem:[#allocation8 + $0x140] sm:$0xff]
    %v4030 = vld [vmem:[#allocation8 + $0x148] sm:$0xff]
    %v4031 = vld [vmem:[#allocation8 + $0x150] sm:$0xff]
    %v4032 = vld [vmem:[#allocation8 + $0x158] sm:$0xff]
    %v4033 = vld [vmem:[#allocation8 + $0x160] sm:$0xff]
    %v4034 = vld [vmem:[#allocation8 + $0x168] sm:$0xff]
    %v4035 = vld [vmem:[#allocation8 + $0x170] sm:$0xff]
    %v4036 = vld [vmem:[#allocation8 + $0x178] sm:$0xff]
    %v4037 = vld [vmem:[#allocation8 + $0x180] sm:$0xff]
    %v4038 = vld [vmem:[#allocation8 + $0x188] sm:$0xff]
    %v4039 = vld [vmem:[#allocation8 + $0x190] sm:$0xff]
    %v4040 = vld [vmem:[#allocation8 + $0x198] sm:$0xff]
    %v4041 = vld [vmem:[#allocation8 + $0x1a0] sm:$0xff]
    %v4042 = vld [vmem:[#allocation8 + $0x1a8] sm:$0xff]
    %v4043 = vld [vmem:[#allocation8 + $0x1b0] sm:$0xff]
    %v4044 = vld [vmem:[#allocation8 + $0x1b8] sm:$0xff]
    %v4045 = vld [vmem:[#allocation8 + $0x1c0] sm:$0xff]
    %v4046 = vld [vmem:[#allocation8 + $0x1c8] sm:$0xff]
    %v4047 = vld [vmem:[#allocation8 + $0x1d0] sm:$0xff]
    %v4048 = vld [vmem:[#allocation8 + $0x1d8] sm:$0xff]
    %v4049 = vld [vmem:[#allocation8 + $0x1e0] sm:$0xff]
    %v4050 = vld [vmem:[#allocation8 + $0x1e8] sm:$0xff]
    %v4051 = vld [vmem:[#allocation8 + $0x1f0] sm:$0xff]
    %v4052 = vld [vmem:[#allocation8 + $0x1f8] sm:$0xff]
    %v4053 = vld [vmem:[#allocation8 + $0x200] sm:$0xff]
    %v4054 = vld [vmem:[#allocation8 + $0x208] sm:$0xff]
    %v4055 = vld [vmem:[#allocation8 + $0x210] sm:$0xff]
    %v4056 = vld [vmem:[#allocation8 + $0x218] sm:$0xff]
    %v4057 = vld [vmem:[#allocation8 + $0x220] sm:$0xff]
    %v4058 = vld [vmem:[#allocation8 + $0x228] sm:$0xff]
    %v4059 = vld [vmem:[#allocation8 + $0x230] sm:$0xff]
    %v4060 = vld [vmem:[#allocation8 + $0x238] sm:$0xff]
    %v4061 = vld [vmem:[#allocation8 + $0x240] sm:$0xff]
    %v4062 = vld [vmem:[#allocation8 + $0x248] sm:$0xff]
    %v4063 = vld [vmem:[#allocation8 + $0x250] sm:$0xff]
    %v4064 = vld [vmem:[#allocation8 + $0x258] sm:$0xff]
    %v4065 = vld [vmem:[#allocation8 + $0x260] sm:$0xff]
    %v4066 = vld [vmem:[#allocation8 + $0x268] sm:$0xff]
    %v4067 = vld [vmem:[#allocation8 + $0x270] sm:$0xff]
    %v4068 = vld [vmem:[#allocation8 + $0x278] sm:$0xff]
    %v4069 = vld [vmem:[#allocation8 + $0x280] sm:$0xff]
    %v4070 = vld [vmem:[#allocation8 + $0x288] sm:$0xff]
    %v4071 = vld [vmem:[#allocation8 + $0x290] sm:$0xff]
    %v4072 = vld [vmem:[#allocation8 + $0x298] sm:$0xff]
    %v4073 = vld [vmem:[#allocation8 + $0x2a0] sm:$0xff]
    %v4074 = vld [vmem:[#allocation8 + $0x2a8] sm:$0xff]
    %v4075 = vld [vmem:[#allocation8 + $0x2b0] sm:$0xff]
    %v4076 = vld [vmem:[#allocation8 + $0x2b8] sm:$0xff]
    %v4077 = vld [vmem:[#allocation8 + $0x2c0] sm:$0xff]
    %v4078 = vld [vmem:[#allocation8 + $0x2c8] sm:$0xff]
    %v4079 = vld [vmem:[#allocation8 + $0x2d0] sm:$0xff]
    %v4080 = vld [vmem:[#allocation8 + $0x2d8] sm:$0xff]
    %v4081 = vld [vmem:[#allocation8 + $0x2e0] sm:$0xff]
    %v4082 = vld [vmem:[#allocation8 + $0x2e8] sm:$0xff]
    %v4083 = vld [vmem:[#allocation8 + $0x2f0] sm:$0xff]
    %v4084 = vld [vmem:[#allocation8 + $0x2f8] sm:$0xff]
    %v4085 = vld [vmem:[#allocation8 + $0x300] sm:$0xff]
    %v4086 = vld [vmem:[#allocation8 + $0x308] sm:$0xff]
    %v4087 = vld [vmem:[#allocation8 + $0x310] sm:$0xff]
    %v4088 = vld [vmem:[#allocation8 + $0x318] sm:$0xff]
    %v4089 = vld [vmem:[#allocation8 + $0x320] sm:$0xff]
    %v4090 = vld [vmem:[#allocation8 + $0x328] sm:$0xff]
    %v4091 = vld [vmem:[#allocation8 + $0x330] sm:$0xff]
    %v4092 = vld [vmem:[#allocation8 + $0x338] sm:$0xff]
    %v4093 = vld [vmem:[#allocation8 + $0x340] sm:$0xff]
    %v4094 = vld [vmem:[#allocation8 + $0x348] sm:$0xff]
    %v4095 = vld [vmem:[#allocation8 + $0x350] sm:$0xff]
    %v4096 = vld [vmem:[#allocation8 + $0x358] sm:$0xff]
    %v4097 = vld [vmem:[#allocation8 + $0x360] sm:$0xff]
    %v4098 = vld [vmem:[#allocation8 + $0x368] sm:$0xff]
    %v4099 = vld [vmem:[#allocation8 + $0x370] sm:$0xff]
    %v4100 = vld [vmem:[#allocation8 + $0x378] sm:$0xff]
    %v4101 = vld [vmem:[#allocation8 + $0x380] sm:$0xff]
    %v4102 = vld [vmem:[#allocation8 + $0x388] sm:$0xff]
    %v4103 = vld [vmem:[#allocation8 + $0x390] sm:$0xff]
    %v4104 = vld [vmem:[#allocation8 + $0x398] sm:$0xff]
    %v4105 = vld [vmem:[#allocation8 + $0x3a0] sm:$0xff]
    %v4106 = vld [vmem:[#allocation8 + $0x3a8] sm:$0xff]
    %v4107 = vld [vmem:[#allocation8 + $0x3b0] sm:$0xff]
    %v4108 = vld [vmem:[#allocation8 + $0x3b8] sm:$0xff]
    %v4109 = vld [vmem:[#allocation8 + $0x3c0] sm:$0xff]
    %v4110 = vld [vmem:[#allocation8 + $0x3c8] sm:$0xff]
    %v4111 = vld [vmem:[#allocation8 + $0x3d0] sm:$0xff]
    %v4112 = vld [vmem:[#allocation8 + $0x3d8] sm:$0xff]
    %v4113 = vld [vmem:[#allocation8 + $0x3e0] sm:$0xff]
    %v4114 = vld [vmem:[#allocation8 + $0x3e8] sm:$0xff]
    %v4115 = vld [vmem:[#allocation8 + $0x3f0] sm:$0xff]
    %v4116 = vld [vmem:[#allocation8 + $0x3f8] sm:$0xff]
    %v4117 = vld [vmem:[#allocation8 + $0x400] sm:$0xff]
    %v4118 = vld [vmem:[#allocation8 + $0x408] sm:$0xff]
    %v4119 = vld [vmem:[#allocation8 + $0x410] sm:$0xff]
    %v4120 = vld [vmem:[#allocation8 + $0x418] sm:$0xff]
    %v4121 = vld [vmem:[#allocation8 + $0x420] sm:$0xff]
    %v4122 = vld [vmem:[#allocation8 + $0x428] sm:$0xff]
    %v4123 = vld [vmem:[#allocation8 + $0x430] sm:$0xff]
    %v4124 = vld [vmem:[#allocation8 + $0x438] sm:$0xff]
    %v4125 = vld [vmem:[#allocation8 + $0x440] sm:$0xff]
    %v4126 = vld [vmem:[#allocation8 + $0x448] sm:$0xff]
    %v4127 = vld [vmem:[#allocation8 + $0x450] sm:$0xff]
    %v4128 = vld [vmem:[#allocation8 + $0x458] sm:$0xff]
    %v4129 = vld [vmem:[#allocation8 + $0x460] sm:$0xff]
    %v4130 = vld [vmem:[#allocation8 + $0x468] sm:$0xff]
    %v4131 = vld [vmem:[#allocation8 + $0x470] sm:$0xff]
    %v4132 = vld [vmem:[#allocation8 + $0x478] sm:$0xff]
    %v4133 = vld [vmem:[#allocation8 + $0x480] sm:$0xff]
    %v4134 = vld [vmem:[#allocation8 + $0x488] sm:$0xff]
    %v4135 = vld [vmem:[#allocation8 + $0x490] sm:$0xff]
    %v4136 = vld [vmem:[#allocation8 + $0x498] sm:$0xff]
    %v4137 = vld [vmem:[#allocation8 + $0x4a0] sm:$0xff]
    %v4138 = vld [vmem:[#allocation8 + $0x4a8] sm:$0xff]
    %v4139 = vld [vmem:[#allocation8 + $0x4b0] sm:$0xff]
    %v4140 = vld [vmem:[#allocation8 + $0x4b8] sm:$0xff]
    %v4141 = vld [vmem:[#allocation8 + $0x4c0] sm:$0xff]
    %v4142 = vld [vmem:[#allocation8 + $0x4c8] sm:$0xff]
    %v4143 = vld [vmem:[#allocation8 + $0x4d0] sm:$0xff]
    %v4144 = vld [vmem:[#allocation8 + $0x4d8] sm:$0xff]
    %v4145 = vld [vmem:[#allocation8 + $0x4e0] sm:$0xff]
    %v4146 = vld [vmem:[#allocation8 + $0x4e8] sm:$0xff]
    %v4147 = vld [vmem:[#allocation8 + $0x4f0] sm:$0xff]
    %v4148 = vld [vmem:[#allocation8 + $0x4f8] sm:$0xff]
    %v4149 = vld [vmem:[#allocation8 + $0x500] sm:$0xff]
    %v4150 = vld [vmem:[#allocation8 + $0x508] sm:$0xff]
    %v4151 = vld [vmem:[#allocation8 + $0x510] sm:$0xff]
    %v4152 = vld [vmem:[#allocation8 + $0x518] sm:$0xff]
    %v4153 = vld [vmem:[#allocation8 + $0x520] sm:$0xff]
    %v4154 = vld [vmem:[#allocation8 + $0x528] sm:$0xff]
    %v4155 = vld [vmem:[#allocation8 + $0x530] sm:$0xff]
    %v4156 = vld [vmem:[#allocation8 + $0x538] sm:$0xff]
    %v4157 = vld [vmem:[#allocation8 + $0x540] sm:$0xff]
    %v4158 = vld [vmem:[#allocation8 + $0x548] sm:$0xff]
    %v4159 = vld [vmem:[#allocation8 + $0x550] sm:$0xff]
    %v4160 = vld [vmem:[#allocation8 + $0x558] sm:$0xff]
    %v4161 = vld [vmem:[#allocation8 + $0x560] sm:$0xff]
    %v4162 = vld [vmem:[#allocation8 + $0x568] sm:$0xff]
    %v4163 = vld [vmem:[#allocation8 + $0x570] sm:$0xff]
    %v4164 = vld [vmem:[#allocation8 + $0x578] sm:$0xff]
    %v4165 = vld [vmem:[#allocation8 + $0x580] sm:$0xff]
    %v4166 = vld [vmem:[#allocation8 + $0x588] sm:$0xff]
    %v4167 = vld [vmem:[#allocation8 + $0x590] sm:$0xff]
    %v4168 = vld [vmem:[#allocation8 + $0x598] sm:$0xff]
    %v4169 = vld [vmem:[#allocation8 + $0x5a0] sm:$0xff]
    %v4170 = vld [vmem:[#allocation8 + $0x5a8] sm:$0xff]
    %v4171 = vld [vmem:[#allocation8 + $0x5b0] sm:$0xff]
    %v4172 = vld [vmem:[#allocation8 + $0x5b8] sm:$0xff]
    %v4173 = vld [vmem:[#allocation8 + $0x5c0] sm:$0xff]
    %v4174 = vld [vmem:[#allocation8 + $0x5c8] sm:$0xff]
    %v4175 = vld [vmem:[#allocation8 + $0x5d0] sm:$0xff]
    %v4176 = vld [vmem:[#allocation8 + $0x5d8] sm:$0xff]
    %v4177 = vld [vmem:[#allocation8 + $0x5e0] sm:$0xff]
    %v4178 = vld [vmem:[#allocation8 + $0x5e8] sm:$0xff]
    %v4179 = vld [vmem:[#allocation8 + $0x5f0] sm:$0xff]
    %v4180 = vld [vmem:[#allocation8 + $0x5f8] sm:$0xff]
    %v4181 = vld [vmem:[#allocation8 + $0x600] sm:$0xff]
    %v4182 = vld [vmem:[#allocation8 + $0x608] sm:$0xff]
    %v4183 = vld [vmem:[#allocation8 + $0x610] sm:$0xff]
    %v4184 = vld [vmem:[#allocation8 + $0x618] sm:$0xff]
    %v4185 = vld [vmem:[#allocation8 + $0x620] sm:$0xff]
    %v4186 = vld [vmem:[#allocation8 + $0x628] sm:$0xff]
    %v4187 = vld [vmem:[#allocation8 + $0x630] sm:$0xff]
    %v4188 = vld [vmem:[#allocation8 + $0x638] sm:$0xff]
    %v4189 = vld [vmem:[#allocation8 + $0x640] sm:$0xff]
    %v4190 = vld [vmem:[#allocation8 + $0x648] sm:$0xff]
    %v4191 = vld [vmem:[#allocation8 + $0x650] sm:$0xff]
    %v4192 = vld [vmem:[#allocation8 + $0x658] sm:$0xff]
    %v4193 = vld [vmem:[#allocation8 + $0x660] sm:$0xff]
    %v4194 = vld [vmem:[#allocation8 + $0x668] sm:$0xff]
    %v4195 = vld [vmem:[#allocation8 + $0x670] sm:$0xff]
    %v4196 = vld [vmem:[#allocation8 + $0x678] sm:$0xff]
    %v4197 = vld [vmem:[#allocation8 + $0x680] sm:$0xff]
    %v4198 = vld [vmem:[#allocation8 + $0x688] sm:$0xff]
    %v4199 = vld [vmem:[#allocation8 + $0x690] sm:$0xff]
    %v4200 = vld [vmem:[#allocation8 + $0x698] sm:$0xff]
    %v4201 = vld [vmem:[#allocation8 + $0x6a0] sm:$0xff]
    %v4202 = vld [vmem:[#allocation8 + $0x6a8] sm:$0xff]
    %v4203 = vld [vmem:[#allocation8 + $0x6b0] sm:$0xff]
    %v4204 = vld [vmem:[#allocation8 + $0x6b8] sm:$0xff]
    %v4205 = vld [vmem:[#allocation8 + $0x6c0] sm:$0xff]
    %v4206 = vld [vmem:[#allocation8 + $0x6c8] sm:$0xff]
    %v4207 = vld [vmem:[#allocation8 + $0x6d0] sm:$0xff]
    %v4208 = vld [vmem:[#allocation8 + $0x6d8] sm:$0xff]
    %v4209 = vld [vmem:[#allocation8 + $0x6e0] sm:$0xff]
    %v4210 = vld [vmem:[#allocation8 + $0x6e8] sm:$0xff]
    %v4211 = vld [vmem:[#allocation8 + $0x6f0] sm:$0xff]
    %v4212 = vld [vmem:[#allocation8 + $0x6f8] sm:$0xff]
    %v4213 = vld [vmem:[#allocation8 + $0x700] sm:$0xff]
    %v4214 = vld [vmem:[#allocation8 + $0x708] sm:$0xff]
    %v4215 = vld [vmem:[#allocation8 + $0x710] sm:$0xff]
    %v4216 = vld [vmem:[#allocation8 + $0x718] sm:$0xff]
    %v4217 = vld [vmem:[#allocation8 + $0x720] sm:$0xff]
    %v4218 = vld [vmem:[#allocation8 + $0x728] sm:$0xff]
    %v4219 = vld [vmem:[#allocation8 + $0x730] sm:$0xff]
    %v4220 = vld [vmem:[#allocation8 + $0x738] sm:$0xff]
    %v4221 = vld [vmem:[#allocation8 + $0x740] sm:$0xff]
    %v4222 = vld [vmem:[#allocation8 + $0x748] sm:$0xff]
    %v4223 = vld [vmem:[#allocation8 + $0x750] sm:$0xff]
    %v4224 = vld [vmem:[#allocation8 + $0x758] sm:$0xff]
    %v4225 = vld [vmem:[#allocation8 + $0x760] sm:$0xff]
    %v4226 = vld [vmem:[#allocation8 + $0x768] sm:$0xff]
    %v4227 = vld [vmem:[#allocation8 + $0x770] sm:$0xff]
    %v4228 = vld [vmem:[#allocation8 + $0x778] sm:$0xff]
    %v4229 = vld [vmem:[#allocation8 + $0x780] sm:$0xff]
    %v4230 = vld [vmem:[#allocation8 + $0x788] sm:$0xff]
    %v4231 = vld [vmem:[#allocation8 + $0x790] sm:$0xff]
    %v4232 = vld [vmem:[#allocation8 + $0x798] sm:$0xff]
    %v4233 = vld [vmem:[#allocation8 + $0x7a0] sm:$0xff]
    %v4234 = vld [vmem:[#allocation8 + $0x7a8] sm:$0xff]
    %v4235 = vld [vmem:[#allocation8 + $0x7b0] sm:$0xff]
    %v4236 = vld [vmem:[#allocation8 + $0x7b8] sm:$0xff]
    %v4237 = vld [vmem:[#allocation8 + $0x7c0] sm:$0xff]
    %v4238 = vld [vmem:[#allocation8 + $0x7c8] sm:$0xff]
    %v4239 = vld [vmem:[#allocation8 + $0x7d0] sm:$0xff]
    %v4240 = vld [vmem:[#allocation8 + $0x7d8] sm:$0xff]
    %v4241 = vld [vmem:[#allocation8 + $0x7e0] sm:$0xff]
    %v4242 = vld [vmem:[#allocation8 + $0x7e8] sm:$0xff]
    %v4243 = vld [vmem:[#allocation8 + $0x7f0] sm:$0xff]
    %v4244 = vld [vmem:[#allocation8 + $0x7f8] sm:$0xff]
    %v4245 = vld [vmem:[#allocation8 + $0x800] sm:$0xff]
    %v4246 = vld [vmem:[#allocation8 + $0x808] sm:$0xff]
    %v4247 = vld [vmem:[#allocation8 + $0x810] sm:$0xff]
    %v4248 = vld [vmem:[#allocation8 + $0x818] sm:$0xff]
    %v4249 = vld [vmem:[#allocation8 + $0x820] sm:$0xff]
    %v4250 = vld [vmem:[#allocation8 + $0x828] sm:$0xff]
    %v4251 = vld [vmem:[#allocation8 + $0x830] sm:$0xff]
    %v4252 = vld [vmem:[#allocation8 + $0x838] sm:$0xff]
    %v4253 = vld [vmem:[#allocation8 + $0x840] sm:$0xff]
    %v4254 = vld [vmem:[#allocation8 + $0x848] sm:$0xff]
    %v4255 = vld [vmem:[#allocation8 + $0x850] sm:$0xff]
    %v4256 = vld [vmem:[#allocation8 + $0x858] sm:$0xff]
    %v4257 = vld [vmem:[#allocation8 + $0x860] sm:$0xff]
    %v4258 = vld [vmem:[#allocation8 + $0x868] sm:$0xff]
    %v4259 = vld [vmem:[#allocation8 + $0x870] sm:$0xff]
    %v4260 = vld [vmem:[#allocation8 + $0x878] sm:$0xff]
    %v4261 = vld [vmem:[#allocation8 + $0x880] sm:$0xff]
    %v4262 = vld [vmem:[#allocation8 + $0x888] sm:$0xff]
    %v4263 = vld [vmem:[#allocation8 + $0x890] sm:$0xff]
    %v4264 = vld [vmem:[#allocation8 + $0x898] sm:$0xff]
    %v4265 = vld [vmem:[#allocation8 + $0x8a0] sm:$0xff]
    %v4266 = vld [vmem:[#allocation8 + $0x8a8] sm:$0xff]
    %v4267 = vld [vmem:[#allocation8 + $0x8b0] sm:$0xff]
    %v4268 = vld [vmem:[#allocation8 + $0x8b8] sm:$0xff]
    %v4269 = vld [vmem:[#allocation8 + $0x8c0] sm:$0xff]
    %v4270 = vld [vmem:[#allocation8 + $0x8c8] sm:$0xff]
    %v4271 = vld [vmem:[#allocation8 + $0x8d0] sm:$0xff]
    %v4272 = vld [vmem:[#allocation8 + $0x8d8] sm:$0xff]
    %v4273 = vld [vmem:[#allocation8 + $0x8e0] sm:$0xff]
    %v4274 = vld [vmem:[#allocation8 + $0x8e8] sm:$0xff]
    %v4275 = vld [vmem:[#allocation8 + $0x8f0] sm:$0xff]
    %v4276 = vld [vmem:[#allocation8 + $0x8f8] sm:$0xff]
    %v4277 = vld [vmem:[#allocation8 + $0x900] sm:$0xff]
    %v4278 = vld [vmem:[#allocation8 + $0x908] sm:$0xff]
    %v4279 = vld [vmem:[#allocation8 + $0x910] sm:$0xff]
    %v4280 = vld [vmem:[#allocation8 + $0x918] sm:$0xff]
    %v4281 = vld [vmem:[#allocation8 + $0x920] sm:$0xff]
    %v4282 = vld [vmem:[#allocation8 + $0x928] sm:$0xff]
    %v4283 = vld [vmem:[#allocation8 + $0x930] sm:$0xff]
    %v4284 = vld [vmem:[#allocation8 + $0x938] sm:$0xff]
    %v4285 = vld [vmem:[#allocation8 + $0x940] sm:$0xff]
    %v4286 = vld [vmem:[#allocation8 + $0x948] sm:$0xff]
    %v4287 = vld [vmem:[#allocation8 + $0x950] sm:$0xff]
    %v4288 = vld [vmem:[#allocation8 + $0x958] sm:$0xff]
    %v4289 = vld [vmem:[#allocation8 + $0x960] sm:$0xff]
    %v4290 = vld [vmem:[#allocation8 + $0x968] sm:$0xff]
    %v4291 = vld [vmem:[#allocation8 + $0x970] sm:$0xff]
    %v4292 = vld [vmem:[#allocation8 + $0x978] sm:$0xff]
    %v4293 = vld [vmem:[#allocation8 + $0x980] sm:$0xff]
    %v4294 = vld [vmem:[#allocation8 + $0x988] sm:$0xff]
    %v4295 = vld [vmem:[#allocation8 + $0x990] sm:$0xff]
    %v4296 = vld [vmem:[#allocation8 + $0x998] sm:$0xff]
    %v4297 = vld [vmem:[#allocation8 + $0x9a0] sm:$0xff]
    %v4298 = vld [vmem:[#allocation8 + $0x9a8] sm:$0xff]
    %v4299 = vld [vmem:[#allocation8 + $0x9b0] sm:$0xff]
    %v4300 = vld [vmem:[#allocation8 + $0x9b8] sm:$0xff]
    %v4301 = vld [vmem:[#allocation8 + $0x9c0] sm:$0xff]
    %v4302 = vld [vmem:[#allocation8 + $0x9c8] sm:$0xff]
    %v4303 = vld [vmem:[#allocation8 + $0x9d0] sm:$0xff]
    %v4304 = vld [vmem:[#allocation8 + $0x9d8] sm:$0xff]
    %v4305 = vld [vmem:[#allocation8 + $0x9e0] sm:$0xff]
    %v4306 = vld [vmem:[#allocation8 + $0x9e8] sm:$0xff]
    %v4307 = vld [vmem:[#allocation8 + $0x9f0] sm:$0xff]
    %v4308 = vld [vmem:[#allocation8 + $0x9f8] sm:$0xff]
    %v4309 = vld [vmem:[#allocation8 + $0xa00] sm:$0xff]
    %v4310 = vld [vmem:[#allocation8 + $0xa08] sm:$0xff]
    %v4311 = vld [vmem:[#allocation8 + $0xa10] sm:$0xff]
    %v4312 = vld [vmem:[#allocation8 + $0xa18] sm:$0xff]
    %v4313 = vld [vmem:[#allocation8 + $0xa20] sm:$0xff]
    %v4314 = vld [vmem:[#allocation8 + $0xa28] sm:$0xff]
    %v4315 = vld [vmem:[#allocation8 + $0xa30] sm:$0xff]
    %v4316 = vld [vmem:[#allocation8 + $0xa38] sm:$0xff]
    %v4317 = vld [vmem:[#allocation8 + $0xa40] sm:$0xff]
    %v4318 = vld [vmem:[#allocation8 + $0xa48] sm:$0xff]
    %v4319 = vld [vmem:[#allocation8 + $0xa50] sm:$0xff]
    %v4320 = vld [vmem:[#allocation8 + $0xa58] sm:$0xff]
    %v4321 = vld [vmem:[#allocation8 + $0xa60] sm:$0xff]
    %v4322 = vld [vmem:[#allocation8 + $0xa68] sm:$0xff]
    %v4323 = vld [vmem:[#allocation8 + $0xa70] sm:$0xff]
    %v4324 = vld [vmem:[#allocation8 + $0xa78] sm:$0xff]
    %v4325 = vld [vmem:[#allocation8 + $0xa80] sm:$0xff]
    %v4326 = vld [vmem:[#allocation8 + $0xa88] sm:$0xff]
    %v4327 = vld [vmem:[#allocation8 + $0xa90] sm:$0xff]
    %v4328 = vld [vmem:[#allocation8 + $0xa98] sm:$0xff]
    %v4329 = vld [vmem:[#allocation8 + $0xaa0] sm:$0xff]
    %v4330 = vld [vmem:[#allocation8 + $0xaa8] sm:$0xff]
    %v4331 = vld [vmem:[#allocation8 + $0xab0] sm:$0xff]
    %v4332 = vld [vmem:[#allocation8 + $0xab8] sm:$0xff]
    %v4333 = vld [vmem:[#allocation8 + $0xac0] sm:$0xff]
    %v4334 = vld [vmem:[#allocation8 + $0xac8] sm:$0xff]
    %v4335 = vld [vmem:[#allocation8 + $0xad0] sm:$0xff]
    %v4336 = vld [vmem:[#allocation8 + $0xad8] sm:$0xff]
    %v4337 = vld [vmem:[#allocation8 + $0xae0] sm:$0xff]
    %v4338 = vld [vmem:[#allocation8 + $0xae8] sm:$0xff]
    %v4339 = vld [vmem:[#allocation8 + $0xaf0] sm:$0xff]
    %v4340 = vld [vmem:[#allocation8 + $0xaf8] sm:$0xff]
    %v4341 = vld [vmem:[#allocation8 + $0xb00] sm:$0xff]
    %v4342 = vld [vmem:[#allocation8 + $0xb08] sm:$0xff]
    %v4343 = vld [vmem:[#allocation8 + $0xb10] sm:$0xff]
    %v4344 = vld [vmem:[#allocation8 + $0xb18] sm:$0xff]
    %v4345 = vld [vmem:[#allocation8 + $0xb20] sm:$0xff]
    %v4346 = vld [vmem:[#allocation8 + $0xb28] sm:$0xff]
    %v4347 = vld [vmem:[#allocation8 + $0xb30] sm:$0xff]
    %v4348 = vld [vmem:[#allocation8 + $0xb38] sm:$0xff]
    %v4349 = vld [vmem:[#allocation8 + $0xb40] sm:$0xff]
    %v4350 = vld [vmem:[#allocation8 + $0xb48] sm:$0xff]
    %v4351 = vld [vmem:[#allocation8 + $0xb50] sm:$0xff]
    %v4352 = vld [vmem:[#allocation8 + $0xb58] sm:$0xff]
    %v4353 = vld [vmem:[#allocation8 + $0xb60] sm:$0xff]
    %v4354 = vld [vmem:[#allocation8 + $0xb68] sm:$0xff]
    %v4355 = vld [vmem:[#allocation8 + $0xb70] sm:$0xff]
    %v4356 = vld [vmem:[#allocation8 + $0xb78] sm:$0xff]
    %v4357 = vld [vmem:[#allocation8 + $0xb80] sm:$0xff]
    %v4358 = vld [vmem:[#allocation8 + $0xb88] sm:$0xff]
    %v4359 = vld [vmem:[#allocation8 + $0xb90] sm:$0xff]
    %v4360 = vld [vmem:[#allocation8 + $0xb98] sm:$0xff]
    %v4361 = vld [vmem:[#allocation8 + $0xba0] sm:$0xff]
    %v4362 = vld [vmem:[#allocation8 + $0xba8] sm:$0xff]
    %v4363 = vld [vmem:[#allocation8 + $0xbb0] sm:$0xff]
    %v4364 = vld [vmem:[#allocation8 + $0xbb8] sm:$0xff]
    %v4365 = vld [vmem:[#allocation8 + $0xbc0] sm:$0xff]
    %v4366 = vld [vmem:[#allocation8 + $0xbc8] sm:$0xff]
    %v4367 = vld [vmem:[#allocation8 + $0xbd0] sm:$0xff]
    %v4368 = vld [vmem:[#allocation8 + $0xbd8] sm:$0xff]
    %v4369 = vld [vmem:[#allocation8 + $0xbe0] sm:$0xff]
    %v4370 = vld [vmem:[#allocation8 + $0xbe8] sm:$0xff]
    %v4371 = vld [vmem:[#allocation8 + $0xbf0] sm:$0xff]
    %v4372 = vld [vmem:[#allocation8 + $0xbf8] sm:$0xff]
    %v4373 = vld [vmem:[#allocation8 + $0xc00] sm:$0xff]
    %v4374 = vld [vmem:[#allocation8 + $0xc08] sm:$0xff]
    %v4375 = vld [vmem:[#allocation8 + $0xc10] sm:$0xff]
    %v4376 = vld [vmem:[#allocation8 + $0xc18] sm:$0xff]
    %v4377 = vld [vmem:[#allocation8 + $0xc20] sm:$0xff]
    %v4378 = vld [vmem:[#allocation8 + $0xc28] sm:$0xff]
    %v4379 = vld [vmem:[#allocation8 + $0xc30] sm:$0xff]
    %v4380 = vld [vmem:[#allocation8 + $0xc38] sm:$0xff]
    %v4381 = vld [vmem:[#allocation8 + $0xc40] sm:$0xff]
    %v4382 = vld [vmem:[#allocation8 + $0xc48] sm:$0xff]
    %v4383 = vld [vmem:[#allocation8 + $0xc50] sm:$0xff]
    %v4384 = vld [vmem:[#allocation8 + $0xc58] sm:$0xff]
    %v4385 = vld [vmem:[#allocation8 + $0xc60] sm:$0xff]
    %v4386 = vld [vmem:[#allocation8 + $0xc68] sm:$0xff]
    %v4387 = vld [vmem:[#allocation8 + $0xc70] sm:$0xff]
    %v4388 = vld [vmem:[#allocation8 + $0xc78] sm:$0xff]
    %v4389 = vld [vmem:[#allocation8 + $0xc80] sm:$0xff]
    %v4390 = vld [vmem:[#allocation8 + $0xc88] sm:$0xff]
    %v4391 = vld [vmem:[#allocation8 + $0xc90] sm:$0xff]
    %v4392 = vld [vmem:[#allocation8 + $0xc98] sm:$0xff]
    %v4393 = vld [vmem:[#allocation8 + $0xca0] sm:$0xff]
    %v4394 = vld [vmem:[#allocation8 + $0xca8] sm:$0xff]
    %v4395 = vld [vmem:[#allocation8 + $0xcb0] sm:$0xff]
    %v4396 = vld [vmem:[#allocation8 + $0xcb8] sm:$0xff]
    %v4397 = vld [vmem:[#allocation8 + $0xcc0] sm:$0xff]
    %v4398 = vld [vmem:[#allocation8 + $0xcc8] sm:$0xff]
    %v4399 = vld [vmem:[#allocation8 + $0xcd0] sm:$0xff]
    %v4400 = vld [vmem:[#allocation8 + $0xcd8] sm:$0xff]
    %v4401 = vld [vmem:[#allocation8 + $0xce0] sm:$0xff]
    %v4402 = vld [vmem:[#allocation8 + $0xce8] sm:$0xff]
    %v4403 = vld [vmem:[#allocation8 + $0xcf0] sm:$0xff]
    %v4404 = vld [vmem:[#allocation8 + $0xcf8] sm:$0xff]
    %v4405 = vld [vmem:[#allocation8 + $0xd00] sm:$0xff]
    %v4406 = vld [vmem:[#allocation8 + $0xd08] sm:$0xff]
    %v4407 = vld [vmem:[#allocation8 + $0xd10] sm:$0xff]
    %v4408 = vld [vmem:[#allocation8 + $0xd18] sm:$0xff]
    %v4409 = vld [vmem:[#allocation8 + $0xd20] sm:$0xff]
    %v4410 = vld [vmem:[#allocation8 + $0xd28] sm:$0xff]
    %v4411 = vld [vmem:[#allocation8 + $0xd30] sm:$0xff]
    %v4412 = vld [vmem:[#allocation8 + $0xd38] sm:$0xff]
    %v4413 = vld [vmem:[#allocation8 + $0xd40] sm:$0xff]
    %v4414 = vld [vmem:[#allocation8 + $0xd48] sm:$0xff]
    %v4415 = vld [vmem:[#allocation8 + $0xd50] sm:$0xff]
    %v4416 = vld [vmem:[#allocation8 + $0xd58] sm:$0xff]
    %v4417 = vld [vmem:[#allocation8 + $0xd60] sm:$0xff]
    %v4418 = vld [vmem:[#allocation8 + $0xd68] sm:$0xff]
    %v4419 = vld [vmem:[#allocation8 + $0xd70] sm:$0xff]
    %v4420 = vld [vmem:[#allocation8 + $0xd78] sm:$0xff]
    %v4421 = vld [vmem:[#allocation8 + $0xd80] sm:$0xff]
    %v4422 = vld [vmem:[#allocation8 + $0xd88] sm:$0xff]
    %v4423 = vld [vmem:[#allocation8 + $0xd90] sm:$0xff]
    %v4424 = vld [vmem:[#allocation8 + $0xd98] sm:$0xff]
    %v4425 = vld [vmem:[#allocation8 + $0xda0] sm:$0xff]
    %v4426 = vld [vmem:[#allocation8 + $0xda8] sm:$0xff]
    %v4427 = vld [vmem:[#allocation8 + $0xdb0] sm:$0xff]
    %v4428 = vld [vmem:[#allocation8 + $0xdb8] sm:$0xff]
    %v4429 = vld [vmem:[#allocation8 + $0xdc0] sm:$0xff]
    %v4430 = vld [vmem:[#allocation8 + $0xdc8] sm:$0xff]
    %v4431 = vld [vmem:[#allocation8 + $0xdd0] sm:$0xff]
    %v4432 = vld [vmem:[#allocation8 + $0xdd8] sm:$0xff]
    %v4433 = vld [vmem:[#allocation8 + $0xde0] sm:$0xff]
    %v4434 = vld [vmem:[#allocation8 + $0xde8] sm:$0xff]
    %v4435 = vld [vmem:[#allocation8 + $0xdf0] sm:$0xff]
    %v4436 = vld [vmem:[#allocation8 + $0xdf8] sm:$0xff]
    %v4437 = vld [vmem:[#allocation8 + $0xe00] sm:$0xff]
    %v4438 = vld [vmem:[#allocation8 + $0xe08] sm:$0xff]
    %v4439 = vld [vmem:[#allocation8 + $0xe10] sm:$0xff]
    %v4440 = vld [vmem:[#allocation8 + $0xe18] sm:$0xff]
    %v4441 = vld [vmem:[#allocation8 + $0xe20] sm:$0xff]
    %v4442 = vld [vmem:[#allocation8 + $0xe28] sm:$0xff]
    %v4443 = vld [vmem:[#allocation8 + $0xe30] sm:$0xff]
    %v4444 = vld [vmem:[#allocation8 + $0xe38] sm:$0xff]
    %v4445 = vld [vmem:[#allocation8 + $0xe40] sm:$0xff]
    %v4446 = vld [vmem:[#allocation8 + $0xe48] sm:$0xff]
    %v4447 = vld [vmem:[#allocation8 + $0xe50] sm:$0xff]
    %v4448 = vld [vmem:[#allocation8 + $0xe58] sm:$0xff]
    %v4449 = vld [vmem:[#allocation8 + $0xe60] sm:$0xff]
    %v4450 = vld [vmem:[#allocation8 + $0xe68] sm:$0xff]
    %v4451 = vld [vmem:[#allocation8 + $0xe70] sm:$0xff]
    %v4452 = vld [vmem:[#allocation8 + $0xe78] sm:$0xff]
    %v4453 = vld [vmem:[#allocation8 + $0xe80] sm:$0xff]
    %v4454 = vld [vmem:[#allocation8 + $0xe88] sm:$0xff]
    %v4455 = vld [vmem:[#allocation8 + $0xe90] sm:$0xff]
    %v4456 = vld [vmem:[#allocation8 + $0xe98] sm:$0xff]
    %v4457 = vld [vmem:[#allocation8 + $0xea0] sm:$0xff]
    %v4458 = vld [vmem:[#allocation8 + $0xea8] sm:$0xff]
    %v4459 = vld [vmem:[#allocation8 + $0xeb0] sm:$0xff]
    %v4460 = vld [vmem:[#allocation8 + $0xeb8] sm:$0xff]
    %v4461 = vld [vmem:[#allocation8 + $0xec0] sm:$0xff]
    %v4462 = vld [vmem:[#allocation8 + $0xec8] sm:$0xff]
    %v4463 = vld [vmem:[#allocation8 + $0xed0] sm:$0xff]
    %v4464 = vld [vmem:[#allocation8 + $0xed8] sm:$0xff]
    %v4465 = vld [vmem:[#allocation8 + $0xee0] sm:$0xff]
    %v4466 = vld [vmem:[#allocation8 + $0xee8] sm:$0xff]
    %v4467 = vld [vmem:[#allocation8 + $0xef0] sm:$0xff]
    %v4468 = vld [vmem:[#allocation8 + $0xef8] sm:$0xff]
    %v4469 = vld [vmem:[#allocation8 + $0xf00] sm:$0xff]
    %v4470 = vld [vmem:[#allocation8 + $0xf08] sm:$0xff]
    %v4471 = vld [vmem:[#allocation8 + $0xf10] sm:$0xff]
    %v4472 = vld [vmem:[#allocation8 + $0xf18] sm:$0xff]
    %v4473 = vld [vmem:[#allocation8 + $0xf20] sm:$0xff]
    %v4474 = vld [vmem:[#allocation8 + $0xf28] sm:$0xff]
    %v4475 = vld [vmem:[#allocation8 + $0xf30] sm:$0xff]
    %v4476 = vld [vmem:[#allocation8 + $0xf38] sm:$0xff]
    %v4477 = vld [vmem:[#allocation8 + $0xf40] sm:$0xff]
    %v4478 = vld [vmem:[#allocation8 + $0xf48] sm:$0xff]
    %v4479 = vld [vmem:[#allocation8 + $0xf50] sm:$0xff]
    %v4480 = vld [vmem:[#allocation8 + $0xf58] sm:$0xff]
    %v4481 = vld [vmem:[#allocation8 + $0xf60] sm:$0xff]
    %v4482 = vld [vmem:[#allocation8 + $0xf68] sm:$0xff]
    %v4483 = vld [vmem:[#allocation8 + $0xf70] sm:$0xff]
    %v4484 = vld [vmem:[#allocation8 + $0xf78] sm:$0xff]
    %v4485 = vld [vmem:[#allocation8 + $0xf80] sm:$0xff]
    %v4486 = vld [vmem:[#allocation8 + $0xf88] sm:$0xff]
    %v4487 = vld [vmem:[#allocation8 + $0xf90] sm:$0xff]
    %v4488 = vld [vmem:[#allocation8 + $0xf98] sm:$0xff]
    %v4489 = vld [vmem:[#allocation8 + $0xfa0] sm:$0xff]
    %v4490 = vld [vmem:[#allocation8 + $0xfa8] sm:$0xff]
    %v4491 = vld [vmem:[#allocation8 + $0xfb0] sm:$0xff]
    %v4492 = vld [vmem:[#allocation8 + $0xfb8] sm:$0xff]
    %v4493 = vld [vmem:[#allocation8 + $0xfc0] sm:$0xff]
    %v4494 = vld [vmem:[#allocation8 + $0xfc8] sm:$0xff]
    %v4495 = vld [vmem:[#allocation8 + $0xfd0] sm:$0xff]
    %v4496 = vld [vmem:[#allocation8 + $0xfd8] sm:$0xff]
    %v4497 = vld [vmem:[#allocation8 + $0xfe0] sm:$0xff]
    %v4498 = vld [vmem:[#allocation8 + $0xfe8] sm:$0xff]
    %v4499 = vld [vmem:[#allocation8 + $0xff0] sm:$0xff]
    %v4500 = vld [vmem:[#allocation8 + $0xff8] sm:$0xff]
    %v4501 = vld [vmem:[#allocation10] sm:$0xf]
    %v4503 = vlaneseq
    %v4504 = vshrl.u32 %v4503, 7
    %v4505 = vsub.s32 0, %v4504
    %v4506 = vrot.slane %v4501, %v4505
    %v4507 = vlaneseq
    %v4508 = vshrl.u32 %v4507, 7
    %v4509 = vsub.s32 1, %v4508
    %v4510 = vrot.slane %v4501, %v4509
    %v4511 = vlaneseq
    %v4512 = vshrl.u32 %v4511, 7
    %v4513 = vsub.s32 2, %v4512
    %v4514 = vrot.slane %v4501, %v4513
    %v4515 = vlaneseq
    %v4516 = vshrl.u32 %v4515, 7
    %v4517 = vsub.s32 3, %v4516
    %v4518 = vrot.slane %v4501, %v4517
    %v5035 = vunpack.c.l.b16 %v3989
    %v5036 = vunpack.c.h.b16 %v3989
    %v5037 = vunpack.c.l.b16 %v3990
    %v5038 = vunpack.c.h.b16 %v3990
    %v5039 = vunpack.c.l.b16 %v3991
    %v5040 = vunpack.c.h.b16 %v3991
    %v5041 = vunpack.c.l.b16 %v3992
    %v5042 = vunpack.c.h.b16 %v3992
    %v5043 = vunpack.c.l.b16 %v3993
    %v5044 = vunpack.c.h.b16 %v3993
    %v5045 = vunpack.c.l.b16 %v3994
    %v5046 = vunpack.c.h.b16 %v3994
    %v5047 = vunpack.c.l.b16 %v3995
    %v5048 = vunpack.c.h.b16 %v3995
    %v5049 = vunpack.c.l.b16 %v3996
    %v5050 = vunpack.c.h.b16 %v3996
    %v5051 = vunpack.c.l.b16 %v3997
    %v5052 = vunpack.c.h.b16 %v3997
    %v5053 = vunpack.c.l.b16 %v3998
    %v5054 = vunpack.c.h.b16 %v3998
    %v5055 = vunpack.c.l.b16 %v3999
    %v5056 = vunpack.c.h.b16 %v3999
    %v5057 = vunpack.c.l.b16 %v4000
    %v5058 = vunpack.c.h.b16 %v4000
    %v5059 = vunpack.c.l.b16 %v4001
    %v5060 = vunpack.c.h.b16 %v4001
    %v5061 = vunpack.c.l.b16 %v4002
    %v5062 = vunpack.c.h.b16 %v4002
    %v5063 = vunpack.c.l.b16 %v4003
    %v5064 = vunpack.c.h.b16 %v4003
    %v5065 = vunpack.c.l.b16 %v4004
    %v5066 = vunpack.c.h.b16 %v4004
    %v5067 = vunpack.c.l.b16 %v4005
    %v5068 = vunpack.c.h.b16 %v4005
    %v5069 = vunpack.c.l.b16 %v4006
    %v5070 = vunpack.c.h.b16 %v4006
    %v5071 = vunpack.c.l.b16 %v4007
    %v5072 = vunpack.c.h.b16 %v4007
    %v5073 = vunpack.c.l.b16 %v4008
    %v5074 = vunpack.c.h.b16 %v4008
    %v5075 = vunpack.c.l.b16 %v4009
    %v5076 = vunpack.c.h.b16 %v4009
    %v5077 = vunpack.c.l.b16 %v4010
    %v5078 = vunpack.c.h.b16 %v4010
    %v5079 = vunpack.c.l.b16 %v4011
    %v5080 = vunpack.c.h.b16 %v4011
    %v5081 = vunpack.c.l.b16 %v4012
    %v5082 = vunpack.c.h.b16 %v4012
    %v5083 = vunpack.c.l.b16 %v4013
    %v5084 = vunpack.c.h.b16 %v4013
    %v5085 = vunpack.c.l.b16 %v4014
    %v5086 = vunpack.c.h.b16 %v4014
    %v5087 = vunpack.c.l.b16 %v4015
    %v5088 = vunpack.c.h.b16 %v4015
    %v5089 = vunpack.c.l.b16 %v4016
    %v5090 = vunpack.c.h.b16 %v4016
    %v5091 = vunpack.c.l.b16 %v4017
    %v5092 = vunpack.c.h.b16 %v4017
    %v5093 = vunpack.c.l.b16 %v4018
    %v5094 = vunpack.c.h.b16 %v4018
    %v5095 = vunpack.c.l.b16 %v4019
    %v5096 = vunpack.c.h.b16 %v4019
    %v5097 = vunpack.c.l.b16 %v4020
    %v5098 = vunpack.c.h.b16 %v4020
    %v5099 = vunpack.c.l.b16 %v4021
    %v5100 = vunpack.c.h.b16 %v4021
    %v5101 = vunpack.c.l.b16 %v4022
    %v5102 = vunpack.c.h.b16 %v4022
    %v5103 = vunpack.c.l.b16 %v4023
    %v5104 = vunpack.c.h.b16 %v4023
    %v5105 = vunpack.c.l.b16 %v4024
    %v5106 = vunpack.c.h.b16 %v4024
    %v5107 = vunpack.c.l.b16 %v4025
    %v5108 = vunpack.c.h.b16 %v4025
    %v5109 = vunpack.c.l.b16 %v4026
    %v5110 = vunpack.c.h.b16 %v4026
    %v5111 = vunpack.c.l.b16 %v4027
    %v5112 = vunpack.c.h.b16 %v4027
    %v5113 = vunpack.c.l.b16 %v4028
    %v5114 = vunpack.c.h.b16 %v4028
    %v5115 = vunpack.c.l.b16 %v4029
    %v5116 = vunpack.c.h.b16 %v4029
    %v5117 = vunpack.c.l.b16 %v4030
    %v5118 = vunpack.c.h.b16 %v4030
    %v5119 = vunpack.c.l.b16 %v4031
    %v5120 = vunpack.c.h.b16 %v4031
    %v5121 = vunpack.c.l.b16 %v4032
    %v5122 = vunpack.c.h.b16 %v4032
    %v5123 = vunpack.c.l.b16 %v4033
    %v5124 = vunpack.c.h.b16 %v4033
    %v5125 = vunpack.c.l.b16 %v4034
    %v5126 = vunpack.c.h.b16 %v4034
    %v5127 = vunpack.c.l.b16 %v4035
    %v5128 = vunpack.c.h.b16 %v4035
    %v5129 = vunpack.c.l.b16 %v4036
    %v5130 = vunpack.c.h.b16 %v4036
    %v5131 = vunpack.c.l.b16 %v4037
    %v5132 = vunpack.c.h.b16 %v4037
    %v5133 = vunpack.c.l.b16 %v4038
    %v5134 = vunpack.c.h.b16 %v4038
    %v5135 = vunpack.c.l.b16 %v4039
    %v5136 = vunpack.c.h.b16 %v4039
    %v5137 = vunpack.c.l.b16 %v4040
    %v5138 = vunpack.c.h.b16 %v4040
    %v5139 = vunpack.c.l.b16 %v4041
    %v5140 = vunpack.c.h.b16 %v4041
    %v5141 = vunpack.c.l.b16 %v4042
    %v5142 = vunpack.c.h.b16 %v4042
    %v5143 = vunpack.c.l.b16 %v4043
    %v5144 = vunpack.c.h.b16 %v4043
    %v5145 = vunpack.c.l.b16 %v4044
    %v5146 = vunpack.c.h.b16 %v4044
    %v5147 = vunpack.c.l.b16 %v4045
    %v5148 = vunpack.c.h.b16 %v4045
    %v5149 = vunpack.c.l.b16 %v4046
    %v5150 = vunpack.c.h.b16 %v4046
    %v5151 = vunpack.c.l.b16 %v4047
    %v5152 = vunpack.c.h.b16 %v4047
    %v5153 = vunpack.c.l.b16 %v4048
    %v5154 = vunpack.c.h.b16 %v4048
    %v5155 = vunpack.c.l.b16 %v4049
    %v5156 = vunpack.c.h.b16 %v4049
    %v5157 = vunpack.c.l.b16 %v4050
    %v5158 = vunpack.c.h.b16 %v4050
    %v5159 = vunpack.c.l.b16 %v4051
    %v5160 = vunpack.c.h.b16 %v4051
    %v5161 = vunpack.c.l.b16 %v4052
    %v5162 = vunpack.c.h.b16 %v4052
    %v5163 = vunpack.c.l.b16 %v4053
    %v5164 = vunpack.c.h.b16 %v4053
    %v5165 = vunpack.c.l.b16 %v4054
    %v5166 = vunpack.c.h.b16 %v4054
    %v5167 = vunpack.c.l.b16 %v4055
    %v5168 = vunpack.c.h.b16 %v4055
    %v5169 = vunpack.c.l.b16 %v4056
    %v5170 = vunpack.c.h.b16 %v4056
    %v5171 = vunpack.c.l.b16 %v4057
    %v5172 = vunpack.c.h.b16 %v4057
    %v5173 = vunpack.c.l.b16 %v4058
    %v5174 = vunpack.c.h.b16 %v4058
    %v5175 = vunpack.c.l.b16 %v4059
    %v5176 = vunpack.c.h.b16 %v4059
    %v5177 = vunpack.c.l.b16 %v4060
    %v5178 = vunpack.c.h.b16 %v4060
    %v5179 = vunpack.c.l.b16 %v4061
    %v5180 = vunpack.c.h.b16 %v4061
    %v5181 = vunpack.c.l.b16 %v4062
    %v5182 = vunpack.c.h.b16 %v4062
    %v5183 = vunpack.c.l.b16 %v4063
    %v5184 = vunpack.c.h.b16 %v4063
    %v5185 = vunpack.c.l.b16 %v4064
    %v5186 = vunpack.c.h.b16 %v4064
    %v5187 = vunpack.c.l.b16 %v4065
    %v5188 = vunpack.c.h.b16 %v4065
    %v5189 = vunpack.c.l.b16 %v4066
    %v5190 = vunpack.c.h.b16 %v4066
    %v5191 = vunpack.c.l.b16 %v4067
    %v5192 = vunpack.c.h.b16 %v4067
    %v5193 = vunpack.c.l.b16 %v4068
    %v5194 = vunpack.c.h.b16 %v4068
    %v5195 = vunpack.c.l.b16 %v4069
    %v5196 = vunpack.c.h.b16 %v4069
    %v5197 = vunpack.c.l.b16 %v4070
    %v5198 = vunpack.c.h.b16 %v4070
    %v5199 = vunpack.c.l.b16 %v4071
    %v5200 = vunpack.c.h.b16 %v4071
    %v5201 = vunpack.c.l.b16 %v4072
    %v5202 = vunpack.c.h.b16 %v4072
    %v5203 = vunpack.c.l.b16 %v4073
    %v5204 = vunpack.c.h.b16 %v4073
    %v5205 = vunpack.c.l.b16 %v4074
    %v5206 = vunpack.c.h.b16 %v4074
    %v5207 = vunpack.c.l.b16 %v4075
    %v5208 = vunpack.c.h.b16 %v4075
    %v5209 = vunpack.c.l.b16 %v4076
    %v5210 = vunpack.c.h.b16 %v4076
    %v5211 = vunpack.c.l.b16 %v4077
    %v5212 = vunpack.c.h.b16 %v4077
    %v5213 = vunpack.c.l.b16 %v4078
    %v5214 = vunpack.c.h.b16 %v4078
    %v5215 = vunpack.c.l.b16 %v4079
    %v5216 = vunpack.c.h.b16 %v4079
    %v5217 = vunpack.c.l.b16 %v4080
    %v5218 = vunpack.c.h.b16 %v4080
    %v5219 = vunpack.c.l.b16 %v4081
    %v5220 = vunpack.c.h.b16 %v4081
    %v5221 = vunpack.c.l.b16 %v4082
    %v5222 = vunpack.c.h.b16 %v4082
    %v5223 = vunpack.c.l.b16 %v4083
    %v5224 = vunpack.c.h.b16 %v4083
    %v5225 = vunpack.c.l.b16 %v4084
    %v5226 = vunpack.c.h.b16 %v4084
    %v5227 = vunpack.c.l.b16 %v4085
    %v5228 = vunpack.c.h.b16 %v4085
    %v5229 = vunpack.c.l.b16 %v4086
    %v5230 = vunpack.c.h.b16 %v4086
    %v5231 = vunpack.c.l.b16 %v4087
    %v5232 = vunpack.c.h.b16 %v4087
    %v5233 = vunpack.c.l.b16 %v4088
    %v5234 = vunpack.c.h.b16 %v4088
    %v5235 = vunpack.c.l.b16 %v4089
    %v5236 = vunpack.c.h.b16 %v4089
    %v5237 = vunpack.c.l.b16 %v4090
    %v5238 = vunpack.c.h.b16 %v4090
    %v5239 = vunpack.c.l.b16 %v4091
    %v5240 = vunpack.c.h.b16 %v4091
    %v5241 = vunpack.c.l.b16 %v4092
    %v5242 = vunpack.c.h.b16 %v4092
    %v5243 = vunpack.c.l.b16 %v4093
    %v5244 = vunpack.c.h.b16 %v4093
    %v5245 = vunpack.c.l.b16 %v4094
    %v5246 = vunpack.c.h.b16 %v4094
    %v5247 = vunpack.c.l.b16 %v4095
    %v5248 = vunpack.c.h.b16 %v4095
    %v5249 = vunpack.c.l.b16 %v4096
    %v5250 = vunpack.c.h.b16 %v4096
    %v5251 = vunpack.c.l.b16 %v4097
    %v5252 = vunpack.c.h.b16 %v4097
    %v5253 = vunpack.c.l.b16 %v4098
    %v5254 = vunpack.c.h.b16 %v4098
    %v5255 = vunpack.c.l.b16 %v4099
    %v5256 = vunpack.c.h.b16 %v4099
    %v5257 = vunpack.c.l.b16 %v4100
    %v5258 = vunpack.c.h.b16 %v4100
    %v5259 = vunpack.c.l.b16 %v4101
    %v5260 = vunpack.c.h.b16 %v4101
    %v5261 = vunpack.c.l.b16 %v4102
    %v5262 = vunpack.c.h.b16 %v4102
    %v5263 = vunpack.c.l.b16 %v4103
    %v5264 = vunpack.c.h.b16 %v4103
    %v5265 = vunpack.c.l.b16 %v4104
    %v5266 = vunpack.c.h.b16 %v4104
    %v5267 = vunpack.c.l.b16 %v4105
    %v5268 = vunpack.c.h.b16 %v4105
    %v5269 = vunpack.c.l.b16 %v4106
    %v5270 = vunpack.c.h.b16 %v4106
    %v5271 = vunpack.c.l.b16 %v4107
    %v5272 = vunpack.c.h.b16 %v4107
    %v5273 = vunpack.c.l.b16 %v4108
    %v5274 = vunpack.c.h.b16 %v4108
    %v5275 = vunpack.c.l.b16 %v4109
    %v5276 = vunpack.c.h.b16 %v4109
    %v5277 = vunpack.c.l.b16 %v4110
    %v5278 = vunpack.c.h.b16 %v4110
    %v5279 = vunpack.c.l.b16 %v4111
    %v5280 = vunpack.c.h.b16 %v4111
    %v5281 = vunpack.c.l.b16 %v4112
    %v5282 = vunpack.c.h.b16 %v4112
    %v5283 = vunpack.c.l.b16 %v4113
    %v5284 = vunpack.c.h.b16 %v4113
    %v5285 = vunpack.c.l.b16 %v4114
    %v5286 = vunpack.c.h.b16 %v4114
    %v5287 = vunpack.c.l.b16 %v4115
    %v5288 = vunpack.c.h.b16 %v4115
    %v5289 = vunpack.c.l.b16 %v4116
    %v5290 = vunpack.c.h.b16 %v4116
    %v5291 = vunpack.c.l.b16 %v4117
    %v5292 = vunpack.c.h.b16 %v4117
    %v5293 = vunpack.c.l.b16 %v4118
    %v5294 = vunpack.c.h.b16 %v4118
    %v5295 = vunpack.c.l.b16 %v4119
    %v5296 = vunpack.c.h.b16 %v4119
    %v5297 = vunpack.c.l.b16 %v4120
    %v5298 = vunpack.c.h.b16 %v4120
    %v5299 = vunpack.c.l.b16 %v4121
    %v5300 = vunpack.c.h.b16 %v4121
    %v5301 = vunpack.c.l.b16 %v4122
    %v5302 = vunpack.c.h.b16 %v4122
    %v5303 = vunpack.c.l.b16 %v4123
    %v5304 = vunpack.c.h.b16 %v4123
    %v5305 = vunpack.c.l.b16 %v4124
    %v5306 = vunpack.c.h.b16 %v4124
    %v5307 = vunpack.c.l.b16 %v4125
    %v5308 = vunpack.c.h.b16 %v4125
    %v5309 = vunpack.c.l.b16 %v4126
    %v5310 = vunpack.c.h.b16 %v4126
    %v5311 = vunpack.c.l.b16 %v4127
    %v5312 = vunpack.c.h.b16 %v4127
    %v5313 = vunpack.c.l.b16 %v4128
    %v5314 = vunpack.c.h.b16 %v4128
    %v5315 = vunpack.c.l.b16 %v4129
    %v5316 = vunpack.c.h.b16 %v4129
    %v5317 = vunpack.c.l.b16 %v4130
    %v5318 = vunpack.c.h.b16 %v4130
    %v5319 = vunpack.c.l.b16 %v4131
    %v5320 = vunpack.c.h.b16 %v4131
    %v5321 = vunpack.c.l.b16 %v4132
    %v5322 = vunpack.c.h.b16 %v4132
    %v5323 = vunpack.c.l.b16 %v4133
    %v5324 = vunpack.c.h.b16 %v4133
    %v5325 = vunpack.c.l.b16 %v4134
    %v5326 = vunpack.c.h.b16 %v4134
    %v5327 = vunpack.c.l.b16 %v4135
    %v5328 = vunpack.c.h.b16 %v4135
    %v5329 = vunpack.c.l.b16 %v4136
    %v5330 = vunpack.c.h.b16 %v4136
    %v5331 = vunpack.c.l.b16 %v4137
    %v5332 = vunpack.c.h.b16 %v4137
    %v5333 = vunpack.c.l.b16 %v4138
    %v5334 = vunpack.c.h.b16 %v4138
    %v5335 = vunpack.c.l.b16 %v4139
    %v5336 = vunpack.c.h.b16 %v4139
    %v5337 = vunpack.c.l.b16 %v4140
    %v5338 = vunpack.c.h.b16 %v4140
    %v5339 = vunpack.c.l.b16 %v4141
    %v5340 = vunpack.c.h.b16 %v4141
    %v5341 = vunpack.c.l.b16 %v4142
    %v5342 = vunpack.c.h.b16 %v4142
    %v5343 = vunpack.c.l.b16 %v4143
    %v5344 = vunpack.c.h.b16 %v4143
    %v5345 = vunpack.c.l.b16 %v4144
    %v5346 = vunpack.c.h.b16 %v4144
    %v5347 = vunpack.c.l.b16 %v4145
    %v5348 = vunpack.c.h.b16 %v4145
    %v5349 = vunpack.c.l.b16 %v4146
    %v5350 = vunpack.c.h.b16 %v4146
    %v5351 = vunpack.c.l.b16 %v4147
    %v5352 = vunpack.c.h.b16 %v4147
    %v5353 = vunpack.c.l.b16 %v4148
    %v5354 = vunpack.c.h.b16 %v4148
    %v5355 = vunpack.c.l.b16 %v4149
    %v5356 = vunpack.c.h.b16 %v4149
    %v5357 = vunpack.c.l.b16 %v4150
    %v5358 = vunpack.c.h.b16 %v4150
    %v5359 = vunpack.c.l.b16 %v4151
    %v5360 = vunpack.c.h.b16 %v4151
    %v5361 = vunpack.c.l.b16 %v4152
    %v5362 = vunpack.c.h.b16 %v4152
    %v5363 = vunpack.c.l.b16 %v4153
    %v5364 = vunpack.c.h.b16 %v4153
    %v5365 = vunpack.c.l.b16 %v4154
    %v5366 = vunpack.c.h.b16 %v4154
    %v5367 = vunpack.c.l.b16 %v4155
    %v5368 = vunpack.c.h.b16 %v4155
    %v5369 = vunpack.c.l.b16 %v4156
    %v5370 = vunpack.c.h.b16 %v4156
    %v5371 = vunpack.c.l.b16 %v4157
    %v5372 = vunpack.c.h.b16 %v4157
    %v5373 = vunpack.c.l.b16 %v4158
    %v5374 = vunpack.c.h.b16 %v4158
    %v5375 = vunpack.c.l.b16 %v4159
    %v5376 = vunpack.c.h.b16 %v4159
    %v5377 = vunpack.c.l.b16 %v4160
    %v5378 = vunpack.c.h.b16 %v4160
    %v5379 = vunpack.c.l.b16 %v4161
    %v5380 = vunpack.c.h.b16 %v4161
    %v5381 = vunpack.c.l.b16 %v4162
    %v5382 = vunpack.c.h.b16 %v4162
    %v5383 = vunpack.c.l.b16 %v4163
    %v5384 = vunpack.c.h.b16 %v4163
    %v5385 = vunpack.c.l.b16 %v4164
    %v5386 = vunpack.c.h.b16 %v4164
    %v5387 = vunpack.c.l.b16 %v4165
    %v5388 = vunpack.c.h.b16 %v4165
    %v5389 = vunpack.c.l.b16 %v4166
    %v5390 = vunpack.c.h.b16 %v4166
    %v5391 = vunpack.c.l.b16 %v4167
    %v5392 = vunpack.c.h.b16 %v4167
    %v5393 = vunpack.c.l.b16 %v4168
    %v5394 = vunpack.c.h.b16 %v4168
    %v5395 = vunpack.c.l.b16 %v4169
    %v5396 = vunpack.c.h.b16 %v4169
    %v5397 = vunpack.c.l.b16 %v4170
    %v5398 = vunpack.c.h.b16 %v4170
    %v5399 = vunpack.c.l.b16 %v4171
    %v5400 = vunpack.c.h.b16 %v4171
    %v5401 = vunpack.c.l.b16 %v4172
    %v5402 = vunpack.c.h.b16 %v4172
    %v5403 = vunpack.c.l.b16 %v4173
    %v5404 = vunpack.c.h.b16 %v4173
    %v5405 = vunpack.c.l.b16 %v4174
    %v5406 = vunpack.c.h.b16 %v4174
    %v5407 = vunpack.c.l.b16 %v4175
    %v5408 = vunpack.c.h.b16 %v4175
    %v5409 = vunpack.c.l.b16 %v4176
    %v5410 = vunpack.c.h.b16 %v4176
    %v5411 = vunpack.c.l.b16 %v4177
    %v5412 = vunpack.c.h.b16 %v4177
    %v5413 = vunpack.c.l.b16 %v4178
    %v5414 = vunpack.c.h.b16 %v4178
    %v5415 = vunpack.c.l.b16 %v4179
    %v5416 = vunpack.c.h.b16 %v4179
    %v5417 = vunpack.c.l.b16 %v4180
    %v5418 = vunpack.c.h.b16 %v4180
    %v5419 = vunpack.c.l.b16 %v4181
    %v5420 = vunpack.c.h.b16 %v4181
    %v5421 = vunpack.c.l.b16 %v4182
    %v5422 = vunpack.c.h.b16 %v4182
    %v5423 = vunpack.c.l.b16 %v4183
    %v5424 = vunpack.c.h.b16 %v4183
    %v5425 = vunpack.c.l.b16 %v4184
    %v5426 = vunpack.c.h.b16 %v4184
    %v5427 = vunpack.c.l.b16 %v4185
    %v5428 = vunpack.c.h.b16 %v4185
    %v5429 = vunpack.c.l.b16 %v4186
    %v5430 = vunpack.c.h.b16 %v4186
    %v5431 = vunpack.c.l.b16 %v4187
    %v5432 = vunpack.c.h.b16 %v4187
    %v5433 = vunpack.c.l.b16 %v4188
    %v5434 = vunpack.c.h.b16 %v4188
    %v5435 = vunpack.c.l.b16 %v4189
    %v5436 = vunpack.c.h.b16 %v4189
    %v5437 = vunpack.c.l.b16 %v4190
    %v5438 = vunpack.c.h.b16 %v4190
    %v5439 = vunpack.c.l.b16 %v4191
    %v5440 = vunpack.c.h.b16 %v4191
    %v5441 = vunpack.c.l.b16 %v4192
    %v5442 = vunpack.c.h.b16 %v4192
    %v5443 = vunpack.c.l.b16 %v4193
    %v5444 = vunpack.c.h.b16 %v4193
    %v5445 = vunpack.c.l.b16 %v4194
    %v5446 = vunpack.c.h.b16 %v4194
    %v5447 = vunpack.c.l.b16 %v4195
    %v5448 = vunpack.c.h.b16 %v4195
    %v5449 = vunpack.c.l.b16 %v4196
    %v5450 = vunpack.c.h.b16 %v4196
    %v5451 = vunpack.c.l.b16 %v4197
    %v5452 = vunpack.c.h.b16 %v4197
    %v5453 = vunpack.c.l.b16 %v4198
    %v5454 = vunpack.c.h.b16 %v4198
    %v5455 = vunpack.c.l.b16 %v4199
    %v5456 = vunpack.c.h.b16 %v4199
    %v5457 = vunpack.c.l.b16 %v4200
    %v5458 = vunpack.c.h.b16 %v4200
    %v5459 = vunpack.c.l.b16 %v4201
    %v5460 = vunpack.c.h.b16 %v4201
    %v5461 = vunpack.c.l.b16 %v4202
    %v5462 = vunpack.c.h.b16 %v4202
    %v5463 = vunpack.c.l.b16 %v4203
    %v5464 = vunpack.c.h.b16 %v4203
    %v5465 = vunpack.c.l.b16 %v4204
    %v5466 = vunpack.c.h.b16 %v4204
    %v5467 = vunpack.c.l.b16 %v4205
    %v5468 = vunpack.c.h.b16 %v4205
    %v5469 = vunpack.c.l.b16 %v4206
    %v5470 = vunpack.c.h.b16 %v4206
    %v5471 = vunpack.c.l.b16 %v4207
    %v5472 = vunpack.c.h.b16 %v4207
    %v5473 = vunpack.c.l.b16 %v4208
    %v5474 = vunpack.c.h.b16 %v4208
    %v5475 = vunpack.c.l.b16 %v4209
    %v5476 = vunpack.c.h.b16 %v4209
    %v5477 = vunpack.c.l.b16 %v4210
    %v5478 = vunpack.c.h.b16 %v4210
    %v5479 = vunpack.c.l.b16 %v4211
    %v5480 = vunpack.c.h.b16 %v4211
    %v5481 = vunpack.c.l.b16 %v4212
    %v5482 = vunpack.c.h.b16 %v4212
    %v5483 = vunpack.c.l.b16 %v4213
    %v5484 = vunpack.c.h.b16 %v4213
    %v5485 = vunpack.c.l.b16 %v4214
    %v5486 = vunpack.c.h.b16 %v4214
    %v5487 = vunpack.c.l.b16 %v4215
    %v5488 = vunpack.c.h.b16 %v4215
    %v5489 = vunpack.c.l.b16 %v4216
    %v5490 = vunpack.c.h.b16 %v4216
    %v5491 = vunpack.c.l.b16 %v4217
    %v5492 = vunpack.c.h.b16 %v4217
    %v5493 = vunpack.c.l.b16 %v4218
    %v5494 = vunpack.c.h.b16 %v4218
    %v5495 = vunpack.c.l.b16 %v4219
    %v5496 = vunpack.c.h.b16 %v4219
    %v5497 = vunpack.c.l.b16 %v4220
    %v5498 = vunpack.c.h.b16 %v4220
    %v5499 = vunpack.c.l.b16 %v4221
    %v5500 = vunpack.c.h.b16 %v4221
    %v5501 = vunpack.c.l.b16 %v4222
    %v5502 = vunpack.c.h.b16 %v4222
    %v5503 = vunpack.c.l.b16 %v4223
    %v5504 = vunpack.c.h.b16 %v4223
    %v5505 = vunpack.c.l.b16 %v4224
    %v5506 = vunpack.c.h.b16 %v4224
    %v5507 = vunpack.c.l.b16 %v4225
    %v5508 = vunpack.c.h.b16 %v4225
    %v5509 = vunpack.c.l.b16 %v4226
    %v5510 = vunpack.c.h.b16 %v4226
    %v5511 = vunpack.c.l.b16 %v4227
    %v5512 = vunpack.c.h.b16 %v4227
    %v5513 = vunpack.c.l.b16 %v4228
    %v5514 = vunpack.c.h.b16 %v4228
    %v5515 = vunpack.c.l.b16 %v4229
    %v5516 = vunpack.c.h.b16 %v4229
    %v5517 = vunpack.c.l.b16 %v4230
    %v5518 = vunpack.c.h.b16 %v4230
    %v5519 = vunpack.c.l.b16 %v4231
    %v5520 = vunpack.c.h.b16 %v4231
    %v5521 = vunpack.c.l.b16 %v4232
    %v5522 = vunpack.c.h.b16 %v4232
    %v5523 = vunpack.c.l.b16 %v4233
    %v5524 = vunpack.c.h.b16 %v4233
    %v5525 = vunpack.c.l.b16 %v4234
    %v5526 = vunpack.c.h.b16 %v4234
    %v5527 = vunpack.c.l.b16 %v4235
    %v5528 = vunpack.c.h.b16 %v4235
    %v5529 = vunpack.c.l.b16 %v4236
    %v5530 = vunpack.c.h.b16 %v4236
    %v5531 = vunpack.c.l.b16 %v4237
    %v5532 = vunpack.c.h.b16 %v4237
    %v5533 = vunpack.c.l.b16 %v4238
    %v5534 = vunpack.c.h.b16 %v4238
    %v5535 = vunpack.c.l.b16 %v4239
    %v5536 = vunpack.c.h.b16 %v4239
    %v5537 = vunpack.c.l.b16 %v4240
    %v5538 = vunpack.c.h.b16 %v4240
    %v5539 = vunpack.c.l.b16 %v4241
    %v5540 = vunpack.c.h.b16 %v4241
    %v5541 = vunpack.c.l.b16 %v4242
    %v5542 = vunpack.c.h.b16 %v4242
    %v5543 = vunpack.c.l.b16 %v4243
    %v5544 = vunpack.c.h.b16 %v4243
    %v5545 = vunpack.c.l.b16 %v4244
    %v5546 = vunpack.c.h.b16 %v4244
    %v5547 = vunpack.c.l.b16 %v4245
    %v5548 = vunpack.c.h.b16 %v4245
    %v5549 = vunpack.c.l.b16 %v4246
    %v5550 = vunpack.c.h.b16 %v4246
    %v5551 = vunpack.c.l.b16 %v4247
    %v5552 = vunpack.c.h.b16 %v4247
    %v5553 = vunpack.c.l.b16 %v4248
    %v5554 = vunpack.c.h.b16 %v4248
    %v5555 = vunpack.c.l.b16 %v4249
    %v5556 = vunpack.c.h.b16 %v4249
    %v5557 = vunpack.c.l.b16 %v4250
    %v5558 = vunpack.c.h.b16 %v4250
    %v5559 = vunpack.c.l.b16 %v4251
    %v5560 = vunpack.c.h.b16 %v4251
    %v5561 = vunpack.c.l.b16 %v4252
    %v5562 = vunpack.c.h.b16 %v4252
    %v5563 = vunpack.c.l.b16 %v4253
    %v5564 = vunpack.c.h.b16 %v4253
    %v5565 = vunpack.c.l.b16 %v4254
    %v5566 = vunpack.c.h.b16 %v4254
    %v5567 = vunpack.c.l.b16 %v4255
    %v5568 = vunpack.c.h.b16 %v4255
    %v5569 = vunpack.c.l.b16 %v4256
    %v5570 = vunpack.c.h.b16 %v4256
    %v5571 = vunpack.c.l.b16 %v4257
    %v5572 = vunpack.c.h.b16 %v4257
    %v5573 = vunpack.c.l.b16 %v4258
    %v5574 = vunpack.c.h.b16 %v4258
    %v5575 = vunpack.c.l.b16 %v4259
    %v5576 = vunpack.c.h.b16 %v4259
    %v5577 = vunpack.c.l.b16 %v4260
    %v5578 = vunpack.c.h.b16 %v4260
    %v5579 = vunpack.c.l.b16 %v4261
    %v5580 = vunpack.c.h.b16 %v4261
    %v5581 = vunpack.c.l.b16 %v4262
    %v5582 = vunpack.c.h.b16 %v4262
    %v5583 = vunpack.c.l.b16 %v4263
    %v5584 = vunpack.c.h.b16 %v4263
    %v5585 = vunpack.c.l.b16 %v4264
    %v5586 = vunpack.c.h.b16 %v4264
    %v5587 = vunpack.c.l.b16 %v4265
    %v5588 = vunpack.c.h.b16 %v4265
    %v5589 = vunpack.c.l.b16 %v4266
    %v5590 = vunpack.c.h.b16 %v4266
    %v5591 = vunpack.c.l.b16 %v4267
    %v5592 = vunpack.c.h.b16 %v4267
    %v5593 = vunpack.c.l.b16 %v4268
    %v5594 = vunpack.c.h.b16 %v4268
    %v5595 = vunpack.c.l.b16 %v4269
    %v5596 = vunpack.c.h.b16 %v4269
    %v5597 = vunpack.c.l.b16 %v4270
    %v5598 = vunpack.c.h.b16 %v4270
    %v5599 = vunpack.c.l.b16 %v4271
    %v5600 = vunpack.c.h.b16 %v4271
    %v5601 = vunpack.c.l.b16 %v4272
    %v5602 = vunpack.c.h.b16 %v4272
    %v5603 = vunpack.c.l.b16 %v4273
    %v5604 = vunpack.c.h.b16 %v4273
    %v5605 = vunpack.c.l.b16 %v4274
    %v5606 = vunpack.c.h.b16 %v4274
    %v5607 = vunpack.c.l.b16 %v4275
    %v5608 = vunpack.c.h.b16 %v4275
    %v5609 = vunpack.c.l.b16 %v4276
    %v5610 = vunpack.c.h.b16 %v4276
    %v5611 = vunpack.c.l.b16 %v4277
    %v5612 = vunpack.c.h.b16 %v4277
    %v5613 = vunpack.c.l.b16 %v4278
    %v5614 = vunpack.c.h.b16 %v4278
    %v5615 = vunpack.c.l.b16 %v4279
    %v5616 = vunpack.c.h.b16 %v4279
    %v5617 = vunpack.c.l.b16 %v4280
    %v5618 = vunpack.c.h.b16 %v4280
    %v5619 = vunpack.c.l.b16 %v4281
    %v5620 = vunpack.c.h.b16 %v4281
    %v5621 = vunpack.c.l.b16 %v4282
    %v5622 = vunpack.c.h.b16 %v4282
    %v5623 = vunpack.c.l.b16 %v4283
    %v5624 = vunpack.c.h.b16 %v4283
    %v5625 = vunpack.c.l.b16 %v4284
    %v5626 = vunpack.c.h.b16 %v4284
    %v5627 = vunpack.c.l.b16 %v4285
    %v5628 = vunpack.c.h.b16 %v4285
    %v5629 = vunpack.c.l.b16 %v4286
    %v5630 = vunpack.c.h.b16 %v4286
    %v5631 = vunpack.c.l.b16 %v4287
    %v5632 = vunpack.c.h.b16 %v4287
    %v5633 = vunpack.c.l.b16 %v4288
    %v5634 = vunpack.c.h.b16 %v4288
    %v5635 = vunpack.c.l.b16 %v4289
    %v5636 = vunpack.c.h.b16 %v4289
    %v5637 = vunpack.c.l.b16 %v4290
    %v5638 = vunpack.c.h.b16 %v4290
    %v5639 = vunpack.c.l.b16 %v4291
    %v5640 = vunpack.c.h.b16 %v4291
    %v5641 = vunpack.c.l.b16 %v4292
    %v5642 = vunpack.c.h.b16 %v4292
    %v5643 = vunpack.c.l.b16 %v4293
    %v5644 = vunpack.c.h.b16 %v4293
    %v5645 = vunpack.c.l.b16 %v4294
    %v5646 = vunpack.c.h.b16 %v4294
    %v5647 = vunpack.c.l.b16 %v4295
    %v5648 = vunpack.c.h.b16 %v4295
    %v5649 = vunpack.c.l.b16 %v4296
    %v5650 = vunpack.c.h.b16 %v4296
    %v5651 = vunpack.c.l.b16 %v4297
    %v5652 = vunpack.c.h.b16 %v4297
    %v5653 = vunpack.c.l.b16 %v4298
    %v5654 = vunpack.c.h.b16 %v4298
    %v5655 = vunpack.c.l.b16 %v4299
    %v5656 = vunpack.c.h.b16 %v4299
    %v5657 = vunpack.c.l.b16 %v4300
    %v5658 = vunpack.c.h.b16 %v4300
    %v5659 = vunpack.c.l.b16 %v4301
    %v5660 = vunpack.c.h.b16 %v4301
    %v5661 = vunpack.c.l.b16 %v4302
    %v5662 = vunpack.c.h.b16 %v4302
    %v5663 = vunpack.c.l.b16 %v4303
    %v5664 = vunpack.c.h.b16 %v4303
    %v5665 = vunpack.c.l.b16 %v4304
    %v5666 = vunpack.c.h.b16 %v4304
    %v5667 = vunpack.c.l.b16 %v4305
    %v5668 = vunpack.c.h.b16 %v4305
    %v5669 = vunpack.c.l.b16 %v4306
    %v5670 = vunpack.c.h.b16 %v4306
    %v5671 = vunpack.c.l.b16 %v4307
    %v5672 = vunpack.c.h.b16 %v4307
    %v5673 = vunpack.c.l.b16 %v4308
    %v5674 = vunpack.c.h.b16 %v4308
    %v5675 = vunpack.c.l.b16 %v4309
    %v5676 = vunpack.c.h.b16 %v4309
    %v5677 = vunpack.c.l.b16 %v4310
    %v5678 = vunpack.c.h.b16 %v4310
    %v5679 = vunpack.c.l.b16 %v4311
    %v5680 = vunpack.c.h.b16 %v4311
    %v5681 = vunpack.c.l.b16 %v4312
    %v5682 = vunpack.c.h.b16 %v4312
    %v5683 = vunpack.c.l.b16 %v4313
    %v5684 = vunpack.c.h.b16 %v4313
    %v5685 = vunpack.c.l.b16 %v4314
    %v5686 = vunpack.c.h.b16 %v4314
    %v5687 = vunpack.c.l.b16 %v4315
    %v5688 = vunpack.c.h.b16 %v4315
    %v5689 = vunpack.c.l.b16 %v4316
    %v5690 = vunpack.c.h.b16 %v4316
    %v5691 = vunpack.c.l.b16 %v4317
    %v5692 = vunpack.c.h.b16 %v4317
    %v5693 = vunpack.c.l.b16 %v4318
    %v5694 = vunpack.c.h.b16 %v4318
    %v5695 = vunpack.c.l.b16 %v4319
    %v5696 = vunpack.c.h.b16 %v4319
    %v5697 = vunpack.c.l.b16 %v4320
    %v5698 = vunpack.c.h.b16 %v4320
    %v5699 = vunpack.c.l.b16 %v4321
    %v5700 = vunpack.c.h.b16 %v4321
    %v5701 = vunpack.c.l.b16 %v4322
    %v5702 = vunpack.c.h.b16 %v4322
    %v5703 = vunpack.c.l.b16 %v4323
    %v5704 = vunpack.c.h.b16 %v4323
    %v5705 = vunpack.c.l.b16 %v4324
    %v5706 = vunpack.c.h.b16 %v4324
    %v5707 = vunpack.c.l.b16 %v4325
    %v5708 = vunpack.c.h.b16 %v4325
    %v5709 = vunpack.c.l.b16 %v4326
    %v5710 = vunpack.c.h.b16 %v4326
    %v5711 = vunpack.c.l.b16 %v4327
    %v5712 = vunpack.c.h.b16 %v4327
    %v5713 = vunpack.c.l.b16 %v4328
    %v5714 = vunpack.c.h.b16 %v4328
    %v5715 = vunpack.c.l.b16 %v4329
    %v5716 = vunpack.c.h.b16 %v4329
    %v5717 = vunpack.c.l.b16 %v4330
    %v5718 = vunpack.c.h.b16 %v4330
    %v5719 = vunpack.c.l.b16 %v4331
    %v5720 = vunpack.c.h.b16 %v4331
    %v5721 = vunpack.c.l.b16 %v4332
    %v5722 = vunpack.c.h.b16 %v4332
    %v5723 = vunpack.c.l.b16 %v4333
    %v5724 = vunpack.c.h.b16 %v4333
    %v5725 = vunpack.c.l.b16 %v4334
    %v5726 = vunpack.c.h.b16 %v4334
    %v5727 = vunpack.c.l.b16 %v4335
    %v5728 = vunpack.c.h.b16 %v4335
    %v5729 = vunpack.c.l.b16 %v4336
    %v5730 = vunpack.c.h.b16 %v4336
    %v5731 = vunpack.c.l.b16 %v4337
    %v5732 = vunpack.c.h.b16 %v4337
    %v5733 = vunpack.c.l.b16 %v4338
    %v5734 = vunpack.c.h.b16 %v4338
    %v5735 = vunpack.c.l.b16 %v4339
    %v5736 = vunpack.c.h.b16 %v4339
    %v5737 = vunpack.c.l.b16 %v4340
    %v5738 = vunpack.c.h.b16 %v4340
    %v5739 = vunpack.c.l.b16 %v4341
    %v5740 = vunpack.c.h.b16 %v4341
    %v5741 = vunpack.c.l.b16 %v4342
    %v5742 = vunpack.c.h.b16 %v4342
    %v5743 = vunpack.c.l.b16 %v4343
    %v5744 = vunpack.c.h.b16 %v4343
    %v5745 = vunpack.c.l.b16 %v4344
    %v5746 = vunpack.c.h.b16 %v4344
    %v5747 = vunpack.c.l.b16 %v4345
    %v5748 = vunpack.c.h.b16 %v4345
    %v5749 = vunpack.c.l.b16 %v4346
    %v5750 = vunpack.c.h.b16 %v4346
    %v5751 = vunpack.c.l.b16 %v4347
    %v5752 = vunpack.c.h.b16 %v4347
    %v5753 = vunpack.c.l.b16 %v4348
    %v5754 = vunpack.c.h.b16 %v4348
    %v5755 = vunpack.c.l.b16 %v4349
    %v5756 = vunpack.c.h.b16 %v4349
    %v5757 = vunpack.c.l.b16 %v4350
    %v5758 = vunpack.c.h.b16 %v4350
    %v5759 = vunpack.c.l.b16 %v4351
    %v5760 = vunpack.c.h.b16 %v4351
    %v5761 = vunpack.c.l.b16 %v4352
    %v5762 = vunpack.c.h.b16 %v4352
    %v5763 = vunpack.c.l.b16 %v4353
    %v5764 = vunpack.c.h.b16 %v4353
    %v5765 = vunpack.c.l.b16 %v4354
    %v5766 = vunpack.c.h.b16 %v4354
    %v5767 = vunpack.c.l.b16 %v4355
    %v5768 = vunpack.c.h.b16 %v4355
    %v5769 = vunpack.c.l.b16 %v4356
    %v5770 = vunpack.c.h.b16 %v4356
    %v5771 = vunpack.c.l.b16 %v4357
    %v5772 = vunpack.c.h.b16 %v4357
    %v5773 = vunpack.c.l.b16 %v4358
    %v5774 = vunpack.c.h.b16 %v4358
    %v5775 = vunpack.c.l.b16 %v4359
    %v5776 = vunpack.c.h.b16 %v4359
    %v5777 = vunpack.c.l.b16 %v4360
    %v5778 = vunpack.c.h.b16 %v4360
    %v5779 = vunpack.c.l.b16 %v4361
    %v5780 = vunpack.c.h.b16 %v4361
    %v5781 = vunpack.c.l.b16 %v4362
    %v5782 = vunpack.c.h.b16 %v4362
    %v5783 = vunpack.c.l.b16 %v4363
    %v5784 = vunpack.c.h.b16 %v4363
    %v5785 = vunpack.c.l.b16 %v4364
    %v5786 = vunpack.c.h.b16 %v4364
    %v5787 = vunpack.c.l.b16 %v4365
    %v5788 = vunpack.c.h.b16 %v4365
    %v5789 = vunpack.c.l.b16 %v4366
    %v5790 = vunpack.c.h.b16 %v4366
    %v5791 = vunpack.c.l.b16 %v4367
    %v5792 = vunpack.c.h.b16 %v4367
    %v5793 = vunpack.c.l.b16 %v4368
    %v5794 = vunpack.c.h.b16 %v4368
    %v5795 = vunpack.c.l.b16 %v4369
    %v5796 = vunpack.c.h.b16 %v4369
    %v5797 = vunpack.c.l.b16 %v4370
    %v5798 = vunpack.c.h.b16 %v4370
    %v5799 = vunpack.c.l.b16 %v4371
    %v5800 = vunpack.c.h.b16 %v4371
    %v5801 = vunpack.c.l.b16 %v4372
    %v5802 = vunpack.c.h.b16 %v4372
    %v5803 = vunpack.c.l.b16 %v4373
    %v5804 = vunpack.c.h.b16 %v4373
    %v5805 = vunpack.c.l.b16 %v4374
    %v5806 = vunpack.c.h.b16 %v4374
    %v5807 = vunpack.c.l.b16 %v4375
    %v5808 = vunpack.c.h.b16 %v4375
    %v5809 = vunpack.c.l.b16 %v4376
    %v5810 = vunpack.c.h.b16 %v4376
    %v5811 = vunpack.c.l.b16 %v4377
    %v5812 = vunpack.c.h.b16 %v4377
    %v5813 = vunpack.c.l.b16 %v4378
    %v5814 = vunpack.c.h.b16 %v4378
    %v5815 = vunpack.c.l.b16 %v4379
    %v5816 = vunpack.c.h.b16 %v4379
    %v5817 = vunpack.c.l.b16 %v4380
    %v5818 = vunpack.c.h.b16 %v4380
    %v5819 = vunpack.c.l.b16 %v4381
    %v5820 = vunpack.c.h.b16 %v4381
    %v5821 = vunpack.c.l.b16 %v4382
    %v5822 = vunpack.c.h.b16 %v4382
    %v5823 = vunpack.c.l.b16 %v4383
    %v5824 = vunpack.c.h.b16 %v4383
    %v5825 = vunpack.c.l.b16 %v4384
    %v5826 = vunpack.c.h.b16 %v4384
    %v5827 = vunpack.c.l.b16 %v4385
    %v5828 = vunpack.c.h.b16 %v4385
    %v5829 = vunpack.c.l.b16 %v4386
    %v5830 = vunpack.c.h.b16 %v4386
    %v5831 = vunpack.c.l.b16 %v4387
    %v5832 = vunpack.c.h.b16 %v4387
    %v5833 = vunpack.c.l.b16 %v4388
    %v5834 = vunpack.c.h.b16 %v4388
    %v5835 = vunpack.c.l.b16 %v4389
    %v5836 = vunpack.c.h.b16 %v4389
    %v5837 = vunpack.c.l.b16 %v4390
    %v5838 = vunpack.c.h.b16 %v4390
    %v5839 = vunpack.c.l.b16 %v4391
    %v5840 = vunpack.c.h.b16 %v4391
    %v5841 = vunpack.c.l.b16 %v4392
    %v5842 = vunpack.c.h.b16 %v4392
    %v5843 = vunpack.c.l.b16 %v4393
    %v5844 = vunpack.c.h.b16 %v4393
    %v5845 = vunpack.c.l.b16 %v4394
    %v5846 = vunpack.c.h.b16 %v4394
    %v5847 = vunpack.c.l.b16 %v4395
    %v5848 = vunpack.c.h.b16 %v4395
    %v5849 = vunpack.c.l.b16 %v4396
    %v5850 = vunpack.c.h.b16 %v4396
    %v5851 = vunpack.c.l.b16 %v4397
    %v5852 = vunpack.c.h.b16 %v4397
    %v5853 = vunpack.c.l.b16 %v4398
    %v5854 = vunpack.c.h.b16 %v4398
    %v5855 = vunpack.c.l.b16 %v4399
    %v5856 = vunpack.c.h.b16 %v4399
    %v5857 = vunpack.c.l.b16 %v4400
    %v5858 = vunpack.c.h.b16 %v4400
    %v5859 = vunpack.c.l.b16 %v4401
    %v5860 = vunpack.c.h.b16 %v4401
    %v5861 = vunpack.c.l.b16 %v4402
    %v5862 = vunpack.c.h.b16 %v4402
    %v5863 = vunpack.c.l.b16 %v4403
    %v5864 = vunpack.c.h.b16 %v4403
    %v5865 = vunpack.c.l.b16 %v4404
    %v5866 = vunpack.c.h.b16 %v4404
    %v5867 = vunpack.c.l.b16 %v4405
    %v5868 = vunpack.c.h.b16 %v4405
    %v5869 = vunpack.c.l.b16 %v4406
    %v5870 = vunpack.c.h.b16 %v4406
    %v5871 = vunpack.c.l.b16 %v4407
    %v5872 = vunpack.c.h.b16 %v4407
    %v5873 = vunpack.c.l.b16 %v4408
    %v5874 = vunpack.c.h.b16 %v4408
    %v5875 = vunpack.c.l.b16 %v4409
    %v5876 = vunpack.c.h.b16 %v4409
    %v5877 = vunpack.c.l.b16 %v4410
    %v5878 = vunpack.c.h.b16 %v4410
    %v5879 = vunpack.c.l.b16 %v4411
    %v5880 = vunpack.c.h.b16 %v4411
    %v5881 = vunpack.c.l.b16 %v4412
    %v5882 = vunpack.c.h.b16 %v4412
    %v5883 = vunpack.c.l.b16 %v4413
    %v5884 = vunpack.c.h.b16 %v4413
    %v5885 = vunpack.c.l.b16 %v4414
    %v5886 = vunpack.c.h.b16 %v4414
    %v5887 = vunpack.c.l.b16 %v4415
    %v5888 = vunpack.c.h.b16 %v4415
    %v5889 = vunpack.c.l.b16 %v4416
    %v5890 = vunpack.c.h.b16 %v4416
    %v5891 = vunpack.c.l.b16 %v4417
    %v5892 = vunpack.c.h.b16 %v4417
    %v5893 = vunpack.c.l.b16 %v4418
    %v5894 = vunpack.c.h.b16 %v4418
    %v5895 = vunpack.c.l.b16 %v4419
    %v5896 = vunpack.c.h.b16 %v4419
    %v5897 = vunpack.c.l.b16 %v4420
    %v5898 = vunpack.c.h.b16 %v4420
    %v5899 = vunpack.c.l.b16 %v4421
    %v5900 = vunpack.c.h.b16 %v4421
    %v5901 = vunpack.c.l.b16 %v4422
    %v5902 = vunpack.c.h.b16 %v4422
    %v5903 = vunpack.c.l.b16 %v4423
    %v5904 = vunpack.c.h.b16 %v4423
    %v5905 = vunpack.c.l.b16 %v4424
    %v5906 = vunpack.c.h.b16 %v4424
    %v5907 = vunpack.c.l.b16 %v4425
    %v5908 = vunpack.c.h.b16 %v4425
    %v5909 = vunpack.c.l.b16 %v4426
    %v5910 = vunpack.c.h.b16 %v4426
    %v5911 = vunpack.c.l.b16 %v4427
    %v5912 = vunpack.c.h.b16 %v4427
    %v5913 = vunpack.c.l.b16 %v4428
    %v5914 = vunpack.c.h.b16 %v4428
    %v5915 = vunpack.c.l.b16 %v4429
    %v5916 = vunpack.c.h.b16 %v4429
    %v5917 = vunpack.c.l.b16 %v4430
    %v5918 = vunpack.c.h.b16 %v4430
    %v5919 = vunpack.c.l.b16 %v4431
    %v5920 = vunpack.c.h.b16 %v4431
    %v5921 = vunpack.c.l.b16 %v4432
    %v5922 = vunpack.c.h.b16 %v4432
    %v5923 = vunpack.c.l.b16 %v4433
    %v5924 = vunpack.c.h.b16 %v4433
    %v5925 = vunpack.c.l.b16 %v4434
    %v5926 = vunpack.c.h.b16 %v4434
    %v5927 = vunpack.c.l.b16 %v4435
    %v5928 = vunpack.c.h.b16 %v4435
    %v5929 = vunpack.c.l.b16 %v4436
    %v5930 = vunpack.c.h.b16 %v4436
    %v5931 = vunpack.c.l.b16 %v4437
    %v5932 = vunpack.c.h.b16 %v4437
    %v5933 = vunpack.c.l.b16 %v4438
    %v5934 = vunpack.c.h.b16 %v4438
    %v5935 = vunpack.c.l.b16 %v4439
    %v5936 = vunpack.c.h.b16 %v4439
    %v5937 = vunpack.c.l.b16 %v4440
    %v5938 = vunpack.c.h.b16 %v4440
    %v5939 = vunpack.c.l.b16 %v4441
    %v5940 = vunpack.c.h.b16 %v4441
    %v5941 = vunpack.c.l.b16 %v4442
    %v5942 = vunpack.c.h.b16 %v4442
    %v5943 = vunpack.c.l.b16 %v4443
    %v5944 = vunpack.c.h.b16 %v4443
    %v5945 = vunpack.c.l.b16 %v4444
    %v5946 = vunpack.c.h.b16 %v4444
    %v5947 = vunpack.c.l.b16 %v4445
    %v5948 = vunpack.c.h.b16 %v4445
    %v5949 = vunpack.c.l.b16 %v4446
    %v5950 = vunpack.c.h.b16 %v4446
    %v5951 = vunpack.c.l.b16 %v4447
    %v5952 = vunpack.c.h.b16 %v4447
    %v5953 = vunpack.c.l.b16 %v4448
    %v5954 = vunpack.c.h.b16 %v4448
    %v5955 = vunpack.c.l.b16 %v4449
    %v5956 = vunpack.c.h.b16 %v4449
    %v5957 = vunpack.c.l.b16 %v4450
    %v5958 = vunpack.c.h.b16 %v4450
    %v5959 = vunpack.c.l.b16 %v4451
    %v5960 = vunpack.c.h.b16 %v4451
    %v5961 = vunpack.c.l.b16 %v4452
    %v5962 = vunpack.c.h.b16 %v4452
    %v5963 = vunpack.c.l.b16 %v4453
    %v5964 = vunpack.c.h.b16 %v4453
    %v5965 = vunpack.c.l.b16 %v4454
    %v5966 = vunpack.c.h.b16 %v4454
    %v5967 = vunpack.c.l.b16 %v4455
    %v5968 = vunpack.c.h.b16 %v4455
    %v5969 = vunpack.c.l.b16 %v4456
    %v5970 = vunpack.c.h.b16 %v4456
    %v5971 = vunpack.c.l.b16 %v4457
    %v5972 = vunpack.c.h.b16 %v4457
    %v5973 = vunpack.c.l.b16 %v4458
    %v5974 = vunpack.c.h.b16 %v4458
    %v5975 = vunpack.c.l.b16 %v4459
    %v5976 = vunpack.c.h.b16 %v4459
    %v5977 = vunpack.c.l.b16 %v4460
    %v5978 = vunpack.c.h.b16 %v4460
    %v5979 = vunpack.c.l.b16 %v4461
    %v5980 = vunpack.c.h.b16 %v4461
    %v5981 = vunpack.c.l.b16 %v4462
    %v5982 = vunpack.c.h.b16 %v4462
    %v5983 = vunpack.c.l.b16 %v4463
    %v5984 = vunpack.c.h.b16 %v4463
    %v5985 = vunpack.c.l.b16 %v4464
    %v5986 = vunpack.c.h.b16 %v4464
    %v5987 = vunpack.c.l.b16 %v4465
    %v5988 = vunpack.c.h.b16 %v4465
    %v5989 = vunpack.c.l.b16 %v4466
    %v5990 = vunpack.c.h.b16 %v4466
    %v5991 = vunpack.c.l.b16 %v4467
    %v5992 = vunpack.c.h.b16 %v4467
    %v5993 = vunpack.c.l.b16 %v4468
    %v5994 = vunpack.c.h.b16 %v4468
    %v5995 = vunpack.c.l.b16 %v4469
    %v5996 = vunpack.c.h.b16 %v4469
    %v5997 = vunpack.c.l.b16 %v4470
    %v5998 = vunpack.c.h.b16 %v4470
    %v5999 = vunpack.c.l.b16 %v4471
    %v6000 = vunpack.c.h.b16 %v4471
    %v6001 = vunpack.c.l.b16 %v4472
    %v6002 = vunpack.c.h.b16 %v4472
    %v6003 = vunpack.c.l.b16 %v4473
    %v6004 = vunpack.c.h.b16 %v4473
    %v6005 = vunpack.c.l.b16 %v4474
    %v6006 = vunpack.c.h.b16 %v4474
    %v6007 = vunpack.c.l.b16 %v4475
    %v6008 = vunpack.c.h.b16 %v4475
    %v6009 = vunpack.c.l.b16 %v4476
    %v6010 = vunpack.c.h.b16 %v4476
    %v6011 = vunpack.c.l.b16 %v4477
    %v6012 = vunpack.c.h.b16 %v4477
    %v6013 = vunpack.c.l.b16 %v4478
    %v6014 = vunpack.c.h.b16 %v4478
    %v6015 = vunpack.c.l.b16 %v4479
    %v6016 = vunpack.c.h.b16 %v4479
    %v6017 = vunpack.c.l.b16 %v4480
    %v6018 = vunpack.c.h.b16 %v4480
    %v6019 = vunpack.c.l.b16 %v4481
    %v6020 = vunpack.c.h.b16 %v4481
    %v6021 = vunpack.c.l.b16 %v4482
    %v6022 = vunpack.c.h.b16 %v4482
    %v6023 = vunpack.c.l.b16 %v4483
    %v6024 = vunpack.c.h.b16 %v4483
    %v6025 = vunpack.c.l.b16 %v4484
    %v6026 = vunpack.c.h.b16 %v4484
    %v6027 = vunpack.c.l.b16 %v4485
    %v6028 = vunpack.c.h.b16 %v4485
    %v6029 = vunpack.c.l.b16 %v4486
    %v6030 = vunpack.c.h.b16 %v4486
    %v6031 = vunpack.c.l.b16 %v4487
    %v6032 = vunpack.c.h.b16 %v4487
    %v6033 = vunpack.c.l.b16 %v4488
    %v6034 = vunpack.c.h.b16 %v4488
    %v6035 = vunpack.c.l.b16 %v4489
    %v6036 = vunpack.c.h.b16 %v4489
    %v6037 = vunpack.c.l.b16 %v4490
    %v6038 = vunpack.c.h.b16 %v4490
    %v6039 = vunpack.c.l.b16 %v4491
    %v6040 = vunpack.c.h.b16 %v4491
    %v6041 = vunpack.c.l.b16 %v4492
    %v6042 = vunpack.c.h.b16 %v4492
    %v6043 = vunpack.c.l.b16 %v4493
    %v6044 = vunpack.c.h.b16 %v4493
    %v6045 = vunpack.c.l.b16 %v4494
    %v6046 = vunpack.c.h.b16 %v4494
    %v6047 = vunpack.c.l.b16 %v4495
    %v6048 = vunpack.c.h.b16 %v4495
    %v6049 = vunpack.c.l.b16 %v4496
    %v6050 = vunpack.c.h.b16 %v4496
    %v6051 = vunpack.c.l.b16 %v4497
    %v6052 = vunpack.c.h.b16 %v4497
    %v6053 = vunpack.c.l.b16 %v4498
    %v6054 = vunpack.c.h.b16 %v4498
    %v6055 = vunpack.c.l.b16 %v4499
    %v6056 = vunpack.c.h.b16 %v4499
    %v6057 = vunpack.c.l.b16 %v4500
    %v6058 = vunpack.c.h.b16 %v4500
    %v6059 = vpack.c.b16 %v5039, %v5035
    %v6060 = vpack.c.b16 %v5040, %v5036
    %v6061 = vpack.c.b16 %v5041, %v5037
    %v6062 = vpack.c.b16 %v5042, %v5038
    %v6063 = vpack.c.b16 %v5047, %v5043
    %v6064 = vpack.c.b16 %v5048, %v5044
    %v6065 = vpack.c.b16 %v5049, %v5045
    %v6066 = vpack.c.b16 %v5050, %v5046
    %v6067 = vpack.c.b16 %v5055, %v5051
    %v6068 = vpack.c.b16 %v5056, %v5052
    %v6069 = vpack.c.b16 %v5057, %v5053
    %v6070 = vpack.c.b16 %v5058, %v5054
    %v6071 = vpack.c.b16 %v5063, %v5059
    %v6072 = vpack.c.b16 %v5064, %v5060
    %v6073 = vpack.c.b16 %v5065, %v5061
    %v6074 = vpack.c.b16 %v5066, %v5062
    %v6075 = vpack.c.b16 %v5071, %v5067
    %v6076 = vpack.c.b16 %v5072, %v5068
    %v6077 = vpack.c.b16 %v5073, %v5069
    %v6078 = vpack.c.b16 %v5074, %v5070
    %v6079 = vpack.c.b16 %v5079, %v5075
    %v6080 = vpack.c.b16 %v5080, %v5076
    %v6081 = vpack.c.b16 %v5081, %v5077
    %v6082 = vpack.c.b16 %v5082, %v5078
    %v6083 = vpack.c.b16 %v5087, %v5083
    %v6084 = vpack.c.b16 %v5088, %v5084
    %v6085 = vpack.c.b16 %v5089, %v5085
    %v6086 = vpack.c.b16 %v5090, %v5086
    %v6087 = vpack.c.b16 %v5095, %v5091
    %v6088 = vpack.c.b16 %v5096, %v5092
    %v6089 = vpack.c.b16 %v5097, %v5093
    %v6090 = vpack.c.b16 %v5098, %v5094
    %v6091 = vpack.c.b16 %v5103, %v5099
    %v6092 = vpack.c.b16 %v5104, %v5100
    %v6093 = vpack.c.b16 %v5105, %v5101
    %v6094 = vpack.c.b16 %v5106, %v5102
    %v6095 = vpack.c.b16 %v5111, %v5107
    %v6096 = vpack.c.b16 %v5112, %v5108
    %v6097 = vpack.c.b16 %v5113, %v5109
    %v6098 = vpack.c.b16 %v5114, %v5110
    %v6099 = vpack.c.b16 %v5119, %v5115
    %v6100 = vpack.c.b16 %v5120, %v5116
    %v6101 = vpack.c.b16 %v5121, %v5117
    %v6102 = vpack.c.b16 %v5122, %v5118
    %v6103 = vpack.c.b16 %v5127, %v5123
    %v6104 = vpack.c.b16 %v5128, %v5124
    %v6105 = vpack.c.b16 %v5129, %v5125
    %v6106 = vpack.c.b16 %v5130, %v5126
    %v6107 = vpack.c.b16 %v5135, %v5131
    %v6108 = vpack.c.b16 %v5136, %v5132
    %v6109 = vpack.c.b16 %v5137, %v5133
    %v6110 = vpack.c.b16 %v5138, %v5134
    %v6111 = vpack.c.b16 %v5143, %v5139
    %v6112 = vpack.c.b16 %v5144, %v5140
    %v6113 = vpack.c.b16 %v5145, %v5141
    %v6114 = vpack.c.b16 %v5146, %v5142
    %v6115 = vpack.c.b16 %v5151, %v5147
    %v6116 = vpack.c.b16 %v5152, %v5148
    %v6117 = vpack.c.b16 %v5153, %v5149
    %v6118 = vpack.c.b16 %v5154, %v5150
    %v6119 = vpack.c.b16 %v5159, %v5155
    %v6120 = vpack.c.b16 %v5160, %v5156
    %v6121 = vpack.c.b16 %v5161, %v5157
    %v6122 = vpack.c.b16 %v5162, %v5158
    %v6123 = vpack.c.b16 %v5167, %v5163
    %v6124 = vpack.c.b16 %v5168, %v5164
    %v6125 = vpack.c.b16 %v5169, %v5165
    %v6126 = vpack.c.b16 %v5170, %v5166
    %v6127 = vpack.c.b16 %v5175, %v5171
    %v6128 = vpack.c.b16 %v5176, %v5172
    %v6129 = vpack.c.b16 %v5177, %v5173
    %v6130 = vpack.c.b16 %v5178, %v5174
    %v6131 = vpack.c.b16 %v5183, %v5179
    %v6132 = vpack.c.b16 %v5184, %v5180
    %v6133 = vpack.c.b16 %v5185, %v5181
    %v6134 = vpack.c.b16 %v5186, %v5182
    %v6135 = vpack.c.b16 %v5191, %v5187
    %v6136 = vpack.c.b16 %v5192, %v5188
    %v6137 = vpack.c.b16 %v5193, %v5189
    %v6138 = vpack.c.b16 %v5194, %v5190
    %v6139 = vpack.c.b16 %v5199, %v5195
    %v6140 = vpack.c.b16 %v5200, %v5196
    %v6141 = vpack.c.b16 %v5201, %v5197
    %v6142 = vpack.c.b16 %v5202, %v5198
    %v6143 = vpack.c.b16 %v5207, %v5203
    %v6144 = vpack.c.b16 %v5208, %v5204
    %v6145 = vpack.c.b16 %v5209, %v5205
    %v6146 = vpack.c.b16 %v5210, %v5206
    %v6147 = vpack.c.b16 %v5215, %v5211
    %v6148 = vpack.c.b16 %v5216, %v5212
    %v6149 = vpack.c.b16 %v5217, %v5213
    %v6150 = vpack.c.b16 %v5218, %v5214
    %v6151 = vpack.c.b16 %v5223, %v5219
    %v6152 = vpack.c.b16 %v5224, %v5220
    %v6153 = vpack.c.b16 %v5225, %v5221
    %v6154 = vpack.c.b16 %v5226, %v5222
    %v6155 = vpack.c.b16 %v5231, %v5227
    %v6156 = vpack.c.b16 %v5232, %v5228
    %v6157 = vpack.c.b16 %v5233, %v5229
    %v6158 = vpack.c.b16 %v5234, %v5230
    %v6159 = vpack.c.b16 %v5239, %v5235
    %v6160 = vpack.c.b16 %v5240, %v5236
    %v6161 = vpack.c.b16 %v5241, %v5237
    %v6162 = vpack.c.b16 %v5242, %v5238
    %v6163 = vpack.c.b16 %v5247, %v5243
    %v6164 = vpack.c.b16 %v5248, %v5244
    %v6165 = vpack.c.b16 %v5249, %v5245
    %v6166 = vpack.c.b16 %v5250, %v5246
    %v6167 = vpack.c.b16 %v5255, %v5251
    %v6168 = vpack.c.b16 %v5256, %v5252
    %v6169 = vpack.c.b16 %v5257, %v5253
    %v6170 = vpack.c.b16 %v5258, %v5254
    %v6171 = vpack.c.b16 %v5263, %v5259
    %v6172 = vpack.c.b16 %v5264, %v5260
    %v6173 = vpack.c.b16 %v5265, %v5261
    %v6174 = vpack.c.b16 %v5266, %v5262
    %v6175 = vpack.c.b16 %v5271, %v5267
    %v6176 = vpack.c.b16 %v5272, %v5268
    %v6177 = vpack.c.b16 %v5273, %v5269
    %v6178 = vpack.c.b16 %v5274, %v5270
    %v6179 = vpack.c.b16 %v5279, %v5275
    %v6180 = vpack.c.b16 %v5280, %v5276
    %v6181 = vpack.c.b16 %v5281, %v5277
    %v6182 = vpack.c.b16 %v5282, %v5278
    %v6183 = vpack.c.b16 %v5287, %v5283
    %v6184 = vpack.c.b16 %v5288, %v5284
    %v6185 = vpack.c.b16 %v5289, %v5285
    %v6186 = vpack.c.b16 %v5290, %v5286
    %v6187 = vpack.c.b16 %v5295, %v5291
    %v6188 = vpack.c.b16 %v5296, %v5292
    %v6189 = vpack.c.b16 %v5297, %v5293
    %v6190 = vpack.c.b16 %v5298, %v5294
    %v6191 = vpack.c.b16 %v5303, %v5299
    %v6192 = vpack.c.b16 %v5304, %v5300
    %v6193 = vpack.c.b16 %v5305, %v5301
    %v6194 = vpack.c.b16 %v5306, %v5302
    %v6195 = vpack.c.b16 %v5311, %v5307
    %v6196 = vpack.c.b16 %v5312, %v5308
    %v6197 = vpack.c.b16 %v5313, %v5309
    %v6198 = vpack.c.b16 %v5314, %v5310
    %v6199 = vpack.c.b16 %v5319, %v5315
    %v6200 = vpack.c.b16 %v5320, %v5316
    %v6201 = vpack.c.b16 %v5321, %v5317
    %v6202 = vpack.c.b16 %v5322, %v5318
    %v6203 = vpack.c.b16 %v5327, %v5323
    %v6204 = vpack.c.b16 %v5328, %v5324
    %v6205 = vpack.c.b16 %v5329, %v5325
    %v6206 = vpack.c.b16 %v5330, %v5326
    %v6207 = vpack.c.b16 %v5335, %v5331
    %v6208 = vpack.c.b16 %v5336, %v5332
    %v6209 = vpack.c.b16 %v5337, %v5333
    %v6210 = vpack.c.b16 %v5338, %v5334
    %v6211 = vpack.c.b16 %v5343, %v5339
    %v6212 = vpack.c.b16 %v5344, %v5340
    %v6213 = vpack.c.b16 %v5345, %v5341
    %v6214 = vpack.c.b16 %v5346, %v5342
    %v6215 = vpack.c.b16 %v5351, %v5347
    %v6216 = vpack.c.b16 %v5352, %v5348
    %v6217 = vpack.c.b16 %v5353, %v5349
    %v6218 = vpack.c.b16 %v5354, %v5350
    %v6219 = vpack.c.b16 %v5359, %v5355
    %v6220 = vpack.c.b16 %v5360, %v5356
    %v6221 = vpack.c.b16 %v5361, %v5357
    %v6222 = vpack.c.b16 %v5362, %v5358
    %v6223 = vpack.c.b16 %v5367, %v5363
    %v6224 = vpack.c.b16 %v5368, %v5364
    %v6225 = vpack.c.b16 %v5369, %v5365
    %v6226 = vpack.c.b16 %v5370, %v5366
    %v6227 = vpack.c.b16 %v5375, %v5371
    %v6228 = vpack.c.b16 %v5376, %v5372
    %v6229 = vpack.c.b16 %v5377, %v5373
    %v6230 = vpack.c.b16 %v5378, %v5374
    %v6231 = vpack.c.b16 %v5383, %v5379
    %v6232 = vpack.c.b16 %v5384, %v5380
    %v6233 = vpack.c.b16 %v5385, %v5381
    %v6234 = vpack.c.b16 %v5386, %v5382
    %v6235 = vpack.c.b16 %v5391, %v5387
    %v6236 = vpack.c.b16 %v5392, %v5388
    %v6237 = vpack.c.b16 %v5393, %v5389
    %v6238 = vpack.c.b16 %v5394, %v5390
    %v6239 = vpack.c.b16 %v5399, %v5395
    %v6240 = vpack.c.b16 %v5400, %v5396
    %v6241 = vpack.c.b16 %v5401, %v5397
    %v6242 = vpack.c.b16 %v5402, %v5398
    %v6243 = vpack.c.b16 %v5407, %v5403
    %v6244 = vpack.c.b16 %v5408, %v5404
    %v6245 = vpack.c.b16 %v5409, %v5405
    %v6246 = vpack.c.b16 %v5410, %v5406
    %v6247 = vpack.c.b16 %v5415, %v5411
    %v6248 = vpack.c.b16 %v5416, %v5412
    %v6249 = vpack.c.b16 %v5417, %v5413
    %v6250 = vpack.c.b16 %v5418, %v5414
    %v6251 = vpack.c.b16 %v5423, %v5419
    %v6252 = vpack.c.b16 %v5424, %v5420
    %v6253 = vpack.c.b16 %v5425, %v5421
    %v6254 = vpack.c.b16 %v5426, %v5422
    %v6255 = vpack.c.b16 %v5431, %v5427
    %v6256 = vpack.c.b16 %v5432, %v5428
    %v6257 = vpack.c.b16 %v5433, %v5429
    %v6258 = vpack.c.b16 %v5434, %v5430
    %v6259 = vpack.c.b16 %v5439, %v5435
    %v6260 = vpack.c.b16 %v5440, %v5436
    %v6261 = vpack.c.b16 %v5441, %v5437
    %v6262 = vpack.c.b16 %v5442, %v5438
    %v6263 = vpack.c.b16 %v5447, %v5443
    %v6264 = vpack.c.b16 %v5448, %v5444
    %v6265 = vpack.c.b16 %v5449, %v5445
    %v6266 = vpack.c.b16 %v5450, %v5446
    %v6267 = vpack.c.b16 %v5455, %v5451
    %v6268 = vpack.c.b16 %v5456, %v5452
    %v6269 = vpack.c.b16 %v5457, %v5453
    %v6270 = vpack.c.b16 %v5458, %v5454
    %v6271 = vpack.c.b16 %v5463, %v5459
    %v6272 = vpack.c.b16 %v5464, %v5460
    %v6273 = vpack.c.b16 %v5465, %v5461
    %v6274 = vpack.c.b16 %v5466, %v5462
    %v6275 = vpack.c.b16 %v5471, %v5467
    %v6276 = vpack.c.b16 %v5472, %v5468
    %v6277 = vpack.c.b16 %v5473, %v5469
    %v6278 = vpack.c.b16 %v5474, %v5470
    %v6279 = vpack.c.b16 %v5479, %v5475
    %v6280 = vpack.c.b16 %v5480, %v5476
    %v6281 = vpack.c.b16 %v5481, %v5477
    %v6282 = vpack.c.b16 %v5482, %v5478
    %v6283 = vpack.c.b16 %v5487, %v5483
    %v6284 = vpack.c.b16 %v5488, %v5484
    %v6285 = vpack.c.b16 %v5489, %v5485
    %v6286 = vpack.c.b16 %v5490, %v5486
    %v6287 = vpack.c.b16 %v5495, %v5491
    %v6288 = vpack.c.b16 %v5496, %v5492
    %v6289 = vpack.c.b16 %v5497, %v5493
    %v6290 = vpack.c.b16 %v5498, %v5494
    %v6291 = vpack.c.b16 %v5503, %v5499
    %v6292 = vpack.c.b16 %v5504, %v5500
    %v6293 = vpack.c.b16 %v5505, %v5501
    %v6294 = vpack.c.b16 %v5506, %v5502
    %v6295 = vpack.c.b16 %v5511, %v5507
    %v6296 = vpack.c.b16 %v5512, %v5508
    %v6297 = vpack.c.b16 %v5513, %v5509
    %v6298 = vpack.c.b16 %v5514, %v5510
    %v6299 = vpack.c.b16 %v5519, %v5515
    %v6300 = vpack.c.b16 %v5520, %v5516
    %v6301 = vpack.c.b16 %v5521, %v5517
    %v6302 = vpack.c.b16 %v5522, %v5518
    %v6303 = vpack.c.b16 %v5527, %v5523
    %v6304 = vpack.c.b16 %v5528, %v5524
    %v6305 = vpack.c.b16 %v5529, %v5525
    %v6306 = vpack.c.b16 %v5530, %v5526
    %v6307 = vpack.c.b16 %v5535, %v5531
    %v6308 = vpack.c.b16 %v5536, %v5532
    %v6309 = vpack.c.b16 %v5537, %v5533
    %v6310 = vpack.c.b16 %v5538, %v5534
    %v6311 = vpack.c.b16 %v5543, %v5539
    %v6312 = vpack.c.b16 %v5544, %v5540
    %v6313 = vpack.c.b16 %v5545, %v5541
    %v6314 = vpack.c.b16 %v5546, %v5542
    %v6315 = vpack.c.b16 %v5551, %v5547
    %v6316 = vpack.c.b16 %v5552, %v5548
    %v6317 = vpack.c.b16 %v5553, %v5549
    %v6318 = vpack.c.b16 %v5554, %v5550
    %v6319 = vpack.c.b16 %v5559, %v5555
    %v6320 = vpack.c.b16 %v5560, %v5556
    %v6321 = vpack.c.b16 %v5561, %v5557
    %v6322 = vpack.c.b16 %v5562, %v5558
    %v6323 = vpack.c.b16 %v5567, %v5563
    %v6324 = vpack.c.b16 %v5568, %v5564
    %v6325 = vpack.c.b16 %v5569, %v5565
    %v6326 = vpack.c.b16 %v5570, %v5566
    %v6327 = vpack.c.b16 %v5575, %v5571
    %v6328 = vpack.c.b16 %v5576, %v5572
    %v6329 = vpack.c.b16 %v5577, %v5573
    %v6330 = vpack.c.b16 %v5578, %v5574
    %v6331 = vpack.c.b16 %v5583, %v5579
    %v6332 = vpack.c.b16 %v5584, %v5580
    %v6333 = vpack.c.b16 %v5585, %v5581
    %v6334 = vpack.c.b16 %v5586, %v5582
    %v6335 = vpack.c.b16 %v5591, %v5587
    %v6336 = vpack.c.b16 %v5592, %v5588
    %v6337 = vpack.c.b16 %v5593, %v5589
    %v6338 = vpack.c.b16 %v5594, %v5590
    %v6339 = vpack.c.b16 %v5599, %v5595
    %v6340 = vpack.c.b16 %v5600, %v5596
    %v6341 = vpack.c.b16 %v5601, %v5597
    %v6342 = vpack.c.b16 %v5602, %v5598
    %v6343 = vpack.c.b16 %v5607, %v5603
    %v6344 = vpack.c.b16 %v5608, %v5604
    %v6345 = vpack.c.b16 %v5609, %v5605
    %v6346 = vpack.c.b16 %v5610, %v5606
    %v6347 = vpack.c.b16 %v5615, %v5611
    %v6348 = vpack.c.b16 %v5616, %v5612
    %v6349 = vpack.c.b16 %v5617, %v5613
    %v6350 = vpack.c.b16 %v5618, %v5614
    %v6351 = vpack.c.b16 %v5623, %v5619
    %v6352 = vpack.c.b16 %v5624, %v5620
    %v6353 = vpack.c.b16 %v5625, %v5621
    %v6354 = vpack.c.b16 %v5626, %v5622
    %v6355 = vpack.c.b16 %v5631, %v5627
    %v6356 = vpack.c.b16 %v5632, %v5628
    %v6357 = vpack.c.b16 %v5633, %v5629
    %v6358 = vpack.c.b16 %v5634, %v5630
    %v6359 = vpack.c.b16 %v5639, %v5635
    %v6360 = vpack.c.b16 %v5640, %v5636
    %v6361 = vpack.c.b16 %v5641, %v5637
    %v6362 = vpack.c.b16 %v5642, %v5638
    %v6363 = vpack.c.b16 %v5647, %v5643
    %v6364 = vpack.c.b16 %v5648, %v5644
    %v6365 = vpack.c.b16 %v5649, %v5645
    %v6366 = vpack.c.b16 %v5650, %v5646
    %v6367 = vpack.c.b16 %v5655, %v5651
    %v6368 = vpack.c.b16 %v5656, %v5652
    %v6369 = vpack.c.b16 %v5657, %v5653
    %v6370 = vpack.c.b16 %v5658, %v5654
    %v6371 = vpack.c.b16 %v5663, %v5659
    %v6372 = vpack.c.b16 %v5664, %v5660
    %v6373 = vpack.c.b16 %v5665, %v5661
    %v6374 = vpack.c.b16 %v5666, %v5662
    %v6375 = vpack.c.b16 %v5671, %v5667
    %v6376 = vpack.c.b16 %v5672, %v5668
    %v6377 = vpack.c.b16 %v5673, %v5669
    %v6378 = vpack.c.b16 %v5674, %v5670
    %v6379 = vpack.c.b16 %v5679, %v5675
    %v6380 = vpack.c.b16 %v5680, %v5676
    %v6381 = vpack.c.b16 %v5681, %v5677
    %v6382 = vpack.c.b16 %v5682, %v5678
    %v6383 = vpack.c.b16 %v5687, %v5683
    %v6384 = vpack.c.b16 %v5688, %v5684
    %v6385 = vpack.c.b16 %v5689, %v5685
    %v6386 = vpack.c.b16 %v5690, %v5686
    %v6387 = vpack.c.b16 %v5695, %v5691
    %v6388 = vpack.c.b16 %v5696, %v5692
    %v6389 = vpack.c.b16 %v5697, %v5693
    %v6390 = vpack.c.b16 %v5698, %v5694
    %v6391 = vpack.c.b16 %v5703, %v5699
    %v6392 = vpack.c.b16 %v5704, %v5700
    %v6393 = vpack.c.b16 %v5705, %v5701
    %v6394 = vpack.c.b16 %v5706, %v5702
    %v6395 = vpack.c.b16 %v5711, %v5707
    %v6396 = vpack.c.b16 %v5712, %v5708
    %v6397 = vpack.c.b16 %v5713, %v5709
    %v6398 = vpack.c.b16 %v5714, %v5710
    %v6399 = vpack.c.b16 %v5719, %v5715
    %v6400 = vpack.c.b16 %v5720, %v5716
    %v6401 = vpack.c.b16 %v5721, %v5717
    %v6402 = vpack.c.b16 %v5722, %v5718
    %v6403 = vpack.c.b16 %v5727, %v5723
    %v6404 = vpack.c.b16 %v5728, %v5724
    %v6405 = vpack.c.b16 %v5729, %v5725
    %v6406 = vpack.c.b16 %v5730, %v5726
    %v6407 = vpack.c.b16 %v5735, %v5731
    %v6408 = vpack.c.b16 %v5736, %v5732
    %v6409 = vpack.c.b16 %v5737, %v5733
    %v6410 = vpack.c.b16 %v5738, %v5734
    %v6411 = vpack.c.b16 %v5743, %v5739
    %v6412 = vpack.c.b16 %v5744, %v5740
    %v6413 = vpack.c.b16 %v5745, %v5741
    %v6414 = vpack.c.b16 %v5746, %v5742
    %v6415 = vpack.c.b16 %v5751, %v5747
    %v6416 = vpack.c.b16 %v5752, %v5748
    %v6417 = vpack.c.b16 %v5753, %v5749
    %v6418 = vpack.c.b16 %v5754, %v5750
    %v6419 = vpack.c.b16 %v5759, %v5755
    %v6420 = vpack.c.b16 %v5760, %v5756
    %v6421 = vpack.c.b16 %v5761, %v5757
    %v6422 = vpack.c.b16 %v5762, %v5758
    %v6423 = vpack.c.b16 %v5767, %v5763
    %v6424 = vpack.c.b16 %v5768, %v5764
    %v6425 = vpack.c.b16 %v5769, %v5765
    %v6426 = vpack.c.b16 %v5770, %v5766
    %v6427 = vpack.c.b16 %v5775, %v5771
    %v6428 = vpack.c.b16 %v5776, %v5772
    %v6429 = vpack.c.b16 %v5777, %v5773
    %v6430 = vpack.c.b16 %v5778, %v5774
    %v6431 = vpack.c.b16 %v5783, %v5779
    %v6432 = vpack.c.b16 %v5784, %v5780
    %v6433 = vpack.c.b16 %v5785, %v5781
    %v6434 = vpack.c.b16 %v5786, %v5782
    %v6435 = vpack.c.b16 %v5791, %v5787
    %v6436 = vpack.c.b16 %v5792, %v5788
    %v6437 = vpack.c.b16 %v5793, %v5789
    %v6438 = vpack.c.b16 %v5794, %v5790
    %v6439 = vpack.c.b16 %v5799, %v5795
    %v6440 = vpack.c.b16 %v5800, %v5796
    %v6441 = vpack.c.b16 %v5801, %v5797
    %v6442 = vpack.c.b16 %v5802, %v5798
    %v6443 = vpack.c.b16 %v5807, %v5803
    %v6444 = vpack.c.b16 %v5808, %v5804
    %v6445 = vpack.c.b16 %v5809, %v5805
    %v6446 = vpack.c.b16 %v5810, %v5806
    %v6447 = vpack.c.b16 %v5815, %v5811
    %v6448 = vpack.c.b16 %v5816, %v5812
    %v6449 = vpack.c.b16 %v5817, %v5813
    %v6450 = vpack.c.b16 %v5818, %v5814
    %v6451 = vpack.c.b16 %v5823, %v5819
    %v6452 = vpack.c.b16 %v5824, %v5820
    %v6453 = vpack.c.b16 %v5825, %v5821
    %v6454 = vpack.c.b16 %v5826, %v5822
    %v6455 = vpack.c.b16 %v5831, %v5827
    %v6456 = vpack.c.b16 %v5832, %v5828
    %v6457 = vpack.c.b16 %v5833, %v5829
    %v6458 = vpack.c.b16 %v5834, %v5830
    %v6459 = vpack.c.b16 %v5839, %v5835
    %v6460 = vpack.c.b16 %v5840, %v5836
    %v6461 = vpack.c.b16 %v5841, %v5837
    %v6462 = vpack.c.b16 %v5842, %v5838
    %v6463 = vpack.c.b16 %v5847, %v5843
    %v6464 = vpack.c.b16 %v5848, %v5844
    %v6465 = vpack.c.b16 %v5849, %v5845
    %v6466 = vpack.c.b16 %v5850, %v5846
    %v6467 = vpack.c.b16 %v5855, %v5851
    %v6468 = vpack.c.b16 %v5856, %v5852
    %v6469 = vpack.c.b16 %v5857, %v5853
    %v6470 = vpack.c.b16 %v5858, %v5854
    %v6471 = vpack.c.b16 %v5863, %v5859
    %v6472 = vpack.c.b16 %v5864, %v5860
    %v6473 = vpack.c.b16 %v5865, %v5861
    %v6474 = vpack.c.b16 %v5866, %v5862
    %v6475 = vpack.c.b16 %v5871, %v5867
    %v6476 = vpack.c.b16 %v5872, %v5868
    %v6477 = vpack.c.b16 %v5873, %v5869
    %v6478 = vpack.c.b16 %v5874, %v5870
    %v6479 = vpack.c.b16 %v5879, %v5875
    %v6480 = vpack.c.b16 %v5880, %v5876
    %v6481 = vpack.c.b16 %v5881, %v5877
    %v6482 = vpack.c.b16 %v5882, %v5878
    %v6483 = vpack.c.b16 %v5887, %v5883
    %v6484 = vpack.c.b16 %v5888, %v5884
    %v6485 = vpack.c.b16 %v5889, %v5885
    %v6486 = vpack.c.b16 %v5890, %v5886
    %v6487 = vpack.c.b16 %v5895, %v5891
    %v6488 = vpack.c.b16 %v5896, %v5892
    %v6489 = vpack.c.b16 %v5897, %v5893
    %v6490 = vpack.c.b16 %v5898, %v5894
    %v6491 = vpack.c.b16 %v5903, %v5899
    %v6492 = vpack.c.b16 %v5904, %v5900
    %v6493 = vpack.c.b16 %v5905, %v5901
    %v6494 = vpack.c.b16 %v5906, %v5902
    %v6495 = vpack.c.b16 %v5911, %v5907
    %v6496 = vpack.c.b16 %v5912, %v5908
    %v6497 = vpack.c.b16 %v5913, %v5909
    %v6498 = vpack.c.b16 %v5914, %v5910
    %v6499 = vpack.c.b16 %v5919, %v5915
    %v6500 = vpack.c.b16 %v5920, %v5916
    %v6501 = vpack.c.b16 %v5921, %v5917
    %v6502 = vpack.c.b16 %v5922, %v5918
    %v6503 = vpack.c.b16 %v5927, %v5923
    %v6504 = vpack.c.b16 %v5928, %v5924
    %v6505 = vpack.c.b16 %v5929, %v5925
    %v6506 = vpack.c.b16 %v5930, %v5926
    %v6507 = vpack.c.b16 %v5935, %v5931
    %v6508 = vpack.c.b16 %v5936, %v5932
    %v6509 = vpack.c.b16 %v5937, %v5933
    %v6510 = vpack.c.b16 %v5938, %v5934
    %v6511 = vpack.c.b16 %v5943, %v5939
    %v6512 = vpack.c.b16 %v5944, %v5940
    %v6513 = vpack.c.b16 %v5945, %v5941
    %v6514 = vpack.c.b16 %v5946, %v5942
    %v6515 = vpack.c.b16 %v5951, %v5947
    %v6516 = vpack.c.b16 %v5952, %v5948
    %v6517 = vpack.c.b16 %v5953, %v5949
    %v6518 = vpack.c.b16 %v5954, %v5950
    %v6519 = vpack.c.b16 %v5959, %v5955
    %v6520 = vpack.c.b16 %v5960, %v5956
    %v6521 = vpack.c.b16 %v5961, %v5957
    %v6522 = vpack.c.b16 %v5962, %v5958
    %v6523 = vpack.c.b16 %v5967, %v5963
    %v6524 = vpack.c.b16 %v5968, %v5964
    %v6525 = vpack.c.b16 %v5969, %v5965
    %v6526 = vpack.c.b16 %v5970, %v5966
    %v6527 = vpack.c.b16 %v5975, %v5971
    %v6528 = vpack.c.b16 %v5976, %v5972
    %v6529 = vpack.c.b16 %v5977, %v5973
    %v6530 = vpack.c.b16 %v5978, %v5974
    %v6531 = vpack.c.b16 %v5983, %v5979
    %v6532 = vpack.c.b16 %v5984, %v5980
    %v6533 = vpack.c.b16 %v5985, %v5981
    %v6534 = vpack.c.b16 %v5986, %v5982
    %v6535 = vpack.c.b16 %v5991, %v5987
    %v6536 = vpack.c.b16 %v5992, %v5988
    %v6537 = vpack.c.b16 %v5993, %v5989
    %v6538 = vpack.c.b16 %v5994, %v5990
    %v6539 = vpack.c.b16 %v5999, %v5995
    %v6540 = vpack.c.b16 %v6000, %v5996
    %v6541 = vpack.c.b16 %v6001, %v5997
    %v6542 = vpack.c.b16 %v6002, %v5998
    %v6543 = vpack.c.b16 %v6007, %v6003
    %v6544 = vpack.c.b16 %v6008, %v6004
    %v6545 = vpack.c.b16 %v6009, %v6005
    %v6546 = vpack.c.b16 %v6010, %v6006
    %v6547 = vpack.c.b16 %v6015, %v6011
    %v6548 = vpack.c.b16 %v6016, %v6012
    %v6549 = vpack.c.b16 %v6017, %v6013
    %v6550 = vpack.c.b16 %v6018, %v6014
    %v6551 = vpack.c.b16 %v6023, %v6019
    %v6552 = vpack.c.b16 %v6024, %v6020
    %v6553 = vpack.c.b16 %v6025, %v6021
    %v6554 = vpack.c.b16 %v6026, %v6022
    %v6555 = vpack.c.b16 %v6031, %v6027
    %v6556 = vpack.c.b16 %v6032, %v6028
    %v6557 = vpack.c.b16 %v6033, %v6029
    %v6558 = vpack.c.b16 %v6034, %v6030
    %v6559 = vpack.c.b16 %v6039, %v6035
    %v6560 = vpack.c.b16 %v6040, %v6036
    %v6561 = vpack.c.b16 %v6041, %v6037
    %v6562 = vpack.c.b16 %v6042, %v6038
    %v6563 = vpack.c.b16 %v6047, %v6043
    %v6564 = vpack.c.b16 %v6048, %v6044
    %v6565 = vpack.c.b16 %v6049, %v6045
    %v6566 = vpack.c.b16 %v6050, %v6046
    %v6567 = vpack.c.b16 %v6055, %v6051
    %v6568 = vpack.c.b16 %v6056, %v6052
    %v6569 = vpack.c.b16 %v6057, %v6053
    %v6570 = vpack.c.b16 %v6058, %v6054
    %7083 = vmatprep.subr.bf16.mxu0 %v6060
    %7084 = vmatpush1.bf16.msra.mxu0 %v6059
    %7085 = vmatprep.subr.bf16.mxu0 %v6064
    %7086 = vmatpush1.bf16.msra.mxu0 %v6063
    %7087 = vmatprep.subr.bf16.mxu0 %v6068
    %7088 = vmatpush1.bf16.msra.mxu0 %v6067
    %7089 = vmatprep.subr.bf16.mxu0 %v6072
    %7090 = vmatpush1.bf16.msra.mxu0 %v6071
    %7091 = vmatprep.subr.bf16.mxu0 %v6076
    %7092 = vmatpush1.bf16.msra.mxu0 %v6075
    %7093 = vmatprep.subr.bf16.mxu0 %v6080
    %7094 = vmatpush1.bf16.msra.mxu0 %v6079
    %7095 = vmatprep.subr.bf16.mxu0 %v6084
    %7096 = vmatpush1.bf16.msra.mxu0 %v6083
    %7097 = vmatprep.subr.bf16.mxu0 %v6088
    %7098 = vmatpush1.bf16.msra.mxu0 %v6087
    %7099 = vmatprep.subr.bf16.mxu0 %v6092
    %7100 = vmatpush1.bf16.msra.mxu0 %v6091
    %7101 = vmatprep.subr.bf16.mxu0 %v6096
    %7102 = vmatpush1.bf16.msra.mxu0 %v6095
    %7103 = vmatprep.subr.bf16.mxu0 %v6100
    %7104 = vmatpush1.bf16.msra.mxu0 %v6099
    %7105 = vmatprep.subr.bf16.mxu0 %v6104
    %7106 = vmatpush1.bf16.msra.mxu0 %v6103
    %7107 = vmatprep.subr.bf16.mxu0 %v6108
    %7108 = vmatpush1.bf16.msra.mxu0 %v6107
    %7109 = vmatprep.subr.bf16.mxu0 %v6112
    %7110 = vmatpush1.bf16.msra.mxu0 %v6111
    %7111 = vmatprep.subr.bf16.mxu0 %v6116
    %7112 = vmatpush1.bf16.msra.mxu0 %v6115
    %7113 = vmatprep.subr.bf16.mxu0 %v6120
    %7114 = vmatpush1.bf16.msra.mxu0 %v6119
    %7115 = vmatprep.mubr.bf16.mxu0 %v3974
    %7116 = vmatmul.mubr.bf16.gmra.mrb[0].mxu0 %v3973
    %v7117 = vpop.f32.mrb[0].mxu0
    %v7118 = vadd.f32 %v4506, %v7117
    %v7119 = vpop.f32.mrb[0].mxu0
    %v7120 = vadd.f32 %v4510, %v7119
    %v7121 = vpop.f32.mrb[0].mxu0
    %v7122 = vadd.f32 %v4506, %v7121
    %v7123 = vpop.f32.mrb[0].mxu0
    %v7124 = vadd.f32 %v4510, %v7123
    %7125 = vdwg.mxu0
    %7126 = vmatprep.subr.bf16.mxu0 %v6124
    %7127 = vmatpush1.bf16.msra.mxu0 %v6123
    %7128 = vmatprep.subr.bf16.mxu0 %v6128
    %7129 = vmatpush1.bf16.msra.mxu0 %v6127
    %7130 = vmatprep.subr.bf16.mxu0 %v6132
    %7131 = vmatpush1.bf16.msra.mxu0 %v6131
    %7132 = vmatprep.subr.bf16.mxu0 %v6136
    %7133 = vmatpush1.bf16.msra.mxu0 %v6135
    %7134 = vmatprep.subr.bf16.mxu0 %v6140
    %7135 = vmatpush1.bf16.msra.mxu0 %v6139
    %7136 = vmatprep.subr.bf16.mxu0 %v6144
    %7137 = vmatpush1.bf16.msra.mxu0 %v6143
    %7138 = vmatprep.subr.bf16.mxu0 %v6148
    %7139 = vmatpush1.bf16.msra.mxu0 %v6147
    %7140 = vmatprep.subr.bf16.mxu0 %v6152
    %7141 = vmatpush1.bf16.msra.mxu0 %v6151
    %7142 = vmatprep.subr.bf16.mxu0 %v6156
    %7143 = vmatpush1.bf16.msra.mxu0 %v6155
    %7144 = vmatprep.subr.bf16.mxu0 %v6160
    %7145 = vmatpush1.bf16.msra.mxu0 %v6159
    %7146 = vmatprep.subr.bf16.mxu0 %v6164
    %7147 = vmatpush1.bf16.msra.mxu0 %v6163
    %7148 = vmatprep.subr.bf16.mxu0 %v6168
    %7149 = vmatpush1.bf16.msra.mxu0 %v6167
    %7150 = vmatprep.subr.bf16.mxu0 %v6172
    %7151 = vmatpush1.bf16.msra.mxu0 %v6171
    %7152 = vmatprep.subr.bf16.mxu0 %v6176
    %7153 = vmatpush1.bf16.msra.mxu0 %v6175
    %7154 = vmatprep.subr.bf16.mxu0 %v6180
    %7155 = vmatpush1.bf16.msra.mxu0 %v6179
    %7156 = vmatprep.subr.bf16.mxu0 %v6184
    %7157 = vmatpush1.bf16.msra.mxu0 %v6183
    %7158 = vmatprep.mubr.bf16.mxu0 %v3976
    %7159 = vmatmul.mubr.bf16.gmra.mrb[0].mxu0 %v3975
    %v7160 = vpop.f32.mrb[0].mxu0
    %v7161 = vadd.f32 %v7118, %v7160
    %v7162 = vpop.f32.mrb[0].mxu0
    %v7163 = vadd.f32 %v7120, %v7162
    %v7164 = vpop.f32.mrb[0].mxu0
    %v7165 = vadd.f32 %v7122, %v7164
    %v7166 = vpop.f32.mrb[0].mxu0
    %v7167 = vadd.f32 %v7124, %v7166
    %7168 = vdwg.mxu0
    %7169 = vmatprep.subr.bf16.mxu0 %v6188
    %7170 = vmatpush1.bf16.msra.mxu0 %v6187
    %7171 = vmatprep.subr.bf16.mxu0 %v6192
    %7172 = vmatpush1.bf16.msra.mxu0 %v6191
    %7173 = vmatprep.subr.bf16.mxu0 %v6196
    %7174 = vmatpush1.bf16.msra.mxu0 %v6195
    %7175 = vmatprep.subr.bf16.mxu0 %v6200
    %7176 = vmatpush1.bf16.msra.mxu0 %v6199
    %7177 = vmatprep.subr.bf16.mxu0 %v6204
    %7178 = vmatpush1.bf16.msra.mxu0 %v6203
    %7179 = vmatprep.subr.bf16.mxu0 %v6208
    %7180 = vmatpush1.bf16.msra.mxu0 %v6207
    %7181 = vmatprep.subr.bf16.mxu0 %v6212
    %7182 = vmatpush1.bf16.msra.mxu0 %v6211
    %7183 = vmatprep.subr.bf16.mxu0 %v6216
    %7184 = vmatpush1.bf16.msra.mxu0 %v6215
    %7185 = vmatprep.subr.bf16.mxu0 %v6220
    %7186 = vmatpush1.bf16.msra.mxu0 %v6219
    %7187 = vmatprep.subr.bf16.mxu0 %v6224
    %7188 = vmatpush1.bf16.msra.mxu0 %v6223
    %7189 = vmatprep.subr.bf16.mxu0 %v6228
    %7190 = vmatpush1.bf16.msra.mxu0 %v6227
    %7191 = vmatprep.subr.bf16.mxu0 %v6232
    %7192 = vmatpush1.bf16.msra.mxu0 %v6231
    %7193 = vmatprep.subr.bf16.mxu0 %v6236
    %7194 = vmatpush1.bf16.msra.mxu0 %v6235
    %7195 = vmatprep.subr.bf16.mxu0 %v6240
    %7196 = vmatpush1.bf16.msra.mxu0 %v6239
    %7197 = vmatprep.subr.bf16.mxu0 %v6244
    %7198 = vmatpush1.bf16.msra.mxu0 %v6243
    %7199 = vmatprep.subr.bf16.mxu0 %v6248
    %7200 = vmatpush1.bf16.msra.mxu0 %v6247
    %7201 = vmatprep.mubr.bf16.mxu0 %v3978
    %7202 = vmatmul.mubr.bf16.gmra.mrb[0].mxu0 %v3977
    %v7203 = vpop.f32.mrb[0].mxu0
    %v7204 = vadd.f32 %v7161, %v7203
    %v7205 = vpop.f32.mrb[0].mxu0
    %v7206 = vadd.f32 %v7163, %v7205
    %v7207 = vpop.f32.mrb[0].mxu0
    %v7208 = vadd.f32 %v7165, %v7207
    %v7209 = vpop.f32.mrb[0].mxu0
    %v7210 = vadd.f32 %v7167, %v7209
    %7211 = vdwg.mxu0
    %7212 = vmatprep.subr.bf16.mxu0 %v6252
    %7213 = vmatpush1.bf16.msra.mxu0 %v6251
    %7214 = vmatprep.subr.bf16.mxu0 %v6256
    %7215 = vmatpush1.bf16.msra.mxu0 %v6255
    %7216 = vmatprep.subr.bf16.mxu0 %v6260
    %7217 = vmatpush1.bf16.msra.mxu0 %v6259
    %7218 = vmatprep.subr.bf16.mxu0 %v6264
    %7219 = vmatpush1.bf16.msra.mxu0 %v6263
    %7220 = vmatprep.subr.bf16.mxu0 %v6268
    %7221 = vmatpush1.bf16.msra.mxu0 %v6267
    %7222 = vmatprep.subr.bf16.mxu0 %v6272
    %7223 = vmatpush1.bf16.msra.mxu0 %v6271
    %7224 = vmatprep.subr.bf16.mxu0 %v6276
    %7225 = vmatpush1.bf16.msra.mxu0 %v6275
    %7226 = vmatprep.subr.bf16.mxu0 %v6280
    %7227 = vmatpush1.bf16.msra.mxu0 %v6279
    %7228 = vmatprep.subr.bf16.mxu0 %v6284
    %7229 = vmatpush1.bf16.msra.mxu0 %v6283
    %7230 = vmatprep.subr.bf16.mxu0 %v6288
    %7231 = vmatpush1.bf16.msra.mxu0 %v6287
    %7232 = vmatprep.subr.bf16.mxu0 %v6292
    %7233 = vmatpush1.bf16.msra.mxu0 %v6291
    %7234 = vmatprep.subr.bf16.mxu0 %v6296
    %7235 = vmatpush1.bf16.msra.mxu0 %v6295
    %7236 = vmatprep.subr.bf16.mxu0 %v6300
    %7237 = vmatpush1.bf16.msra.mxu0 %v6299
    %7238 = vmatprep.subr.bf16.mxu0 %v6304
    %7239 = vmatpush1.bf16.msra.mxu0 %v6303
    %7240 = vmatprep.subr.bf16.mxu0 %v6308
    %7241 = vmatpush1.bf16.msra.mxu0 %v6307
    %7242 = vmatprep.subr.bf16.mxu0 %v6312
    %7243 = vmatpush1.bf16.msra.mxu0 %v6311
    %7244 = vmatprep.mubr.bf16.mxu0 %v3980
    %7245 = vmatmul.mubr.bf16.gmra.mrb[0].mxu0 %v3979
    %v7246 = vpop.f32.mrb[0].mxu0
    %v7247 = vadd.f32 %v7204, %v7246
    %v7248 = vpop.f32.mrb[0].mxu0
    %v7249 = vadd.f32 %v7206, %v7248
    %v7250 = vpop.f32.mrb[0].mxu0
    %v7251 = vadd.f32 %v7208, %v7250
    %v7252 = vpop.f32.mrb[0].mxu0
    %v7253 = vadd.f32 %v7210, %v7252
    %7254 = vdwg.mxu0
    %7255 = vmatprep.subr.bf16.mxu0 %v6316
    %7256 = vmatpush1.bf16.msra.mxu0 %v6315
    %7257 = vmatprep.subr.bf16.mxu0 %v6320
    %7258 = vmatpush1.bf16.msra.mxu0 %v6319
    %7259 = vmatprep.subr.bf16.mxu0 %v6324
    %7260 = vmatpush1.bf16.msra.mxu0 %v6323
    %7261 = vmatprep.subr.bf16.mxu0 %v6328
    %7262 = vmatpush1.bf16.msra.mxu0 %v6327
    %7263 = vmatprep.subr.bf16.mxu0 %v6332
    %7264 = vmatpush1.bf16.msra.mxu0 %v6331
    %7265 = vmatprep.subr.bf16.mxu0 %v6336
    %7266 = vmatpush1.bf16.msra.mxu0 %v6335
    %7267 = vmatprep.subr.bf16.mxu0 %v6340
    %7268 = vmatpush1.bf16.msra.mxu0 %v6339
    %7269 = vmatprep.subr.bf16.mxu0 %v6344
    %7270 = vmatpush1.bf16.msra.mxu0 %v6343
    %7271 = vmatprep.subr.bf16.mxu0 %v6348
    %7272 = vmatpush1.bf16.msra.mxu0 %v6347
    %7273 = vmatprep.subr.bf16.mxu0 %v6352
    %7274 = vmatpush1.bf16.msra.mxu0 %v6351
    %7275 = vmatprep.subr.bf16.mxu0 %v6356
    %7276 = vmatpush1.bf16.msra.mxu0 %v6355
    %7277 = vmatprep.subr.bf16.mxu0 %v6360
    %7278 = vmatpush1.bf16.msra.mxu0 %v6359
    %7279 = vmatprep.subr.bf16.mxu0 %v6364
    %7280 = vmatpush1.bf16.msra.mxu0 %v6363
    %7281 = vmatprep.subr.bf16.mxu0 %v6368
    %7282 = vmatpush1.bf16.msra.mxu0 %v6367
    %7283 = vmatprep.subr.bf16.mxu0 %v6372
    %7284 = vmatpush1.bf16.msra.mxu0 %v6371
    %7285 = vmatprep.subr.bf16.mxu0 %v6376
    %7286 = vmatpush1.bf16.msra.mxu0 %v6375
    %7287 = vmatprep.mubr.bf16.mxu0 %v3982
    %7288 = vmatmul.mubr.bf16.gmra.mrb[0].mxu0 %v3981
    %v7289 = vpop.f32.mrb[0].mxu0
    %v7290 = vadd.f32 %v7247, %v7289
    %v7291 = vpop.f32.mrb[0].mxu0
    %v7292 = vadd.f32 %v7249, %v7291
    %v7293 = vpop.f32.mrb[0].mxu0
    %v7294 = vadd.f32 %v7251, %v7293
    %v7295 = vpop.f32.mrb[0].mxu0
    %v7296 = vadd.f32 %v7253, %v7295
    %7297 = vdwg.mxu0
    %7298 = vmatprep.subr.bf16.mxu0 %v6380
    %7299 = vmatpush1.bf16.msra.mxu0 %v6379
    %7300 = vmatprep.subr.bf16.mxu0 %v6384
    %7301 = vmatpush1.bf16.msra.mxu0 %v6383
    %7302 = vmatprep.subr.bf16.mxu0 %v6388
    %7303 = vmatpush1.bf16.msra.mxu0 %v6387
    %7304 = vmatprep.subr.bf16.mxu0 %v6392
    %7305 = vmatpush1.bf16.msra.mxu0 %v6391
    %7306 = vmatprep.subr.bf16.mxu0 %v6396
    %7307 = vmatpush1.bf16.msra.mxu0 %v6395
    %7308 = vmatprep.subr.bf16.mxu0 %v6400
    %7309 = vmatpush1.bf16.msra.mxu0 %v6399
    %7310 = vmatprep.subr.bf16.mxu0 %v6404
    %7311 = vmatpush1.bf16.msra.mxu0 %v6403
    %7312 = vmatprep.subr.bf16.mxu0 %v6408
    %7313 = vmatpush1.bf16.msra.mxu0 %v6407
    %7314 = vmatprep.subr.bf16.mxu0 %v6412
    %7315 = vmatpush1.bf16.msra.mxu0 %v6411
    %7316 = vmatprep.subr.bf16.mxu0 %v6416
    %7317 = vmatpush1.bf16.msra.mxu0 %v6415
    %7318 = vmatprep.subr.bf16.mxu0 %v6420
    %7319 = vmatpush1.bf16.msra.mxu0 %v6419
    %7320 = vmatprep.subr.bf16.mxu0 %v6424
    %7321 = vmatpush1.bf16.msra.mxu0 %v6423
    %7322 = vmatprep.subr.bf16.mxu0 %v6428
    %7323 = vmatpush1.bf16.msra.mxu0 %v6427
    %7324 = vmatprep.subr.bf16.mxu0 %v6432
    %7325 = vmatpush1.bf16.msra.mxu0 %v6431
    %7326 = vmatprep.subr.bf16.mxu0 %v6436
    %7327 = vmatpush1.bf16.msra.mxu0 %v6435
    %7328 = vmatprep.subr.bf16.mxu0 %v6440
    %7329 = vmatpush1.bf16.msra.mxu0 %v6439
    %7330 = vmatprep.mubr.bf16.mxu0 %v3984
    %7331 = vmatmul.mubr.bf16.gmra.mrb[0].mxu0 %v3983
    %v7332 = vpop.f32.mrb[0].mxu0
    %v7333 = vadd.f32 %v7290, %v7332
    %v7334 = vpop.f32.mrb[0].mxu0
    %v7335 = vadd.f32 %v7292, %v7334
    %v7336 = vpop.f32.mrb[0].mxu0
    %v7337 = vadd.f32 %v7294, %v7336
    %v7338 = vpop.f32.mrb[0].mxu0
    %v7339 = vadd.f32 %v7296, %v7338
    %7340 = vdwg.mxu0
    %7341 = vmatprep.subr.bf16.mxu0 %v6444
    %7342 = vmatpush1.bf16.msra.mxu0 %v6443
    %7343 = vmatprep.subr.bf16.mxu0 %v6448
    %7344 = vmatpush1.bf16.msra.mxu0 %v6447
    %7345 = vmatprep.subr.bf16.mxu0 %v6452
    %7346 = vmatpush1.bf16.msra.mxu0 %v6451
    %7347 = vmatprep.subr.bf16.mxu0 %v6456
    %7348 = vmatpush1.bf16.msra.mxu0 %v6455
    %7349 = vmatprep.subr.bf16.mxu0 %v6460
    %7350 = vmatpush1.bf16.msra.mxu0 %v6459
    %7351 = vmatprep.subr.bf16.mxu0 %v6464
    %7352 = vmatpush1.bf16.msra.mxu0 %v6463
    %7353 = vmatprep.subr.bf16.mxu0 %v6468
    %7354 = vmatpush1.bf16.msra.mxu0 %v6467
    %7355 = vmatprep.subr.bf16.mxu0 %v6472
    %7356 = vmatpush1.bf16.msra.mxu0 %v6471
    %7357 = vmatprep.subr.bf16.mxu0 %v6476
    %7358 = vmatpush1.bf16.msra.mxu0 %v6475
    %7359 = vmatprep.subr.bf16.mxu0 %v6480
    %7360 = vmatpush1.bf16.msra.mxu0 %v6479
    %7361 = vmatprep.subr.bf16.mxu0 %v6484
    %7362 = vmatpush1.bf16.msra.mxu0 %v6483
    %7363 = vmatprep.subr.bf16.mxu0 %v6488
    %7364 = vmatpush1.bf16.msra.mxu0 %v6487
    %7365 = vmatprep.subr.bf16.mxu0 %v6492
    %7366 = vmatpush1.bf16.msra.mxu0 %v6491
    %7367 = vmatprep.subr.bf16.mxu0 %v6496
    %7368 = vmatpush1.bf16.msra.mxu0 %v6495
    %7369 = vmatprep.subr.bf16.mxu0 %v6500
    %7370 = vmatpush1.bf16.msra.mxu0 %v6499
    %7371 = vmatprep.subr.bf16.mxu0 %v6504
    %7372 = vmatpush1.bf16.msra.mxu0 %v6503
    %7373 = vmatprep.mubr.bf16.mxu0 %v3986
    %7374 = vmatmul.mubr.bf16.gmra.mrb[0].mxu0 %v3985
    %v7375 = vpop.f32.mrb[0].mxu0
    %v7376 = vadd.f32 %v7333, %v7375
    %v7377 = vpop.f32.mrb[0].mxu0
    %v7378 = vadd.f32 %v7335, %v7377
    %v7379 = vpop.f32.mrb[0].mxu0
    %v7380 = vadd.f32 %v7337, %v7379
    %v7381 = vpop.f32.mrb[0].mxu0
    %v7382 = vadd.f32 %v7339, %v7381
    %7383 = vdwg.mxu0
    %7384 = vmatprep.subr.bf16.mxu0 %v6508
    %7385 = vmatpush1.bf16.msra.mxu0 %v6507
    %7386 = vmatprep.subr.bf16.mxu0 %v6512
    %7387 = vmatpush1.bf16.msra.mxu0 %v6511
    %7388 = vmatprep.subr.bf16.mxu0 %v6516
    %7389 = vmatpush1.bf16.msra.mxu0 %v6515
    %7390 = vmatprep.subr.bf16.mxu0 %v6520
    %7391 = vmatpush1.bf16.msra.mxu0 %v6519
    %7392 = vmatprep.subr.bf16.mxu0 %v6524
    %7393 = vmatpush1.bf16.msra.mxu0 %v6523
    %7394 = vmatprep.subr.bf16.mxu0 %v6528
    %7395 = vmatpush1.bf16.msra.mxu0 %v6527
    %7396 = vmatprep.subr.bf16.mxu0 %v6532
    %7397 = vmatpush1.bf16.msra.mxu0 %v6531
    %7398 = vmatprep.subr.bf16.mxu0 %v6536
    %7399 = vmatpush1.bf16.msra.mxu0 %v6535
    %7400 = vmatprep.subr.bf16.mxu0 %v6540
    %7401 = vmatpush1.bf16.msra.mxu0 %v6539
    %7402 = vmatprep.subr.bf16.mxu0 %v6544
    %7403 = vmatpush1.bf16.msra.mxu0 %v6543
    %7404 = vmatprep.subr.bf16.mxu0 %v6548
    %7405 = vmatpush1.bf16.msra.mxu0 %v6547
    %7406 = vmatprep.subr.bf16.mxu0 %v6552
    %7407 = vmatpush1.bf16.msra.mxu0 %v6551
    %7408 = vmatprep.subr.bf16.mxu0 %v6556
    %7409 = vmatpush1.bf16.msra.mxu0 %v6555
    %7410 = vmatprep.subr.bf16.mxu0 %v6560
    %7411 = vmatpush1.bf16.msra.mxu0 %v6559
    %7412 = vmatprep.subr.bf16.mxu0 %v6564
    %7413 = vmatpush1.bf16.msra.mxu0 %v6563
    %7414 = vmatprep.subr.bf16.mxu0 %v6568
    %7415 = vmatpush1.bf16.msra.mxu0 %v6567
    %7416 = vmatprep.mubr.bf16.mxu0 %v3988
    %7417 = vmatmul.mubr.bf16.gmra.mrb[0].mxu0 %v3987
    %v7418 = vpop.f32.mrb[0].mxu0
    %v7419 = vadd.f32 %v7376, %v7418
    %v7420 = vpop.f32.mrb[0].mxu0
    %v7421 = vadd.f32 %v7378, %v7420
    %v7422 = vpop.f32.mrb[0].mxu0
    %v7423 = vadd.f32 %v7380, %v7422
    %v7424 = vpop.f32.mrb[0].mxu0
    %v7425 = vadd.f32 %v7382, %v7424
    %7426 = vdwg.mxu0
    %7427 = vmatprep.subr.bf16.mxu0 %v6062
    %7428 = vmatpush1.bf16.msra.mxu0 %v6061
    %7429 = vmatprep.subr.bf16.mxu0 %v6066
    %7430 = vmatpush1.bf16.msra.mxu0 %v6065
    %7431 = vmatprep.subr.bf16.mxu0 %v6070
    %7432 = vmatpush1.bf16.msra.mxu0 %v6069
    %7433 = vmatprep.subr.bf16.mxu0 %v6074
    %7434 = vmatpush1.bf16.msra.mxu0 %v6073
    %7435 = vmatprep.subr.bf16.mxu0 %v6078
    %7436 = vmatpush1.bf16.msra.mxu0 %v6077
    %7437 = vmatprep.subr.bf16.mxu0 %v6082
    %7438 = vmatpush1.bf16.msra.mxu0 %v6081
    %7439 = vmatprep.subr.bf16.mxu0 %v6086
    %7440 = vmatpush1.bf16.msra.mxu0 %v6085
    %7441 = vmatprep.subr.bf16.mxu0 %v6090
    %7442 = vmatpush1.bf16.msra.mxu0 %v6089
    %7443 = vmatprep.subr.bf16.mxu0 %v6094
    %7444 = vmatpush1.bf16.msra.mxu0 %v6093
    %7445 = vmatprep.subr.bf16.mxu0 %v6098
    %7446 = vmatpush1.bf16.msra.mxu0 %v6097
    %7447 = vmatprep.subr.bf16.mxu0 %v6102
    %7448 = vmatpush1.bf16.msra.mxu0 %v6101
    %7449 = vmatprep.subr.bf16.mxu0 %v6106
    %7450 = vmatpush1.bf16.msra.mxu0 %v6105
    %7451 = vmatprep.subr.bf16.mxu0 %v6110
    %7452 = vmatpush1.bf16.msra.mxu0 %v6109
    %7453 = vmatprep.subr.bf16.mxu0 %v6114
    %7454 = vmatpush1.bf16.msra.mxu0 %v6113
    %7455 = vmatprep.subr.bf16.mxu0 %v6118
    %7456 = vmatpush1.bf16.msra.mxu0 %v6117
    %7457 = vmatprep.subr.bf16.mxu0 %v6122
    %7458 = vmatpush1.bf16.msra.mxu0 %v6121
    %7459 = vmatprep.mubr.bf16.mxu0 %v3974
    %7460 = vmatmul.mubr.bf16.gmra.mrb[0].mxu0 %v3973
    %v7461 = vpop.f32.mrb[0].mxu0
    %v7462 = vadd.f32 %v4514, %v7461
    %v7463 = vpop.f32.mrb[0].mxu0
    %v7464 = vadd.f32 %v4518, %v7463
    %v7465 = vpop.f32.mrb[0].mxu0
    %v7466 = vadd.f32 %v4514, %v7465
    %v7467 = vpop.f32.mrb[0].mxu0
    %v7468 = vadd.f32 %v4518, %v7467
    %7469 = vdwg.mxu0
    %7470 = vmatprep.subr.bf16.mxu0 %v6126
    %7471 = vmatpush1.bf16.msra.mxu0 %v6125
    %7472 = vmatprep.subr.bf16.mxu0 %v6130
    %7473 = vmatpush1.bf16.msra.mxu0 %v6129
    %7474 = vmatprep.subr.bf16.mxu0 %v6134
    %7475 = vmatpush1.bf16.msra.mxu0 %v6133
    %7476 = vmatprep.subr.bf16.mxu0 %v6138
    %7477 = vmatpush1.bf16.msra.mxu0 %v6137
    %7478 = vmatprep.subr.bf16.mxu0 %v6142
    %7479 = vmatpush1.bf16.msra.mxu0 %v6141
    %7480 = vmatprep.subr.bf16.mxu0 %v6146
    %7481 = vmatpush1.bf16.msra.mxu0 %v6145
    %7482 = vmatprep.subr.bf16.mxu0 %v6150
    %7483 = vmatpush1.bf16.msra.mxu0 %v6149
    %7484 = vmatprep.subr.bf16.mxu0 %v6154
    %7485 = vmatpush1.bf16.msra.mxu0 %v6153
    %7486 = vmatprep.subr.bf16.mxu0 %v6158
    %7487 = vmatpush1.bf16.msra.mxu0 %v6157
    %7488 = vmatprep.subr.bf16.mxu0 %v6162
    %7489 = vmatpush1.bf16.msra.mxu0 %v6161
    %7490 = vmatprep.subr.bf16.mxu0 %v6166
    %7491 = vmatpush1.bf16.msra.mxu0 %v6165
    %7492 = vmatprep.subr.bf16.mxu0 %v6170
    %7493 = vmatpush1.bf16.msra.mxu0 %v6169
    %7494 = vmatprep.subr.bf16.mxu0 %v6174
    %7495 = vmatpush1.bf16.msra.mxu0 %v6173
    %7496 = vmatprep.subr.bf16.mxu0 %v6178
    %7497 = vmatpush1.bf16.msra.mxu0 %v6177
    %7498 = vmatprep.subr.bf16.mxu0 %v6182
    %7499 = vmatpush1.bf16.msra.mxu0 %v6181
    %7500 = vmatprep.subr.bf16.mxu0 %v6186
    %7501 = vmatpush1.bf16.msra.mxu0 %v6185
    %7502 = vmatprep.mubr.bf16.mxu0 %v3976
    %7503 = vmatmul.mubr.bf16.gmra.mrb[0].mxu0 %v3975
    %v7504 = vpop.f32.mrb[0].mxu0
    %v7505 = vadd.f32 %v7462, %v7504
    %v7506 = vpop.f32.mrb[0].mxu0
    %v7507 = vadd.f32 %v7464, %v7506
    %v7508 = vpop.f32.mrb[0].mxu0
    %v7509 = vadd.f32 %v7466, %v7508
    %v7510 = vpop.f32.mrb[0].mxu0
    %v7511 = vadd.f32 %v7468, %v7510
    %7512 = vdwg.mxu0
    %7513 = vmatprep.subr.bf16.mxu0 %v6190
    %7514 = vmatpush1.bf16.msra.mxu0 %v6189
    %7515 = vmatprep.subr.bf16.mxu0 %v6194
    %7516 = vmatpush1.bf16.msra.mxu0 %v6193
    %7517 = vmatprep.subr.bf16.mxu0 %v6198
    %7518 = vmatpush1.bf16.msra.mxu0 %v6197
    %7519 = vmatprep.subr.bf16.mxu0 %v6202
    %7520 = vmatpush1.bf16.msra.mxu0 %v6201
    %7521 = vmatprep.subr.bf16.mxu0 %v6206
    %7522 = vmatpush1.bf16.msra.mxu0 %v6205
    %7523 = vmatprep.subr.bf16.mxu0 %v6210
    %7524 = vmatpush1.bf16.msra.mxu0 %v6209
    %7525 = vmatprep.subr.bf16.mxu0 %v6214
    %7526 = vmatpush1.bf16.msra.mxu0 %v6213
    %7527 = vmatprep.subr.bf16.mxu0 %v6218
    %7528 = vmatpush1.bf16.msra.mxu0 %v6217
    %7529 = vmatprep.subr.bf16.mxu0 %v6222
    %7530 = vmatpush1.bf16.msra.mxu0 %v6221
    %7531 = vmatprep.subr.bf16.mxu0 %v6226
    %7532 = vmatpush1.bf16.msra.mxu0 %v6225
    %7533 = vmatprep.subr.bf16.mxu0 %v6230
    %7534 = vmatpush1.bf16.msra.mxu0 %v6229
    %7535 = vmatprep.subr.bf16.mxu0 %v6234
    %7536 = vmatpush1.bf16.msra.mxu0 %v6233
    %7537 = vmatprep.subr.bf16.mxu0 %v6238
    %7538 = vmatpush1.bf16.msra.mxu0 %v6237
    %7539 = vmatprep.subr.bf16.mxu0 %v6242
    %7540 = vmatpush1.bf16.msra.mxu0 %v6241
    %7541 = vmatprep.subr.bf16.mxu0 %v6246
    %7542 = vmatpush1.bf16.msra.mxu0 %v6245
    %7543 = vmatprep.subr.bf16.mxu0 %v6250
    %7544 = vmatpush1.bf16.msra.mxu0 %v6249
    %7545 = vmatprep.mubr.bf16.mxu0 %v3978
    %7546 = vmatmul.mubr.bf16.gmra.mrb[0].mxu0 %v3977
    %v7547 = vpop.f32.mrb[0].mxu0
    %v7548 = vadd.f32 %v7505, %v7547
    %v7549 = vpop.f32.mrb[0].mxu0
    %v7550 = vadd.f32 %v7507, %v7549
    %v7551 = vpop.f32.mrb[0].mxu0
    %v7552 = vadd.f32 %v7509, %v7551
    %v7553 = vpop.f32.mrb[0].mxu0
    %v7554 = vadd.f32 %v7511, %v7553
    %7555 = vdwg.mxu0
    %7556 = vmatprep.subr.bf16.mxu0 %v6254
    %7557 = vmatpush1.bf16.msra.mxu0 %v6253
    %7558 = vmatprep.subr.bf16.mxu0 %v6258
    %7559 = vmatpush1.bf16.msra.mxu0 %v6257
    %7560 = vmatprep.subr.bf16.mxu0 %v6262
    %7561 = vmatpush1.bf16.msra.mxu0 %v6261
    %7562 = vmatprep.subr.bf16.mxu0 %v6266
    %7563 = vmatpush1.bf16.msra.mxu0 %v6265
    %7564 = vmatprep.subr.bf16.mxu0 %v6270
    %7565 = vmatpush1.bf16.msra.mxu0 %v6269
    %7566 = vmatprep.subr.bf16.mxu0 %v6274
    %7567 = vmatpush1.bf16.msra.mxu0 %v6273
    %7568 = vmatprep.subr.bf16.mxu0 %v6278
    %7569 = vmatpush1.bf16.msra.mxu0 %v6277
    %7570 = vmatprep.subr.bf16.mxu0 %v6282
    %7571 = vmatpush1.bf16.msra.mxu0 %v6281
    %7572 = vmatprep.subr.bf16.mxu0 %v6286
    %7573 = vmatpush1.bf16.msra.mxu0 %v6285
    %7574 = vmatprep.subr.bf16.mxu0 %v6290
    %7575 = vmatpush1.bf16.msra.mxu0 %v6289
    %7576 = vmatprep.subr.bf16.mxu0 %v6294
    %7577 = vmatpush1.bf16.msra.mxu0 %v6293
    %7578 = vmatprep.subr.bf16.mxu0 %v6298
    %7579 = vmatpush1.bf16.msra.mxu0 %v6297
    %7580 = vmatprep.subr.bf16.mxu0 %v6302
    %7581 = vmatpush1.bf16.msra.mxu0 %v6301
    %7582 = vmatprep.subr.bf16.mxu0 %v6306
    %7583 = vmatpush1.bf16.msra.mxu0 %v6305
    %7584 = vmatprep.subr.bf16.mxu0 %v6310
    %7585 = vmatpush1.bf16.msra.mxu0 %v6309
    %7586 = vmatprep.subr.bf16.mxu0 %v6314
    %7587 = vmatpush1.bf16.msra.mxu0 %v6313
    %7588 = vmatprep.mubr.bf16.mxu0 %v3980
    %7589 = vmatmul.mubr.bf16.gmra.mrb[0].mxu0 %v3979
    %v7590 = vpop.f32.mrb[0].mxu0
    %v7591 = vadd.f32 %v7548, %v7590
    %v7592 = vpop.f32.mrb[0].mxu0
    %v7593 = vadd.f32 %v7550, %v7592
    %v7594 = vpop.f32.mrb[0].mxu0
    %v7595 = vadd.f32 %v7552, %v7594
    %v7596 = vpop.f32.mrb[0].mxu0
    %v7597 = vadd.f32 %v7554, %v7596
    %7598 = vdwg.mxu0
    %7599 = vmatprep.subr.bf16.mxu0 %v6318
    %7600 = vmatpush1.bf16.msra.mxu0 %v6317
    %7601 = vmatprep.subr.bf16.mxu0 %v6322
    %7602 = vmatpush1.bf16.msra.mxu0 %v6321
    %7603 = vmatprep.subr.bf16.mxu0 %v6326
    %7604 = vmatpush1.bf16.msra.mxu0 %v6325
    %7605 = vmatprep.subr.bf16.mxu0 %v6330
    %7606 = vmatpush1.bf16.msra.mxu0 %v6329
    %7607 = vmatprep.subr.bf16.mxu0 %v6334
    %7608 = vmatpush1.bf16.msra.mxu0 %v6333
    %7609 = vmatprep.subr.bf16.mxu0 %v6338
    %7610 = vmatpush1.bf16.msra.mxu0 %v6337
    %7611 = vmatprep.subr.bf16.mxu0 %v6342
    %7612 = vmatpush1.bf16.msra.mxu0 %v6341
    %7613 = vmatprep.subr.bf16.mxu0 %v6346
    %7614 = vmatpush1.bf16.msra.mxu0 %v6345
    %7615 = vmatprep.subr.bf16.mxu0 %v6350
    %7616 = vmatpush1.bf16.msra.mxu0 %v6349
    %7617 = vmatprep.subr.bf16.mxu0 %v6354
    %7618 = vmatpush1.bf16.msra.mxu0 %v6353
    %7619 = vmatprep.subr.bf16.mxu0 %v6358
    %7620 = vmatpush1.bf16.msra.mxu0 %v6357
    %7621 = vmatprep.subr.bf16.mxu0 %v6362
    %7622 = vmatpush1.bf16.msra.mxu0 %v6361
    %7623 = vmatprep.subr.bf16.mxu0 %v6366
    %7624 = vmatpush1.bf16.msra.mxu0 %v6365
    %7625 = vmatprep.subr.bf16.mxu0 %v6370
    %7626 = vmatpush1.bf16.msra.mxu0 %v6369
    %7627 = vmatprep.subr.bf16.mxu0 %v6374
    %7628 = vmatpush1.bf16.msra.mxu0 %v6373
    %7629 = vmatprep.subr.bf16.mxu0 %v6378
    %7630 = vmatpush1.bf16.msra.mxu0 %v6377
    %7631 = vmatprep.mubr.bf16.mxu0 %v3982
    %7632 = vmatmul.mubr.bf16.gmra.mrb[0].mxu0 %v3981
    %v7633 = vpop.f32.mrb[0].mxu0
    %v7634 = vadd.f32 %v7591, %v7633
    %v7635 = vpop.f32.mrb[0].mxu0
    %v7636 = vadd.f32 %v7593, %v7635
    %v7637 = vpop.f32.mrb[0].mxu0
    %v7638 = vadd.f32 %v7595, %v7637
    %v7639 = vpop.f32.mrb[0].mxu0
    %v7640 = vadd.f32 %v7597, %v7639
    %7641 = vdwg.mxu0
    %7642 = vmatprep.subr.bf16.mxu0 %v6382
    %7643 = vmatpush1.bf16.msra.mxu0 %v6381
    %7644 = vmatprep.subr.bf16.mxu0 %v6386
    %7645 = vmatpush1.bf16.msra.mxu0 %v6385
    %7646 = vmatprep.subr.bf16.mxu0 %v6390
    %7647 = vmatpush1.bf16.msra.mxu0 %v6389
    %7648 = vmatprep.subr.bf16.mxu0 %v6394
    %7649 = vmatpush1.bf16.msra.mxu0 %v6393
    %7650 = vmatprep.subr.bf16.mxu0 %v6398
    %7651 = vmatpush1.bf16.msra.mxu0 %v6397
    %7652 = vmatprep.subr.bf16.mxu0 %v6402
    %7653 = vmatpush1.bf16.msra.mxu0 %v6401
    %7654 = vmatprep.subr.bf16.mxu0 %v6406
    %7655 = vmatpush1.bf16.msra.mxu0 %v6405
    %7656 = vmatprep.subr.bf16.mxu0 %v6410
    %7657 = vmatpush1.bf16.msra.mxu0 %v6409
    %7658 = vmatprep.subr.bf16.mxu0 %v6414
    %7659 = vmatpush1.bf16.msra.mxu0 %v6413
    %7660 = vmatprep.subr.bf16.mxu0 %v6418
    %7661 = vmatpush1.bf16.msra.mxu0 %v6417
    %7662 = vmatprep.subr.bf16.mxu0 %v6422
    %7663 = vmatpush1.bf16.msra.mxu0 %v6421
    %7664 = vmatprep.subr.bf16.mxu0 %v6426
    %7665 = vmatpush1.bf16.msra.mxu0 %v6425
    %7666 = vmatprep.subr.bf16.mxu0 %v6430
    %7667 = vmatpush1.bf16.msra.mxu0 %v6429
    %7668 = vmatprep.subr.bf16.mxu0 %v6434
    %7669 = vmatpush1.bf16.msra.mxu0 %v6433
    %7670 = vmatprep.subr.bf16.mxu0 %v6438
    %7671 = vmatpush1.bf16.msra.mxu0 %v6437
    %7672 = vmatprep.subr.bf16.mxu0 %v6442
    %7673 = vmatpush1.bf16.msra.mxu0 %v6441
    %7674 = vmatprep.mubr.bf16.mxu0 %v3984
    %7675 = vmatmul.mubr.bf16.gmra.mrb[0].mxu0 %v3983
    %v7676 = vpop.f32.mrb[0].mxu0
    %v7677 = vadd.f32 %v7634, %v7676
    %v7678 = vpop.f32.mrb[0].mxu0
    %v7679 = vadd.f32 %v7636, %v7678
    %v7680 = vpop.f32.mrb[0].mxu0
    %v7681 = vadd.f32 %v7638, %v7680
    %v7682 = vpop.f32.mrb[0].mxu0
    %v7683 = vadd.f32 %v7640, %v7682
    %7684 = vdwg.mxu0
    %7685 = vmatprep.subr.bf16.mxu0 %v6446
    %7686 = vmatpush1.bf16.msra.mxu0 %v6445
    %7687 = vmatprep.subr.bf16.mxu0 %v6450
    %7688 = vmatpush1.bf16.msra.mxu0 %v6449
    %7689 = vmatprep.subr.bf16.mxu0 %v6454
    %7690 = vmatpush1.bf16.msra.mxu0 %v6453
    %7691 = vmatprep.subr.bf16.mxu0 %v6458
    %7692 = vmatpush1.bf16.msra.mxu0 %v6457
    %7693 = vmatprep.subr.bf16.mxu0 %v6462
    %7694 = vmatpush1.bf16.msra.mxu0 %v6461
    %7695 = vmatprep.subr.bf16.mxu0 %v6466
    %7696 = vmatpush1.bf16.msra.mxu0 %v6465
    %7697 = vmatprep.subr.bf16.mxu0 %v6470
    %7698 = vmatpush1.bf16.msra.mxu0 %v6469
    %7699 = vmatprep.subr.bf16.mxu0 %v6474
    %7700 = vmatpush1.bf16.msra.mxu0 %v6473
    %7701 = vmatprep.subr.bf16.mxu0 %v6478
    %7702 = vmatpush1.bf16.msra.mxu0 %v6477
    %7703 = vmatprep.subr.bf16.mxu0 %v6482
    %7704 = vmatpush1.bf16.msra.mxu0 %v6481
    %7705 = vmatprep.subr.bf16.mxu0 %v6486
    %7706 = vmatpush1.bf16.msra.mxu0 %v6485
    %7707 = vmatprep.subr.bf16.mxu0 %v6490
    %7708 = vmatpush1.bf16.msra.mxu0 %v6489
    %7709 = vmatprep.subr.bf16.mxu0 %v6494
    %7710 = vmatpush1.bf16.msra.mxu0 %v6493
    %7711 = vmatprep.subr.bf16.mxu0 %v6498
    %7712 = vmatpush1.bf16.msra.mxu0 %v6497
    %7713 = vmatprep.subr.bf16.mxu0 %v6502
    %7714 = vmatpush1.bf16.msra.mxu0 %v6501
    %7715 = vmatprep.subr.bf16.mxu0 %v6506
    %7716 = vmatpush1.bf16.msra.mxu0 %v6505
    %7717 = vmatprep.mubr.bf16.mxu0 %v3986
    %7718 = vmatmul.mubr.bf16.gmra.mrb[0].mxu0 %v3985
    %v7719 = vpop.f32.mrb[0].mxu0
    %v7720 = vadd.f32 %v7677, %v7719
    %v7721 = vpop.f32.mrb[0].mxu0
    %v7722 = vadd.f32 %v7679, %v7721
    %v7723 = vpop.f32.mrb[0].mxu0
    %v7724 = vadd.f32 %v7681, %v7723
    %v7725 = vpop.f32.mrb[0].mxu0
    %v7726 = vadd.f32 %v7683, %v7725
    %7727 = vdwg.mxu0
    %7728 = vmatprep.subr.bf16.mxu0 %v6510
    %7729 = vmatpush1.bf16.msra.mxu0 %v6509
    %7730 = vmatprep.subr.bf16.mxu0 %v6514
    %7731 = vmatpush1.bf16.msra.mxu0 %v6513
    %7732 = vmatprep.subr.bf16.mxu0 %v6518
    %7733 = vmatpush1.bf16.msra.mxu0 %v6517
    %7734 = vmatprep.subr.bf16.mxu0 %v6522
    %7735 = vmatpush1.bf16.msra.mxu0 %v6521
    %7736 = vmatprep.subr.bf16.mxu0 %v6526
    %7737 = vmatpush1.bf16.msra.mxu0 %v6525
    %7738 = vmatprep.subr.bf16.mxu0 %v6530
    %7739 = vmatpush1.bf16.msra.mxu0 %v6529
    %7740 = vmatprep.subr.bf16.mxu0 %v6534
    %7741 = vmatpush1.bf16.msra.mxu0 %v6533
    %7742 = vmatprep.subr.bf16.mxu0 %v6538
    %7743 = vmatpush1.bf16.msra.mxu0 %v6537
    %7744 = vmatprep.subr.bf16.mxu0 %v6542
    %7745 = vmatpush1.bf16.msra.mxu0 %v6541
    %7746 = vmatprep.subr.bf16.mxu0 %v6546
    %7747 = vmatpush1.bf16.msra.mxu0 %v6545
    %7748 = vmatprep.subr.bf16.mxu0 %v6550
    %7749 = vmatpush1.bf16.msra.mxu0 %v6549
    %7750 = vmatprep.subr.bf16.mxu0 %v6554
    %7751 = vmatpush1.bf16.msra.mxu0 %v6553
    %7752 = vmatprep.subr.bf16.mxu0 %v6558
    %7753 = vmatpush1.bf16.msra.mxu0 %v6557
    %7754 = vmatprep.subr.bf16.mxu0 %v6562
    %7755 = vmatpush1.bf16.msra.mxu0 %v6561
    %7756 = vmatprep.subr.bf16.mxu0 %v6566
    %7757 = vmatpush1.bf16.msra.mxu0 %v6565
    %7758 = vmatprep.subr.bf16.mxu0 %v6570
    %7759 = vmatpush1.bf16.msra.mxu0 %v6569
    %7760 = vmatprep.mubr.bf16.mxu0 %v3988
    %7761 = vmatmul.mubr.bf16.gmra.mrb[0].mxu0 %v3987
    %v7762 = vpop.f32.mrb[0].mxu0
    %v7763 = vadd.f32 %v7720, %v7762
    %v7764 = vpop.f32.mrb[0].mxu0
    %v7765 = vadd.f32 %v7722, %v7764
    %v7766 = vpop.f32.mrb[0].mxu0
    %v7767 = vadd.f32 %v7724, %v7766
    %v7768 = vpop.f32.mrb[0].mxu0
    %v7769 = vadd.f32 %v7726, %v7768
    %7770 = vdwg.mxu0
    %7771 = vst [vmem:[#allocation11] sm:$0xff] %v7419
    %7772 = vst [vmem:[#allocation11 + $0x8] sm:$0xff] %v7421
    %7773 = vst [vmem:[#allocation11 + $0x10] sm:$0xff] %v7763
    %7774 = vst [vmem:[#allocation11 + $0x18] sm:$0xff] %v7765
    %7775 = vst [vmem:[#allocation11 + $0x20] sm:$0xff] %v7423
    %7776 = vst [vmem:[#allocation11 + $0x28] sm:$0xff] %v7425
    %7777 = vst [vmem:[#allocation11 + $0x30] sm:$0xff] %v7767
    %7778 = vst [vmem:[#allocation11 + $0x38] sm:$0xff] %v7769
    // Predicated region
    $region42: #{tpu_custom_call.1} parent=1 // pred_check
      _
    $region43: #{tpu_custom_call.1} parent=1 // pred_check_branch
      %7780 = sbr.rel (0) target = $region45
    $region44: #{tpu_custom_call.1} parent=1 // pred_region
      %s7782 = ssub.s32 1024, 1024
      %7783 = vsyncadd [#allocation4], %s7782
      %s7784 = sshll.u32 [#allocation11], 4
      %s7785 = int_to_ptr.vmem [resolvable:$true] %s7784
      %7790 = dma.vmem_to_hbm [thread:$0]  %s7785, 1024, %s5, [#allocation4], 512, 512, 32
    $region45: #{tpu_custom_call.1} parent=1 // pred_fallthru
      _
    // Predicated region
    $region46: #{tpu_custom_call.1} parent=1 // pred_check
      _
    $region47: #{tpu_custom_call.1} parent=1 // pred_check_branch
      %7792 = sbr.rel (0) target = $region49
    $region48: #{tpu_custom_call.1} parent=1 // pred_region
      %7793 = dma.done [#allocation4], 1024
    $region49: #{tpu_custom_call.1} parent=1 // pred_fallthru
      _
    %7794 = vsyncpa [#allocation3], 1
    %7795 = vsyncpa [#allocation6], 1
    %7796 = vsyncpa [#allocation9], 1
    %7797 = vsyncpa [#allocation4], 1

</llo_original>
